<compile_context>
chip_gen: v7x
topology: tpu7x:2x2x1
jax: 0.10.0
libtpu: 0.0.40
codegen_flags: <defaults>
</compile_context>

<pallas_src>
import jax
import jax.numpy as jnp
from jax.experimental import pallas as pl
from jax.experimental.pallas import tpu as pltpu

HIDDEN = 32
NUM_LAYERS = 4
EMBED_DIM = 5
VOCAB = 5


def cpg_lstm_kernel(x_ref, wih_ref, whh_ref, b_ref, wcls_ref, bcls_ref,
                    out_ref, seq_ref, last_ref):
    """x_ref: (T*B, H) padded time-major embeddings.

    seq_ref:  (T*B, H) scratch holding the current layer's output sequence.
    last_ref: (T, H)   scratch holding batch row B-1 of the final layer.
    """
    T = out_ref.shape[0]
    TB, H = x_ref.shape
    B = TB // T

    for layer in range(NUM_LAYERS):
        # Per-layer weight loads (static first-axis index of the refs) keep
        # only ~6 weight vregs live at a time.
        wih_l = wih_ref[layer]          # (H, 4H)   fused [i|f|g|o] lanes
        whh_l = whh_ref[layer]          # (H, 4H)
        b_l = b_ref[layer]              # (1, 4H)   b_ih + b_hh

        # Hoisted input projection: one (T*B, H) @ (H, 4H) matmul per layer.
        cur = x_ref[...] if layer == 0 else seq_ref[...]
        xproj = jnp.dot(cur, wih_l, preferred_element_type=jnp.float32) + b_l

        h = jnp.zeros((B, H), jnp.float32)
        c = jnp.zeros((B, H), jnp.float32)
        for t in range(T):              # fully unrolled: static slices only
            pre = xproj[t * B:(t + 1) * B, :] + jnp.dot(
                h, whh_l, preferred_element_type=jnp.float32)      # (B, 4H)
            sig = jax.nn.sigmoid(pre)   # one full-width EUP pass
            th = jnp.tanh(pre)          # one full-width EUP pass
            i_g = sig[:, 0 * H:1 * H]
            f_g = sig[:, 1 * H:2 * H]
            g_g = th[:, 2 * H:3 * H]
            o_g = sig[:, 3 * H:4 * H]
            c = f_g * c + i_g * g_g
            h = o_g * jnp.tanh(c)
            if layer < NUM_LAYERS - 1:
                # Feed forward to next layer (store is off the serial chain).
                seq_ref[t * B:(t + 1) * B, :] = h
            else:
                # PyTorch output[-1, :]: last batch element, all T steps.
                last_ref[t:t + 1, :] = h[B - 1:B, :]

    # Classifier: VPU multiply + lane reduction instead of an N=1 MXU matmul.
    logits = (jnp.sum(last_ref[...] * wcls_ref[...], axis=-1, keepdims=True)
              + bcls_ref[...])
    out_ref[...] = logits


@jax.jit
def cpg_predictor_forward(tokens, params):
    B, T = tokens.shape
    # Embedding gather stays in XLA (data-dependent gather, tiny table).
    emb = params["emb"][tokens]                                     # (B, T, 5)
    x = jnp.zeros((B, T, HIDDEN), jnp.float32).at[:, :, :EMBED_DIM].set(emb)
    x = jnp.transpose(x, (1, 0, 2)).reshape(T * B, HIDDEN)          # time-major
    return pl.pallas_call(
        cpg_lstm_kernel,
        out_shape=jax.ShapeDtypeStruct((T, 1), jnp.float32),
        in_specs=[pl.BlockSpec(memory_space=pltpu.MemorySpace.VMEM)] * 6,
        out_specs=pl.BlockSpec(memory_space=pltpu.MemorySpace.VMEM),
        scratch_shapes=[pltpu.VMEM((T * B, HIDDEN), jnp.float32),
                        pltpu.VMEM((T, HIDDEN), jnp.float32)],
    )(x, params["wih"], params["whh"], params["b"],
      params["wcls"], params["bcls"])


def init_params(key):
    """PyTorch-style init, repacked into fused lane-dense gate matrices."""
    keys = jax.random.split(key, 3 + NUM_LAYERS)
    k = 1.0 / (HIDDEN ** 0.5)
    emb = jax.random.normal(keys[0], (VOCAB, EMBED_DIM), jnp.float32)

    wihs, whhs, biases = [], [], []
    for l in range(NUM_LAYERS):
        in_dim = EMBED_DIM if l == 0 else HIDDEN
        kk = jax.random.split(keys[1 + l], 4)
        w_ih = jax.random.uniform(kk[0], (4 * HIDDEN, in_dim), jnp.float32, -k, k)
        w_hh = jax.random.uniform(kk[1], (4 * HIDDEN, HIDDEN), jnp.float32, -k, k)
        b_ih = jax.random.uniform(kk[2], (4 * HIDDEN,), jnp.float32, -k, k)
        b_hh = jax.random.uniform(kk[3], (4 * HIDDEN,), jnp.float32, -k, k)
        # Fuse gates lane-dense: (in_dim, 4H); lane block g*H:(g+1)*H is gate g
        # in PyTorch order (i, f, g, o).  Equivalent to x @ w_ih.T per gate.
        w_ih_f = jnp.transpose(w_ih.reshape(4, HIDDEN, in_dim), (2, 0, 1)
                               ).reshape(in_dim, 4 * HIDDEN)
        w_ih_f = jnp.zeros((HIDDEN, 4 * HIDDEN), jnp.float32
                           ).at[:in_dim, :].set(w_ih_f)     # pad in-dim with 0
        w_hh_f = jnp.transpose(w_hh.reshape(4, HIDDEN, HIDDEN), (2, 0, 1)
                               ).reshape(HIDDEN, 4 * HIDDEN)
        wihs.append(w_ih_f)
        whhs.append(w_hh_f)
        biases.append((b_ih + b_hh).reshape(1, 4 * HIDDEN))

    w_cls = jax.random.uniform(keys[1 + NUM_LAYERS], (1, HIDDEN), jnp.float32, -k, k)
    b_cls = jax.random.uniform(keys[2 + NUM_LAYERS], (1,), jnp.float32, -k, k)
    return dict(emb=emb,
                wih=jnp.stack(wihs),          # (L, H, 4H)
                whh=jnp.stack(whhs),          # (L, H, 4H)
                b=jnp.stack(biases),          # (L, 1, 4H)
                wcls=w_cls,                   # (1, H)  row vector
                bcls=b_cls.reshape(1, 1))


def cpg_reference(tokens, params):
    """Pure-JAX reference matching the PyTorch forward semantics."""
    B, T = tokens.shape
    H = HIDDEN
    emb = params["emb"][tokens]
    x = jnp.pad(emb, ((0, 0), (0, 0), (0, H - EMBED_DIM)))
    seq = jnp.transpose(x, (1, 0, 2))                               # (T, B, H)
    for l in range(NUM_LAYERS):
        h = jnp.zeros((B, H), jnp.float32)
        c = jnp.zeros((B, H), jnp.float32)
        outs = []
        for t in range(T):
            pre = seq[t] @ params["wih"][l] + h @ params["whh"][l] + params["b"][l]
            i = jax.nn.sigmoid(pre[:, 0 * H:1 * H])
            f = jax.nn.sigmoid(pre[:, 1 * H:2 * H])
            g = jnp.tanh(pre[:, 2 * H:3 * H])
            o = jax.nn.sigmoid(pre[:, 3 * H:4 * H])
            c = f * c + i * g
            h = o * jnp.tanh(c)
            outs.append(h)
        seq = jnp.stack(outs, axis=0)
    last = seq[:, B - 1, :]                                         # (T, H)
    return jnp.sum(last * params["wcls"], axis=-1, keepdims=True) + params["bcls"]


if __name__ == "__main__":
    key = jax.random.PRNGKey(0)
    pkey, dkey = jax.random.split(key)
    params = init_params(pkey)

    B, T = 2, 8
    tokens = jax.random.randint(dkey, (B, T), 0, VOCAB, dtype=jnp.int32)

    out = jax.block_until_ready(cpg_predictor_forward(tokens, params))
    ref = cpg_reference(tokens, params)

    assert out.shape == (T, 1), out.shape
    assert bool(jnp.all(jnp.isfinite(out)))
    assert bool(jnp.allclose(out, ref, atol=2e-3, rtol=2e-3)), (out, ref)
    print("KERNEL_OK")
</pallas_src>

<mosaic_0001>
module attributes {stable_mosaic.version = 11 : i64} {
  func.func @cpg_lstm_kernel(%arg0: memref<16x32xf32, #tpu.memory_space<vmem>>, %arg1: memref<4x32x128xf32, #tpu.memory_space<vmem>>, %arg2: memref<4x32x128xf32, #tpu.memory_space<vmem>>, %arg3: memref<4x1x128xf32, #tpu.memory_space<vmem>>, %arg4: memref<1x32xf32, #tpu.memory_space<vmem>>, %arg5: memref<1x1xf32, #tpu.memory_space<vmem>>, %arg6: memref<8x1xf32, #tpu.memory_space<vmem>>, %arg7: memref<16x32xf32, #tpu.memory_space<vmem>>, %arg8: memref<8x32xf32, #tpu.memory_space<vmem>>) attributes {dimension_semantics = [], scalar_prefetch = 0 : i64, scratch_operands = 2 : i64, tpu.core_type = #tpu.core_type<tc>} {
    %c0 = arith.constant 0 : index
    %c0_0 = arith.constant 0 : index
    %c0_1 = arith.constant 0 : index
    %0 = vector.load %arg1[%c0, %c0_0, %c0_1] : memref<4x32x128xf32, #tpu.memory_space<vmem>>, vector<1x32x128xf32>
    %1 = vector.shape_cast %0 : vector<1x32x128xf32> to vector<32x128xf32>
    %c0_2 = arith.constant 0 : index
    %c0_3 = arith.constant 0 : index
    %c0_4 = arith.constant 0 : index
    %2 = vector.load %arg2[%c0_2, %c0_3, %c0_4] : memref<4x32x128xf32, #tpu.memory_space<vmem>>, vector<1x32x128xf32>
    %3 = vector.shape_cast %2 : vector<1x32x128xf32> to vector<32x128xf32>
    %c0_5 = arith.constant 0 : index
    %c0_6 = arith.constant 0 : index
    %c0_7 = arith.constant 0 : index
    %4 = vector.load %arg3[%c0_5, %c0_6, %c0_7] : memref<4x1x128xf32, #tpu.memory_space<vmem>>, vector<1x1x128xf32>
    %5 = vector.shape_cast %4 : vector<1x1x128xf32> to vector<1x128xf32>
    %c0_8 = arith.constant 0 : index
    %c0_9 = arith.constant 0 : index
    %6 = vector.load %arg0[%c0_8, %c0_9] : memref<16x32xf32, #tpu.memory_space<vmem>>, vector<16x32xf32>
    %cst = arith.constant dense<0.000000e+00> : vector<16x128xf32>
    %7 = tpu.matmul %6, %1, %cst {dimension_numbers = #tpu.dot_dimension_numbers<[1], [0], [0], [1], [0, 0, 1, 1], [], []>} : vector<16x32xf32>, vector<32x128xf32>, vector<16x128xf32> -> vector<16x128xf32>
    %8 = vector.broadcast %5 : vector<1x128xf32> to vector<16x128xf32>
    %9 = arith.addf %7, %8 : vector<16x128xf32>
    %cst_10 = arith.constant 0.000000e+00 : f32
    %10 = vector.broadcast %cst_10 : f32 to vector<2x32xf32>
    %cst_11 = arith.constant 0.000000e+00 : f32
    %11 = vector.broadcast %cst_11 : f32 to vector<2x32xf32>
    %12 = vector.extract_strided_slice %9 {offsets = [0, 0], sizes = [2, 128], strides = [1, 1]} : vector<16x128xf32> to vector<2x128xf32>
    %cst_12 = arith.constant dense<0.000000e+00> : vector<2x128xf32>
    %13 = tpu.matmul %10, %3, %cst_12 {dimension_numbers = #tpu.dot_dimension_numbers<[1], [0], [0], [1], [0, 0, 1, 1], [], []>} : vector<2x32xf32>, vector<32x128xf32>, vector<2x128xf32> -> vector<2x128xf32>
    %14 = arith.addf %12, %13 : vector<2x128xf32>
    %15 = arith.negf %14 : vector<2x128xf32>
    %16 = math.exp %15 : vector<2x128xf32>
    %cst_13 = arith.constant 1.000000e+00 : f32
    %17 = vector.broadcast %cst_13 : f32 to vector<2x128xf32>
    %18 = arith.addf %17, %16 : vector<2x128xf32>
    %19 = arith.divf %17, %18 : vector<2x128xf32>
    %20 = math.tanh %14 : vector<2x128xf32>
    %21 = vector.extract_strided_slice %19 {offsets = [0, 0], sizes = [2, 32], strides = [1, 1]} : vector<2x128xf32> to vector<2x32xf32>
    %22 = vector.extract_strided_slice %19 {offsets = [0, 32], sizes = [2, 32], strides = [1, 1]} : vector<2x128xf32> to vector<2x32xf32>
    %23 = vector.extract_strided_slice %20 {offsets = [0, 64], sizes = [2, 32], strides = [1, 1]} : vector<2x128xf32> to vector<2x32xf32>
    %24 = vector.extract_strided_slice %19 {offsets = [0, 96], sizes = [2, 32], strides = [1, 1]} : vector<2x128xf32> to vector<2x32xf32>
    %25 = arith.mulf %22, %11 : vector<2x32xf32>
    %26 = arith.mulf %21, %23 : vector<2x32xf32>
    %27 = arith.addf %25, %26 : vector<2x32xf32>
    %28 = math.tanh %27 : vector<2x32xf32>
    %29 = arith.mulf %24, %28 : vector<2x32xf32>
    %c0_14 = arith.constant 0 : index
    %c0_15 = arith.constant 0 : index
    %30 = vector.load %arg7[%c0_14, %c0_15] : memref<16x32xf32, #tpu.memory_space<vmem>>, vector<2x32xf32>
    tpu.vector_store %arg7[%c0_14, %c0_15], %29 {strides = array<i32>} : memref<16x32xf32, #tpu.memory_space<vmem>>, vector<2x32xf32>,
    %31 = vector.extract_strided_slice %9 {offsets = [2, 0], sizes = [2, 128], strides = [1, 1]} : vector<16x128xf32> to vector<2x128xf32>
    %cst_16 = arith.constant dense<0.000000e+00> : vector<2x128xf32>
    %32 = tpu.matmul %29, %3, %cst_16 {dimension_numbers = #tpu.dot_dimension_numbers<[1], [0], [0], [1], [0, 0, 1, 1], [], []>} : vector<2x32xf32>, vector<32x128xf32>, vector<2x128xf32> -> vector<2x128xf32>
    %33 = arith.addf %31, %32 : vector<2x128xf32>
    %34 = arith.negf %33 : vector<2x128xf32>
    %35 = math.exp %34 : vector<2x128xf32>
    %cst_17 = arith.constant 1.000000e+00 : f32
    %36 = vector.broadcast %cst_17 : f32 to vector<2x128xf32>
    %37 = arith.addf %36, %35 : vector<2x128xf32>
    %38 = arith.divf %36, %37 : vector<2x128xf32>
    %39 = math.tanh %33 : vector<2x128xf32>
    %40 = vector.extract_strided_slice %38 {offsets = [0, 0], sizes = [2, 32], strides = [1, 1]} : vector<2x128xf32> to vector<2x32xf32>
    %41 = vector.extract_strided_slice %38 {offsets = [0, 32], sizes = [2, 32], strides = [1, 1]} : vector<2x128xf32> to vector<2x32xf32>
    %42 = vector.extract_strided_slice %39 {offsets = [0, 64], sizes = [2, 32], strides = [1, 1]} : vector<2x128xf32> to vector<2x32xf32>
    %43 = vector.extract_strided_slice %38 {offsets = [0, 96], sizes = [2, 32], strides = [1, 1]} : vector<2x128xf32> to vector<2x32xf32>
    %44 = arith.mulf %41, %27 : vector<2x32xf32>
    %45 = arith.mulf %40, %42 : vector<2x32xf32>
    %46 = arith.addf %44, %45 : vector<2x32xf32>
    %47 = math.tanh %46 : vector<2x32xf32>
    %48 = arith.mulf %43, %47 : vector<2x32xf32>
    %c2 = arith.constant 2 : index
    %c0_18 = arith.constant 0 : index
    %49 = vector.load %arg7[%c2, %c0_18] : memref<16x32xf32, #tpu.memory_space<vmem>>, vector<2x32xf32>
    tpu.vector_store %arg7[%c2, %c0_18], %48 {strides = array<i32>} : memref<16x32xf32, #tpu.memory_space<vmem>>, vector<2x32xf32>,
    %50 = vector.extract_strided_slice %9 {offsets = [4, 0], sizes = [2, 128], strides = [1, 1]} : vector<16x128xf32> to vector<2x128xf32>
    %cst_19 = arith.constant dense<0.000000e+00> : vector<2x128xf32>
    %51 = tpu.matmul %48, %3, %cst_19 {dimension_numbers = #tpu.dot_dimension_numbers<[1], [0], [0], [1], [0, 0, 1, 1], [], []>} : vector<2x32xf32>, vector<32x128xf32>, vector<2x128xf32> -> vector<2x128xf32>
    %52 = arith.addf %50, %51 : vector<2x128xf32>
    %53 = arith.negf %52 : vector<2x128xf32>
    %54 = math.exp %53 : vector<2x128xf32>
    %cst_20 = arith.constant 1.000000e+00 : f32
    %55 = vector.broadcast %cst_20 : f32 to vector<2x128xf32>
    %56 = arith.addf %55, %54 : vector<2x128xf32>
    %57 = arith.divf %55, %56 : vector<2x128xf32>
    %58 = math.tanh %52 : vector<2x128xf32>
    %59 = vector.extract_strided_slice %57 {offsets = [0, 0], sizes = [2, 32], strides = [1, 1]} : vector<2x128xf32> to vector<2x32xf32>
    %60 = vector.extract_strided_slice %57 {offsets = [0, 32], sizes = [2, 32], strides = [1, 1]} : vector<2x128xf32> to vector<2x32xf32>
    %61 = vector.extract_strided_slice %58 {offsets = [0, 64], sizes = [2, 32], strides = [1, 1]} : vector<2x128xf32> to vector<2x32xf32>
    %62 = vector.extract_strided_slice %57 {offsets = [0, 96], sizes = [2, 32], strides = [1, 1]} : vector<2x128xf32> to vector<2x32xf32>
    %63 = arith.mulf %60, %46 : vector<2x32xf32>
    %64 = arith.mulf %59, %61 : vector<2x32xf32>
    %65 = arith.addf %63, %64 : vector<2x32xf32>
    %66 = math.tanh %65 : vector<2x32xf32>
    %67 = arith.mulf %62, %66 : vector<2x32xf32>
    %c4 = arith.constant 4 : index
    %c0_21 = arith.constant 0 : index
    %68 = vector.load %arg7[%c4, %c0_21] : memref<16x32xf32, #tpu.memory_space<vmem>>, vector<2x32xf32>
    tpu.vector_store %arg7[%c4, %c0_21], %67 {strides = array<i32>} : memref<16x32xf32, #tpu.memory_space<vmem>>, vector<2x32xf32>,
    %69 = vector.extract_strided_slice %9 {offsets = [6, 0], sizes = [2, 128], strides = [1, 1]} : vector<16x128xf32> to vector<2x128xf32>
    %cst_22 = arith.constant dense<0.000000e+00> : vector<2x128xf32>
    %70 = tpu.matmul %67, %3, %cst_22 {dimension_numbers = #tpu.dot_dimension_numbers<[1], [0], [0], [1], [0, 0, 1, 1], [], []>} : vector<2x32xf32>, vector<32x128xf32>, vector<2x128xf32> -> vector<2x128xf32>
    %71 = arith.addf %69, %70 : vector<2x128xf32>
    %72 = arith.negf %71 : vector<2x128xf32>
    %73 = math.exp %72 : vector<2x128xf32>
    %cst_23 = arith.constant 1.000000e+00 : f32
    %74 = vector.broadcast %cst_23 : f32 to vector<2x128xf32>
    %75 = arith.addf %74, %73 : vector<2x128xf32>
    %76 = arith.divf %74, %75 : vector<2x128xf32>
    %77 = math.tanh %71 : vector<2x128xf32>
    %78 = vector.extract_strided_slice %76 {offsets = [0, 0], sizes = [2, 32], strides = [1, 1]} : vector<2x128xf32> to vector<2x32xf32>
    %79 = vector.extract_strided_slice %76 {offsets = [0, 32], sizes = [2, 32], strides = [1, 1]} : vector<2x128xf32> to vector<2x32xf32>
    %80 = vector.extract_strided_slice %77 {offsets = [0, 64], sizes = [2, 32], strides = [1, 1]} : vector<2x128xf32> to vector<2x32xf32>
    %81 = vector.extract_strided_slice %76 {offsets = [0, 96], sizes = [2, 32], strides = [1, 1]} : vector<2x128xf32> to vector<2x32xf32>
    %82 = arith.mulf %79, %65 : vector<2x32xf32>
    %83 = arith.mulf %78, %80 : vector<2x32xf32>
    %84 = arith.addf %82, %83 : vector<2x32xf32>
    %85 = math.tanh %84 : vector<2x32xf32>
    %86 = arith.mulf %81, %85 : vector<2x32xf32>
    %c6 = arith.constant 6 : index
    %c0_24 = arith.constant 0 : index
    %87 = vector.load %arg7[%c6, %c0_24] : memref<16x32xf32, #tpu.memory_space<vmem>>, vector<2x32xf32>
    tpu.vector_store %arg7[%c6, %c0_24], %86 {strides = array<i32>} : memref<16x32xf32, #tpu.memory_space<vmem>>, vector<2x32xf32>,
    %88 = vector.extract_strided_slice %9 {offsets = [8, 0], sizes = [2, 128], strides = [1, 1]} : vector<16x128xf32> to vector<2x128xf32>
    %cst_25 = arith.constant dense<0.000000e+00> : vector<2x128xf32>
    %89 = tpu.matmul %86, %3, %cst_25 {dimension_numbers = #tpu.dot_dimension_numbers<[1], [0], [0], [1], [0, 0, 1, 1], [], []>} : vector<2x32xf32>, vector<32x128xf32>, vector<2x128xf32> -> vector<2x128xf32>
    %90 = arith.addf %88, %89 : vector<2x128xf32>
    %91 = arith.negf %90 : vector<2x128xf32>
    %92 = math.exp %91 : vector<2x128xf32>
    %cst_26 = arith.constant 1.000000e+00 : f32
    %93 = vector.broadcast %cst_26 : f32 to vector<2x128xf32>
    %94 = arith.addf %93, %92 : vector<2x128xf32>
    %95 = arith.divf %93, %94 : vector<2x128xf32>
    %96 = math.tanh %90 : vector<2x128xf32>
    %97 = vector.extract_strided_slice %95 {offsets = [0, 0], sizes = [2, 32], strides = [1, 1]} : vector<2x128xf32> to vector<2x32xf32>
    %98 = vector.extract_strided_slice %95 {offsets = [0, 32], sizes = [2, 32], strides = [1, 1]} : vector<2x128xf32> to vector<2x32xf32>
    %99 = vector.extract_strided_slice %96 {offsets = [0, 64], sizes = [2, 32], strides = [1, 1]} : vector<2x128xf32> to vector<2x32xf32>
    %100 = vector.extract_strided_slice %95 {offsets = [0, 96], sizes = [2, 32], strides = [1, 1]} : vector<2x128xf32> to vector<2x32xf32>
    %101 = arith.mulf %98, %84 : vector<2x32xf32>
    %102 = arith.mulf %97, %99 : vector<2x32xf32>
    %103 = arith.addf %101, %102 : vector<2x32xf32>
    %104 = math.tanh %103 : vector<2x32xf32>
    %105 = arith.mulf %100, %104 : vector<2x32xf32>
    %c8 = arith.constant 8 : index
    %c0_27 = arith.constant 0 : index
    %106 = vector.load %arg7[%c8, %c0_27] : memref<16x32xf32, #tpu.memory_space<vmem>>, vector<2x32xf32>
    tpu.vector_store %arg7[%c8, %c0_27], %105 {strides = array<i32>} : memref<16x32xf32, #tpu.memory_space<vmem>>, vector<2x32xf32>,
    %107 = vector.extract_strided_slice %9 {offsets = [10, 0], sizes = [2, 128], strides = [1, 1]} : vector<16x128xf32> to vector<2x128xf32>
    %cst_28 = arith.constant dense<0.000000e+00> : vector<2x128xf32>
    %108 = tpu.matmul %105, %3, %cst_28 {dimension_numbers = #tpu.dot_dimension_numbers<[1], [0], [0], [1], [0, 0, 1, 1], [], []>} : vector<2x32xf32>, vector<32x128xf32>, vector<2x128xf32> -> vector<2x128xf32>
    %109 = arith.addf %107, %108 : vector<2x128xf32>
    %110 = arith.negf %109 : vector<2x128xf32>
    %111 = math.exp %110 : vector<2x128xf32>
    %cst_29 = arith.constant 1.000000e+00 : f32
    %112 = vector.broadcast %cst_29 : f32 to vector<2x128xf32>
    %113 = arith.addf %112, %111 : vector<2x128xf32>
    %114 = arith.divf %112, %113 : vector<2x128xf32>
    %115 = math.tanh %109 : vector<2x128xf32>
    %116 = vector.extract_strided_slice %114 {offsets = [0, 0], sizes = [2, 32], strides = [1, 1]} : vector<2x128xf32> to vector<2x32xf32>
    %117 = vector.extract_strided_slice %114 {offsets = [0, 32], sizes = [2, 32], strides = [1, 1]} : vector<2x128xf32> to vector<2x32xf32>
    %118 = vector.extract_strided_slice %115 {offsets = [0, 64], sizes = [2, 32], strides = [1, 1]} : vector<2x128xf32> to vector<2x32xf32>
    %119 = vector.extract_strided_slice %114 {offsets = [0, 96], sizes = [2, 32], strides = [1, 1]} : vector<2x128xf32> to vector<2x32xf32>
    %120 = arith.mulf %117, %103 : vector<2x32xf32>
    %121 = arith.mulf %116, %118 : vector<2x32xf32>
    %122 = arith.addf %120, %121 : vector<2x32xf32>
    %123 = math.tanh %122 : vector<2x32xf32>
    %124 = arith.mulf %119, %123 : vector<2x32xf32>
    %c10 = arith.constant 10 : index
    %c0_30 = arith.constant 0 : index
    %125 = vector.load %arg7[%c10, %c0_30] : memref<16x32xf32, #tpu.memory_space<vmem>>, vector<2x32xf32>
    tpu.vector_store %arg7[%c10, %c0_30], %124 {strides = array<i32>} : memref<16x32xf32, #tpu.memory_space<vmem>>, vector<2x32xf32>,
    %126 = vector.extract_strided_slice %9 {offsets = [12, 0], sizes = [2, 128], strides = [1, 1]} : vector<16x128xf32> to vector<2x128xf32>
    %cst_31 = arith.constant dense<0.000000e+00> : vector<2x128xf32>
    %127 = tpu.matmul %124, %3, %cst_31 {dimension_numbers = #tpu.dot_dimension_numbers<[1], [0], [0], [1], [0, 0, 1, 1], [], []>} : vector<2x32xf32>, vector<32x128xf32>, vector<2x128xf32> -> vector<2x128xf32>
    %128 = arith.addf %126, %127 : vector<2x128xf32>
    %129 = arith.negf %128 : vector<2x128xf32>
    %130 = math.exp %129 : vector<2x128xf32>
    %cst_32 = arith.constant 1.000000e+00 : f32
    %131 = vector.broadcast %cst_32 : f32 to vector<2x128xf32>
    %132 = arith.addf %131, %130 : vector<2x128xf32>
    %133 = arith.divf %131, %132 : vector<2x128xf32>
    %134 = math.tanh %128 : vector<2x128xf32>
    %135 = vector.extract_strided_slice %133 {offsets = [0, 0], sizes = [2, 32], strides = [1, 1]} : vector<2x128xf32> to vector<2x32xf32>
    %136 = vector.extract_strided_slice %133 {offsets = [0, 32], sizes = [2, 32], strides = [1, 1]} : vector<2x128xf32> to vector<2x32xf32>
    %137 = vector.extract_strided_slice %134 {offsets = [0, 64], sizes = [2, 32], strides = [1, 1]} : vector<2x128xf32> to vector<2x32xf32>
    %138 = vector.extract_strided_slice %133 {offsets = [0, 96], sizes = [2, 32], strides = [1, 1]} : vector<2x128xf32> to vector<2x32xf32>
    %139 = arith.mulf %136, %122 : vector<2x32xf32>
    %140 = arith.mulf %135, %137 : vector<2x32xf32>
    %141 = arith.addf %139, %140 : vector<2x32xf32>
    %142 = math.tanh %141 : vector<2x32xf32>
    %143 = arith.mulf %138, %142 : vector<2x32xf32>
    %c12 = arith.constant 12 : index
    %c0_33 = arith.constant 0 : index
    %144 = vector.load %arg7[%c12, %c0_33] : memref<16x32xf32, #tpu.memory_space<vmem>>, vector<2x32xf32>
    tpu.vector_store %arg7[%c12, %c0_33], %143 {strides = array<i32>} : memref<16x32xf32, #tpu.memory_space<vmem>>, vector<2x32xf32>,
    %145 = vector.extract_strided_slice %9 {offsets = [14, 0], sizes = [2, 128], strides = [1, 1]} : vector<16x128xf32> to vector<2x128xf32>
    %cst_34 = arith.constant dense<0.000000e+00> : vector<2x128xf32>
    %146 = tpu.matmul %143, %3, %cst_34 {dimension_numbers = #tpu.dot_dimension_numbers<[1], [0], [0], [1], [0, 0, 1, 1], [], []>} : vector<2x32xf32>, vector<32x128xf32>, vector<2x128xf32> -> vector<2x128xf32>
    %147 = arith.addf %145, %146 : vector<2x128xf32>
    %148 = arith.negf %147 : vector<2x128xf32>
    %149 = math.exp %148 : vector<2x128xf32>
    %cst_35 = arith.constant 1.000000e+00 : f32
    %150 = vector.broadcast %cst_35 : f32 to vector<2x128xf32>
    %151 = arith.addf %150, %149 : vector<2x128xf32>
    %152 = arith.divf %150, %151 : vector<2x128xf32>
    %153 = math.tanh %147 : vector<2x128xf32>
    %154 = vector.extract_strided_slice %152 {offsets = [0, 0], sizes = [2, 32], strides = [1, 1]} : vector<2x128xf32> to vector<2x32xf32>
    %155 = vector.extract_strided_slice %152 {offsets = [0, 32], sizes = [2, 32], strides = [1, 1]} : vector<2x128xf32> to vector<2x32xf32>
    %156 = vector.extract_strided_slice %153 {offsets = [0, 64], sizes = [2, 32], strides = [1, 1]} : vector<2x128xf32> to vector<2x32xf32>
    %157 = vector.extract_strided_slice %152 {offsets = [0, 96], sizes = [2, 32], strides = [1, 1]} : vector<2x128xf32> to vector<2x32xf32>
    %158 = arith.mulf %155, %141 : vector<2x32xf32>
    %159 = arith.mulf %154, %156 : vector<2x32xf32>
    %160 = arith.addf %158, %159 : vector<2x32xf32>
    %161 = math.tanh %160 : vector<2x32xf32>
    %162 = arith.mulf %157, %161 : vector<2x32xf32>
    %c14 = arith.constant 14 : index
    %c0_36 = arith.constant 0 : index
    %163 = vector.load %arg7[%c14, %c0_36] : memref<16x32xf32, #tpu.memory_space<vmem>>, vector<2x32xf32>
    tpu.vector_store %arg7[%c14, %c0_36], %162 {strides = array<i32>} : memref<16x32xf32, #tpu.memory_space<vmem>>, vector<2x32xf32>,
    %c1 = arith.constant 1 : index
    %c0_37 = arith.constant 0 : index
    %c0_38 = arith.constant 0 : index
    %164 = vector.load %arg1[%c1, %c0_37, %c0_38] : memref<4x32x128xf32, #tpu.memory_space<vmem>>, vector<1x32x128xf32>
    %165 = vector.shape_cast %164 : vector<1x32x128xf32> to vector<32x128xf32>
    %c1_39 = arith.constant 1 : index
    %c0_40 = arith.constant 0 : index
    %c0_41 = arith.constant 0 : index
    %166 = vector.load %arg2[%c1_39, %c0_40, %c0_41] : memref<4x32x128xf32, #tpu.memory_space<vmem>>, vector<1x32x128xf32>
    %167 = vector.shape_cast %166 : vector<1x32x128xf32> to vector<32x128xf32>
    %c1_42 = arith.constant 1 : index
    %c0_43 = arith.constant 0 : index
    %c0_44 = arith.constant 0 : index
    %168 = vector.load %arg3[%c1_42, %c0_43, %c0_44] : memref<4x1x128xf32, #tpu.memory_space<vmem>>, vector<1x1x128xf32>
    %169 = vector.shape_cast %168 : vector<1x1x128xf32> to vector<1x128xf32>
    %c0_45 = arith.constant 0 : index
    %c0_46 = arith.constant 0 : index
    %170 = vector.load %arg7[%c0_45, %c0_46] : memref<16x32xf32, #tpu.memory_space<vmem>>, vector<16x32xf32>
    %cst_47 = arith.constant dense<0.000000e+00> : vector<16x128xf32>
    %171 = tpu.matmul %170, %165, %cst_47 {dimension_numbers = #tpu.dot_dimension_numbers<[1], [0], [0], [1], [0, 0, 1, 1], [], []>} : vector<16x32xf32>, vector<32x128xf32>, vector<16x128xf32> -> vector<16x128xf32>
    %172 = vector.broadcast %169 : vector<1x128xf32> to vector<16x128xf32>
    %173 = arith.addf %171, %172 : vector<16x128xf32>
    %cst_48 = arith.constant 0.000000e+00 : f32
    %174 = vector.broadcast %cst_48 : f32 to vector<2x32xf32>
    %cst_49 = arith.constant 0.000000e+00 : f32
    %175 = vector.broadcast %cst_49 : f32 to vector<2x32xf32>
    %176 = vector.extract_strided_slice %173 {offsets = [0, 0], sizes = [2, 128], strides = [1, 1]} : vector<16x128xf32> to vector<2x128xf32>
    %cst_50 = arith.constant dense<0.000000e+00> : vector<2x128xf32>
    %177 = tpu.matmul %174, %167, %cst_50 {dimension_numbers = #tpu.dot_dimension_numbers<[1], [0], [0], [1], [0, 0, 1, 1], [], []>} : vector<2x32xf32>, vector<32x128xf32>, vector<2x128xf32> -> vector<2x128xf32>
    %178 = arith.addf %176, %177 : vector<2x128xf32>
    %179 = arith.negf %178 : vector<2x128xf32>
    %180 = math.exp %179 : vector<2x128xf32>
    %cst_51 = arith.constant 1.000000e+00 : f32
    %181 = vector.broadcast %cst_51 : f32 to vector<2x128xf32>
    %182 = arith.addf %181, %180 : vector<2x128xf32>
    %183 = arith.divf %181, %182 : vector<2x128xf32>
    %184 = math.tanh %178 : vector<2x128xf32>
    %185 = vector.extract_strided_slice %183 {offsets = [0, 0], sizes = [2, 32], strides = [1, 1]} : vector<2x128xf32> to vector<2x32xf32>
    %186 = vector.extract_strided_slice %183 {offsets = [0, 32], sizes = [2, 32], strides = [1, 1]} : vector<2x128xf32> to vector<2x32xf32>
    %187 = vector.extract_strided_slice %184 {offsets = [0, 64], sizes = [2, 32], strides = [1, 1]} : vector<2x128xf32> to vector<2x32xf32>
    %188 = vector.extract_strided_slice %183 {offsets = [0, 96], sizes = [2, 32], strides = [1, 1]} : vector<2x128xf32> to vector<2x32xf32>
    %189 = arith.mulf %186, %175 : vector<2x32xf32>
    %190 = arith.mulf %185, %187 : vector<2x32xf32>
    %191 = arith.addf %189, %190 : vector<2x32xf32>
    %192 = math.tanh %191 : vector<2x32xf32>
    %193 = arith.mulf %188, %192 : vector<2x32xf32>
    %c0_52 = arith.constant 0 : index
    %c0_53 = arith.constant 0 : index
    %194 = vector.load %arg7[%c0_52, %c0_53] : memref<16x32xf32, #tpu.memory_space<vmem>>, vector<2x32xf32>
    tpu.vector_store %arg7[%c0_52, %c0_53], %193 {strides = array<i32>} : memref<16x32xf32, #tpu.memory_space<vmem>>, vector<2x32xf32>,
    %195 = vector.extract_strided_slice %173 {offsets = [2, 0], sizes = [2, 128], strides = [1, 1]} : vector<16x128xf32> to vector<2x128xf32>
    %cst_54 = arith.constant dense<0.000000e+00> : vector<2x128xf32>
    %196 = tpu.matmul %193, %167, %cst_54 {dimension_numbers = #tpu.dot_dimension_numbers<[1], [0], [0], [1], [0, 0, 1, 1], [], []>} : vector<2x32xf32>, vector<32x128xf32>, vector<2x128xf32> -> vector<2x128xf32>
    %197 = arith.addf %195, %196 : vector<2x128xf32>
    %198 = arith.negf %197 : vector<2x128xf32>
    %199 = math.exp %198 : vector<2x128xf32>
    %cst_55 = arith.constant 1.000000e+00 : f32
    %200 = vector.broadcast %cst_55 : f32 to vector<2x128xf32>
    %201 = arith.addf %200, %199 : vector<2x128xf32>
    %202 = arith.divf %200, %201 : vector<2x128xf32>
    %203 = math.tanh %197 : vector<2x128xf32>
    %204 = vector.extract_strided_slice %202 {offsets = [0, 0], sizes = [2, 32], strides = [1, 1]} : vector<2x128xf32> to vector<2x32xf32>
    %205 = vector.extract_strided_slice %202 {offsets = [0, 32], sizes = [2, 32], strides = [1, 1]} : vector<2x128xf32> to vector<2x32xf32>
    %206 = vector.extract_strided_slice %203 {offsets = [0, 64], sizes = [2, 32], strides = [1, 1]} : vector<2x128xf32> to vector<2x32xf32>
    %207 = vector.extract_strided_slice %202 {offsets = [0, 96], sizes = [2, 32], strides = [1, 1]} : vector<2x128xf32> to vector<2x32xf32>
    %208 = arith.mulf %205, %191 : vector<2x32xf32>
    %209 = arith.mulf %204, %206 : vector<2x32xf32>
    %210 = arith.addf %208, %209 : vector<2x32xf32>
    %211 = math.tanh %210 : vector<2x32xf32>
    %212 = arith.mulf %207, %211 : vector<2x32xf32>
    %c2_56 = arith.constant 2 : index
    %c0_57 = arith.constant 0 : index
    %213 = vector.load %arg7[%c2_56, %c0_57] : memref<16x32xf32, #tpu.memory_space<vmem>>, vector<2x32xf32>
    tpu.vector_store %arg7[%c2_56, %c0_57], %212 {strides = array<i32>} : memref<16x32xf32, #tpu.memory_space<vmem>>, vector<2x32xf32>,
    %214 = vector.extract_strided_slice %173 {offsets = [4, 0], sizes = [2, 128], strides = [1, 1]} : vector<16x128xf32> to vector<2x128xf32>
    %cst_58 = arith.constant dense<0.000000e+00> : vector<2x128xf32>
    %215 = tpu.matmul %212, %167, %cst_58 {dimension_numbers = #tpu.dot_dimension_numbers<[1], [0], [0], [1], [0, 0, 1, 1], [], []>} : vector<2x32xf32>, vector<32x128xf32>, vector<2x128xf32> -> vector<2x128xf32>
    %216 = arith.addf %214, %215 : vector<2x128xf32>
    %217 = arith.negf %216 : vector<2x128xf32>
    %218 = math.exp %217 : vector<2x128xf32>
    %cst_59 = arith.constant 1.000000e+00 : f32
    %219 = vector.broadcast %cst_59 : f32 to vector<2x128xf32>
    %220 = arith.addf %219, %218 : vector<2x128xf32>
    %221 = arith.divf %219, %220 : vector<2x128xf32>
    %222 = math.tanh %216 : vector<2x128xf32>
    %223 = vector.extract_strided_slice %221 {offsets = [0, 0], sizes = [2, 32], strides = [1, 1]} : vector<2x128xf32> to vector<2x32xf32>
    %224 = vector.extract_strided_slice %221 {offsets = [0, 32], sizes = [2, 32], strides = [1, 1]} : vector<2x128xf32> to vector<2x32xf32>
    %225 = vector.extract_strided_slice %222 {offsets = [0, 64], sizes = [2, 32], strides = [1, 1]} : vector<2x128xf32> to vector<2x32xf32>
    %226 = vector.extract_strided_slice %221 {offsets = [0, 96], sizes = [2, 32], strides = [1, 1]} : vector<2x128xf32> to vector<2x32xf32>
    %227 = arith.mulf %224, %210 : vector<2x32xf32>
    %228 = arith.mulf %223, %225 : vector<2x32xf32>
    %229 = arith.addf %227, %228 : vector<2x32xf32>
    %230 = math.tanh %229 : vector<2x32xf32>
    %231 = arith.mulf %226, %230 : vector<2x32xf32>
    %c4_60 = arith.constant 4 : index
    %c0_61 = arith.constant 0 : index
    %232 = vector.load %arg7[%c4_60, %c0_61] : memref<16x32xf32, #tpu.memory_space<vmem>>, vector<2x32xf32>
    tpu.vector_store %arg7[%c4_60, %c0_61], %231 {strides = array<i32>} : memref<16x32xf32, #tpu.memory_space<vmem>>, vector<2x32xf32>,
    %233 = vector.extract_strided_slice %173 {offsets = [6, 0], sizes = [2, 128], strides = [1, 1]} : vector<16x128xf32> to vector<2x128xf32>
    %cst_62 = arith.constant dense<0.000000e+00> : vector<2x128xf32>
    %234 = tpu.matmul %231, %167, %cst_62 {dimension_numbers = #tpu.dot_dimension_numbers<[1], [0], [0], [1], [0, 0, 1, 1], [], []>} : vector<2x32xf32>, vector<32x128xf32>, vector<2x128xf32> -> vector<2x128xf32>
    %235 = arith.addf %233, %234 : vector<2x128xf32>
    %236 = arith.negf %235 : vector<2x128xf32>
    %237 = math.exp %236 : vector<2x128xf32>
    %cst_63 = arith.constant 1.000000e+00 : f32
    %238 = vector.broadcast %cst_63 : f32 to vector<2x128xf32>
    %239 = arith.addf %238, %237 : vector<2x128xf32>
    %240 = arith.divf %238, %239 : vector<2x128xf32>
    %241 = math.tanh %235 : vector<2x128xf32>
    %242 = vector.extract_strided_slice %240 {offsets = [0, 0], sizes = [2, 32], strides = [1, 1]} : vector<2x128xf32> to vector<2x32xf32>
    %243 = vector.extract_strided_slice %240 {offsets = [0, 32], sizes = [2, 32], strides = [1, 1]} : vector<2x128xf32> to vector<2x32xf32>
    %244 = vector.extract_strided_slice %241 {offsets = [0, 64], sizes = [2, 32], strides = [1, 1]} : vector<2x128xf32> to vector<2x32xf32>
    %245 = vector.extract_strided_slice %240 {offsets = [0, 96], sizes = [2, 32], strides = [1, 1]} : vector<2x128xf32> to vector<2x32xf32>
    %246 = arith.mulf %243, %229 : vector<2x32xf32>
    %247 = arith.mulf %242, %244 : vector<2x32xf32>
    %248 = arith.addf %246, %247 : vector<2x32xf32>
    %249 = math.tanh %248 : vector<2x32xf32>
    %250 = arith.mulf %245, %249 : vector<2x32xf32>
    %c6_64 = arith.constant 6 : index
    %c0_65 = arith.constant 0 : index
    %251 = vector.load %arg7[%c6_64, %c0_65] : memref<16x32xf32, #tpu.memory_space<vmem>>, vector<2x32xf32>
    tpu.vector_store %arg7[%c6_64, %c0_65], %250 {strides = array<i32>} : memref<16x32xf32, #tpu.memory_space<vmem>>, vector<2x32xf32>,
    %252 = vector.extract_strided_slice %173 {offsets = [8, 0], sizes = [2, 128], strides = [1, 1]} : vector<16x128xf32> to vector<2x128xf32>
    %cst_66 = arith.constant dense<0.000000e+00> : vector<2x128xf32>
    %253 = tpu.matmul %250, %167, %cst_66 {dimension_numbers = #tpu.dot_dimension_numbers<[1], [0], [0], [1], [0, 0, 1, 1], [], []>} : vector<2x32xf32>, vector<32x128xf32>, vector<2x128xf32> -> vector<2x128xf32>
    %254 = arith.addf %252, %253 : vector<2x128xf32>
    %255 = arith.negf %254 : vector<2x128xf32>
    %256 = math.exp %255 : vector<2x128xf32>
    %cst_67 = arith.constant 1.000000e+00 : f32
    %257 = vector.broadcast %cst_67 : f32 to vector<2x128xf32>
    %258 = arith.addf %257, %256 : vector<2x128xf32>
    %259 = arith.divf %257, %258 : vector<2x128xf32>
    %260 = math.tanh %254 : vector<2x128xf32>
    %261 = vector.extract_strided_slice %259 {offsets = [0, 0], sizes = [2, 32], strides = [1, 1]} : vector<2x128xf32> to vector<2x32xf32>
    %262 = vector.extract_strided_slice %259 {offsets = [0, 32], sizes = [2, 32], strides = [1, 1]} : vector<2x128xf32> to vector<2x32xf32>
    %263 = vector.extract_strided_slice %260 {offsets = [0, 64], sizes = [2, 32], strides = [1, 1]} : vector<2x128xf32> to vector<2x32xf32>
    %264 = vector.extract_strided_slice %259 {offsets = [0, 96], sizes = [2, 32], strides = [1, 1]} : vector<2x128xf32> to vector<2x32xf32>
    %265 = arith.mulf %262, %248 : vector<2x32xf32>
    %266 = arith.mulf %261, %263 : vector<2x32xf32>
    %267 = arith.addf %265, %266 : vector<2x32xf32>
    %268 = math.tanh %267 : vector<2x32xf32>
    %269 = arith.mulf %264, %268 : vector<2x32xf32>
    %c8_68 = arith.constant 8 : index
    %c0_69 = arith.constant 0 : index
    %270 = vector.load %arg7[%c8_68, %c0_69] : memref<16x32xf32, #tpu.memory_space<vmem>>, vector<2x32xf32>
    tpu.vector_store %arg7[%c8_68, %c0_69], %269 {strides = array<i32>} : memref<16x32xf32, #tpu.memory_space<vmem>>, vector<2x32xf32>,
    %271 = vector.extract_strided_slice %173 {offsets = [10, 0], sizes = [2, 128], strides = [1, 1]} : vector<16x128xf32> to vector<2x128xf32>
    %cst_70 = arith.constant dense<0.000000e+00> : vector<2x128xf32>
    %272 = tpu.matmul %269, %167, %cst_70 {dimension_numbers = #tpu.dot_dimension_numbers<[1], [0], [0], [1], [0, 0, 1, 1], [], []>} : vector<2x32xf32>, vector<32x128xf32>, vector<2x128xf32> -> vector<2x128xf32>
    %273 = arith.addf %271, %272 : vector<2x128xf32>
    %274 = arith.negf %273 : vector<2x128xf32>
    %275 = math.exp %274 : vector<2x128xf32>
    %cst_71 = arith.constant 1.000000e+00 : f32
    %276 = vector.broadcast %cst_71 : f32 to vector<2x128xf32>
    %277 = arith.addf %276, %275 : vector<2x128xf32>
    %278 = arith.divf %276, %277 : vector<2x128xf32>
    %279 = math.tanh %273 : vector<2x128xf32>
    %280 = vector.extract_strided_slice %278 {offsets = [0, 0], sizes = [2, 32], strides = [1, 1]} : vector<2x128xf32> to vector<2x32xf32>
    %281 = vector.extract_strided_slice %278 {offsets = [0, 32], sizes = [2, 32], strides = [1, 1]} : vector<2x128xf32> to vector<2x32xf32>
    %282 = vector.extract_strided_slice %279 {offsets = [0, 64], sizes = [2, 32], strides = [1, 1]} : vector<2x128xf32> to vector<2x32xf32>
    %283 = vector.extract_strided_slice %278 {offsets = [0, 96], sizes = [2, 32], strides = [1, 1]} : vector<2x128xf32> to vector<2x32xf32>
    %284 = arith.mulf %281, %267 : vector<2x32xf32>
    %285 = arith.mulf %280, %282 : vector<2x32xf32>
    %286 = arith.addf %284, %285 : vector<2x32xf32>
    %287 = math.tanh %286 : vector<2x32xf32>
    %288 = arith.mulf %283, %287 : vector<2x32xf32>
    %c10_72 = arith.constant 10 : index
    %c0_73 = arith.constant 0 : index
    %289 = vector.load %arg7[%c10_72, %c0_73] : memref<16x32xf32, #tpu.memory_space<vmem>>, vector<2x32xf32>
    tpu.vector_store %arg7[%c10_72, %c0_73], %288 {strides = array<i32>} : memref<16x32xf32, #tpu.memory_space<vmem>>, vector<2x32xf32>,
    %290 = vector.extract_strided_slice %173 {offsets = [12, 0], sizes = [2, 128], strides = [1, 1]} : vector<16x128xf32> to vector<2x128xf32>
    %cst_74 = arith.constant dense<0.000000e+00> : vector<2x128xf32>
    %291 = tpu.matmul %288, %167, %cst_74 {dimension_numbers = #tpu.dot_dimension_numbers<[1], [0], [0], [1], [0, 0, 1, 1], [], []>} : vector<2x32xf32>, vector<32x128xf32>, vector<2x128xf32> -> vector<2x128xf32>
    %292 = arith.addf %290, %291 : vector<2x128xf32>
    %293 = arith.negf %292 : vector<2x128xf32>
    %294 = math.exp %293 : vector<2x128xf32>
    %cst_75 = arith.constant 1.000000e+00 : f32
    %295 = vector.broadcast %cst_75 : f32 to vector<2x128xf32>
    %296 = arith.addf %295, %294 : vector<2x128xf32>
    %297 = arith.divf %295, %296 : vector<2x128xf32>
    %298 = math.tanh %292 : vector<2x128xf32>
    %299 = vector.extract_strided_slice %297 {offsets = [0, 0], sizes = [2, 32], strides = [1, 1]} : vector<2x128xf32> to vector<2x32xf32>
    %300 = vector.extract_strided_slice %297 {offsets = [0, 32], sizes = [2, 32], strides = [1, 1]} : vector<2x128xf32> to vector<2x32xf32>
    %301 = vector.extract_strided_slice %298 {offsets = [0, 64], sizes = [2, 32], strides = [1, 1]} : vector<2x128xf32> to vector<2x32xf32>
    %302 = vector.extract_strided_slice %297 {offsets = [0, 96], sizes = [2, 32], strides = [1, 1]} : vector<2x128xf32> to vector<2x32xf32>
    %303 = arith.mulf %300, %286 : vector<2x32xf32>
    %304 = arith.mulf %299, %301 : vector<2x32xf32>
    %305 = arith.addf %303, %304 : vector<2x32xf32>
    %306 = math.tanh %305 : vector<2x32xf32>
    %307 = arith.mulf %302, %306 : vector<2x32xf32>
    %c12_76 = arith.constant 12 : index
    %c0_77 = arith.constant 0 : index
    %308 = vector.load %arg7[%c12_76, %c0_77] : memref<16x32xf32, #tpu.memory_space<vmem>>, vector<2x32xf32>
    tpu.vector_store %arg7[%c12_76, %c0_77], %307 {strides = array<i32>} : memref<16x32xf32, #tpu.memory_space<vmem>>, vector<2x32xf32>,
    %309 = vector.extract_strided_slice %173 {offsets = [14, 0], sizes = [2, 128], strides = [1, 1]} : vector<16x128xf32> to vector<2x128xf32>
    %cst_78 = arith.constant dense<0.000000e+00> : vector<2x128xf32>
    %310 = tpu.matmul %307, %167, %cst_78 {dimension_numbers = #tpu.dot_dimension_numbers<[1], [0], [0], [1], [0, 0, 1, 1], [], []>} : vector<2x32xf32>, vector<32x128xf32>, vector<2x128xf32> -> vector<2x128xf32>
    %311 = arith.addf %309, %310 : vector<2x128xf32>
    %312 = arith.negf %311 : vector<2x128xf32>
    %313 = math.exp %312 : vector<2x128xf32>
    %cst_79 = arith.constant 1.000000e+00 : f32
    %314 = vector.broadcast %cst_79 : f32 to vector<2x128xf32>
    %315 = arith.addf %314, %313 : vector<2x128xf32>
    %316 = arith.divf %314, %315 : vector<2x128xf32>
    %317 = math.tanh %311 : vector<2x128xf32>
    %318 = vector.extract_strided_slice %316 {offsets = [0, 0], sizes = [2, 32], strides = [1, 1]} : vector<2x128xf32> to vector<2x32xf32>
    %319 = vector.extract_strided_slice %316 {offsets = [0, 32], sizes = [2, 32], strides = [1, 1]} : vector<2x128xf32> to vector<2x32xf32>
    %320 = vector.extract_strided_slice %317 {offsets = [0, 64], sizes = [2, 32], strides = [1, 1]} : vector<2x128xf32> to vector<2x32xf32>
    %321 = vector.extract_strided_slice %316 {offsets = [0, 96], sizes = [2, 32], strides = [1, 1]} : vector<2x128xf32> to vector<2x32xf32>
    %322 = arith.mulf %319, %305 : vector<2x32xf32>
    %323 = arith.mulf %318, %320 : vector<2x32xf32>
    %324 = arith.addf %322, %323 : vector<2x32xf32>
    %325 = math.tanh %324 : vector<2x32xf32>
    %326 = arith.mulf %321, %325 : vector<2x32xf32>
    %c14_80 = arith.constant 14 : index
    %c0_81 = arith.constant 0 : index
    %327 = vector.load %arg7[%c14_80, %c0_81] : memref<16x32xf32, #tpu.memory_space<vmem>>, vector<2x32xf32>
    tpu.vector_store %arg7[%c14_80, %c0_81], %326 {strides = array<i32>} : memref<16x32xf32, #tpu.memory_space<vmem>>, vector<2x32xf32>,
    %c2_82 = arith.constant 2 : index
    %c0_83 = arith.constant 0 : index
    %c0_84 = arith.constant 0 : index
    %328 = vector.load %arg1[%c2_82, %c0_83, %c0_84] : memref<4x32x128xf32, #tpu.memory_space<vmem>>, vector<1x32x128xf32>
    %329 = vector.shape_cast %328 : vector<1x32x128xf32> to vector<32x128xf32>
    %c2_85 = arith.constant 2 : index
    %c0_86 = arith.constant 0 : index
    %c0_87 = arith.constant 0 : index
    %330 = vector.load %arg2[%c2_85, %c0_86, %c0_87] : memref<4x32x128xf32, #tpu.memory_space<vmem>>, vector<1x32x128xf32>
    %331 = vector.shape_cast %330 : vector<1x32x128xf32> to vector<32x128xf32>
    %c2_88 = arith.constant 2 : index
    %c0_89 = arith.constant 0 : index
    %c0_90 = arith.constant 0 : index
    %332 = vector.load %arg3[%c2_88, %c0_89, %c0_90] : memref<4x1x128xf32, #tpu.memory_space<vmem>>, vector<1x1x128xf32>
    %333 = vector.shape_cast %332 : vector<1x1x128xf32> to vector<1x128xf32>
    %c0_91 = arith.constant 0 : index
    %c0_92 = arith.constant 0 : index
    %334 = vector.load %arg7[%c0_91, %c0_92] : memref<16x32xf32, #tpu.memory_space<vmem>>, vector<16x32xf32>
    %cst_93 = arith.constant dense<0.000000e+00> : vector<16x128xf32>
    %335 = tpu.matmul %334, %329, %cst_93 {dimension_numbers = #tpu.dot_dimension_numbers<[1], [0], [0], [1], [0, 0, 1, 1], [], []>} : vector<16x32xf32>, vector<32x128xf32>, vector<16x128xf32> -> vector<16x128xf32>
    %336 = vector.broadcast %333 : vector<1x128xf32> to vector<16x128xf32>
    %337 = arith.addf %335, %336 : vector<16x128xf32>
    %cst_94 = arith.constant 0.000000e+00 : f32
    %338 = vector.broadcast %cst_94 : f32 to vector<2x32xf32>
    %cst_95 = arith.constant 0.000000e+00 : f32
    %339 = vector.broadcast %cst_95 : f32 to vector<2x32xf32>
    %340 = vector.extract_strided_slice %337 {offsets = [0, 0], sizes = [2, 128], strides = [1, 1]} : vector<16x128xf32> to vector<2x128xf32>
    %cst_96 = arith.constant dense<0.000000e+00> : vector<2x128xf32>
    %341 = tpu.matmul %338, %331, %cst_96 {dimension_numbers = #tpu.dot_dimension_numbers<[1], [0], [0], [1], [0, 0, 1, 1], [], []>} : vector<2x32xf32>, vector<32x128xf32>, vector<2x128xf32> -> vector<2x128xf32>
    %342 = arith.addf %340, %341 : vector<2x128xf32>
    %343 = arith.negf %342 : vector<2x128xf32>
    %344 = math.exp %343 : vector<2x128xf32>
    %cst_97 = arith.constant 1.000000e+00 : f32
    %345 = vector.broadcast %cst_97 : f32 to vector<2x128xf32>
    %346 = arith.addf %345, %344 : vector<2x128xf32>
    %347 = arith.divf %345, %346 : vector<2x128xf32>
    %348 = math.tanh %342 : vector<2x128xf32>
    %349 = vector.extract_strided_slice %347 {offsets = [0, 0], sizes = [2, 32], strides = [1, 1]} : vector<2x128xf32> to vector<2x32xf32>
    %350 = vector.extract_strided_slice %347 {offsets = [0, 32], sizes = [2, 32], strides = [1, 1]} : vector<2x128xf32> to vector<2x32xf32>
    %351 = vector.extract_strided_slice %348 {offsets = [0, 64], sizes = [2, 32], strides = [1, 1]} : vector<2x128xf32> to vector<2x32xf32>
    %352 = vector.extract_strided_slice %347 {offsets = [0, 96], sizes = [2, 32], strides = [1, 1]} : vector<2x128xf32> to vector<2x32xf32>
    %353 = arith.mulf %350, %339 : vector<2x32xf32>
    %354 = arith.mulf %349, %351 : vector<2x32xf32>
    %355 = arith.addf %353, %354 : vector<2x32xf32>
    %356 = math.tanh %355 : vector<2x32xf32>
    %357 = arith.mulf %352, %356 : vector<2x32xf32>
    %c0_98 = arith.constant 0 : index
    %c0_99 = arith.constant 0 : index
    %358 = vector.load %arg7[%c0_98, %c0_99] : memref<16x32xf32, #tpu.memory_space<vmem>>, vector<2x32xf32>
    tpu.vector_store %arg7[%c0_98, %c0_99], %357 {strides = array<i32>} : memref<16x32xf32, #tpu.memory_space<vmem>>, vector<2x32xf32>,
    %359 = vector.extract_strided_slice %337 {offsets = [2, 0], sizes = [2, 128], strides = [1, 1]} : vector<16x128xf32> to vector<2x128xf32>
    %cst_100 = arith.constant dense<0.000000e+00> : vector<2x128xf32>
    %360 = tpu.matmul %357, %331, %cst_100 {dimension_numbers = #tpu.dot_dimension_numbers<[1], [0], [0], [1], [0, 0, 1, 1], [], []>} : vector<2x32xf32>, vector<32x128xf32>, vector<2x128xf32> -> vector<2x128xf32>
    %361 = arith.addf %359, %360 : vector<2x128xf32>
    %362 = arith.negf %361 : vector<2x128xf32>
    %363 = math.exp %362 : vector<2x128xf32>
    %cst_101 = arith.constant 1.000000e+00 : f32
    %364 = vector.broadcast %cst_101 : f32 to vector<2x128xf32>
    %365 = arith.addf %364, %363 : vector<2x128xf32>
    %366 = arith.divf %364, %365 : vector<2x128xf32>
    %367 = math.tanh %361 : vector<2x128xf32>
    %368 = vector.extract_strided_slice %366 {offsets = [0, 0], sizes = [2, 32], strides = [1, 1]} : vector<2x128xf32> to vector<2x32xf32>
    %369 = vector.extract_strided_slice %366 {offsets = [0, 32], sizes = [2, 32], strides = [1, 1]} : vector<2x128xf32> to vector<2x32xf32>
    %370 = vector.extract_strided_slice %367 {offsets = [0, 64], sizes = [2, 32], strides = [1, 1]} : vector<2x128xf32> to vector<2x32xf32>
    %371 = vector.extract_strided_slice %366 {offsets = [0, 96], sizes = [2, 32], strides = [1, 1]} : vector<2x128xf32> to vector<2x32xf32>
    %372 = arith.mulf %369, %355 : vector<2x32xf32>
    %373 = arith.mulf %368, %370 : vector<2x32xf32>
    %374 = arith.addf %372, %373 : vector<2x32xf32>
    %375 = math.tanh %374 : vector<2x32xf32>
    %376 = arith.mulf %371, %375 : vector<2x32xf32>
    %c2_102 = arith.constant 2 : index
    %c0_103 = arith.constant 0 : index
    %377 = vector.load %arg7[%c2_102, %c0_103] : memref<16x32xf32, #tpu.memory_space<vmem>>, vector<2x32xf32>
    tpu.vector_store %arg7[%c2_102, %c0_103], %376 {strides = array<i32>} : memref<16x32xf32, #tpu.memory_space<vmem>>, vector<2x32xf32>,
    %378 = vector.extract_strided_slice %337 {offsets = [4, 0], sizes = [2, 128], strides = [1, 1]} : vector<16x128xf32> to vector<2x128xf32>
    %cst_104 = arith.constant dense<0.000000e+00> : vector<2x128xf32>
    %379 = tpu.matmul %376, %331, %cst_104 {dimension_numbers = #tpu.dot_dimension_numbers<[1], [0], [0], [1], [0, 0, 1, 1], [], []>} : vector<2x32xf32>, vector<32x128xf32>, vector<2x128xf32> -> vector<2x128xf32>
    %380 = arith.addf %378, %379 : vector<2x128xf32>
    %381 = arith.negf %380 : vector<2x128xf32>
    %382 = math.exp %381 : vector<2x128xf32>
    %cst_105 = arith.constant 1.000000e+00 : f32
    %383 = vector.broadcast %cst_105 : f32 to vector<2x128xf32>
    %384 = arith.addf %383, %382 : vector<2x128xf32>
    %385 = arith.divf %383, %384 : vector<2x128xf32>
    %386 = math.tanh %380 : vector<2x128xf32>
    %387 = vector.extract_strided_slice %385 {offsets = [0, 0], sizes = [2, 32], strides = [1, 1]} : vector<2x128xf32> to vector<2x32xf32>
    %388 = vector.extract_strided_slice %385 {offsets = [0, 32], sizes = [2, 32], strides = [1, 1]} : vector<2x128xf32> to vector<2x32xf32>
    %389 = vector.extract_strided_slice %386 {offsets = [0, 64], sizes = [2, 32], strides = [1, 1]} : vector<2x128xf32> to vector<2x32xf32>
    %390 = vector.extract_strided_slice %385 {offsets = [0, 96], sizes = [2, 32], strides = [1, 1]} : vector<2x128xf32> to vector<2x32xf32>
    %391 = arith.mulf %388, %374 : vector<2x32xf32>
    %392 = arith.mulf %387, %389 : vector<2x32xf32>
    %393 = arith.addf %391, %392 : vector<2x32xf32>
    %394 = math.tanh %393 : vector<2x32xf32>
    %395 = arith.mulf %390, %394 : vector<2x32xf32>
    %c4_106 = arith.constant 4 : index
    %c0_107 = arith.constant 0 : index
    %396 = vector.load %arg7[%c4_106, %c0_107] : memref<16x32xf32, #tpu.memory_space<vmem>>, vector<2x32xf32>
    tpu.vector_store %arg7[%c4_106, %c0_107], %395 {strides = array<i32>} : memref<16x32xf32, #tpu.memory_space<vmem>>, vector<2x32xf32>,
    %397 = vector.extract_strided_slice %337 {offsets = [6, 0], sizes = [2, 128], strides = [1, 1]} : vector<16x128xf32> to vector<2x128xf32>
    %cst_108 = arith.constant dense<0.000000e+00> : vector<2x128xf32>
    %398 = tpu.matmul %395, %331, %cst_108 {dimension_numbers = #tpu.dot_dimension_numbers<[1], [0], [0], [1], [0, 0, 1, 1], [], []>} : vector<2x32xf32>, vector<32x128xf32>, vector<2x128xf32> -> vector<2x128xf32>
    %399 = arith.addf %397, %398 : vector<2x128xf32>
    %400 = arith.negf %399 : vector<2x128xf32>
    %401 = math.exp %400 : vector<2x128xf32>
    %cst_109 = arith.constant 1.000000e+00 : f32
    %402 = vector.broadcast %cst_109 : f32 to vector<2x128xf32>
    %403 = arith.addf %402, %401 : vector<2x128xf32>
    %404 = arith.divf %402, %403 : vector<2x128xf32>
    %405 = math.tanh %399 : vector<2x128xf32>
    %406 = vector.extract_strided_slice %404 {offsets = [0, 0], sizes = [2, 32], strides = [1, 1]} : vector<2x128xf32> to vector<2x32xf32>
    %407 = vector.extract_strided_slice %404 {offsets = [0, 32], sizes = [2, 32], strides = [1, 1]} : vector<2x128xf32> to vector<2x32xf32>
    %408 = vector.extract_strided_slice %405 {offsets = [0, 64], sizes = [2, 32], strides = [1, 1]} : vector<2x128xf32> to vector<2x32xf32>
    %409 = vector.extract_strided_slice %404 {offsets = [0, 96], sizes = [2, 32], strides = [1, 1]} : vector<2x128xf32> to vector<2x32xf32>
    %410 = arith.mulf %407, %393 : vector<2x32xf32>
    %411 = arith.mulf %406, %408 : vector<2x32xf32>
    %412 = arith.addf %410, %411 : vector<2x32xf32>
    %413 = math.tanh %412 : vector<2x32xf32>
    %414 = arith.mulf %409, %413 : vector<2x32xf32>
    %c6_110 = arith.constant 6 : index
    %c0_111 = arith.constant 0 : index
    %415 = vector.load %arg7[%c6_110, %c0_111] : memref<16x32xf32, #tpu.memory_space<vmem>>, vector<2x32xf32>
    tpu.vector_store %arg7[%c6_110, %c0_111], %414 {strides = array<i32>} : memref<16x32xf32, #tpu.memory_space<vmem>>, vector<2x32xf32>,
    %416 = vector.extract_strided_slice %337 {offsets = [8, 0], sizes = [2, 128], strides = [1, 1]} : vector<16x128xf32> to vector<2x128xf32>
    %cst_112 = arith.constant dense<0.000000e+00> : vector<2x128xf32>
    %417 = tpu.matmul %414, %331, %cst_112 {dimension_numbers = #tpu.dot_dimension_numbers<[1], [0], [0], [1], [0, 0, 1, 1], [], []>} : vector<2x32xf32>, vector<32x128xf32>, vector<2x128xf32> -> vector<2x128xf32>
    %418 = arith.addf %416, %417 : vector<2x128xf32>
    %419 = arith.negf %418 : vector<2x128xf32>
    %420 = math.exp %419 : vector<2x128xf32>
    %cst_113 = arith.constant 1.000000e+00 : f32
    %421 = vector.broadcast %cst_113 : f32 to vector<2x128xf32>
    %422 = arith.addf %421, %420 : vector<2x128xf32>
    %423 = arith.divf %421, %422 : vector<2x128xf32>
    %424 = math.tanh %418 : vector<2x128xf32>
    %425 = vector.extract_strided_slice %423 {offsets = [0, 0], sizes = [2, 32], strides = [1, 1]} : vector<2x128xf32> to vector<2x32xf32>
    %426 = vector.extract_strided_slice %423 {offsets = [0, 32], sizes = [2, 32], strides = [1, 1]} : vector<2x128xf32> to vector<2x32xf32>
    %427 = vector.extract_strided_slice %424 {offsets = [0, 64], sizes = [2, 32], strides = [1, 1]} : vector<2x128xf32> to vector<2x32xf32>
    %428 = vector.extract_strided_slice %423 {offsets = [0, 96], sizes = [2, 32], strides = [1, 1]} : vector<2x128xf32> to vector<2x32xf32>
    %429 = arith.mulf %426, %412 : vector<2x32xf32>
    %430 = arith.mulf %425, %427 : vector<2x32xf32>
    %431 = arith.addf %429, %430 : vector<2x32xf32>
    %432 = math.tanh %431 : vector<2x32xf32>
    %433 = arith.mulf %428, %432 : vector<2x32xf32>
    %c8_114 = arith.constant 8 : index
    %c0_115 = arith.constant 0 : index
    %434 = vector.load %arg7[%c8_114, %c0_115] : memref<16x32xf32, #tpu.memory_space<vmem>>, vector<2x32xf32>
    tpu.vector_store %arg7[%c8_114, %c0_115], %433 {strides = array<i32>} : memref<16x32xf32, #tpu.memory_space<vmem>>, vector<2x32xf32>,
    %435 = vector.extract_strided_slice %337 {offsets = [10, 0], sizes = [2, 128], strides = [1, 1]} : vector<16x128xf32> to vector<2x128xf32>
    %cst_116 = arith.constant dense<0.000000e+00> : vector<2x128xf32>
    %436 = tpu.matmul %433, %331, %cst_116 {dimension_numbers = #tpu.dot_dimension_numbers<[1], [0], [0], [1], [0, 0, 1, 1], [], []>} : vector<2x32xf32>, vector<32x128xf32>, vector<2x128xf32> -> vector<2x128xf32>
    %437 = arith.addf %435, %436 : vector<2x128xf32>
    %438 = arith.negf %437 : vector<2x128xf32>
    %439 = math.exp %438 : vector<2x128xf32>
    %cst_117 = arith.constant 1.000000e+00 : f32
    %440 = vector.broadcast %cst_117 : f32 to vector<2x128xf32>
    %441 = arith.addf %440, %439 : vector<2x128xf32>
    %442 = arith.divf %440, %441 : vector<2x128xf32>
    %443 = math.tanh %437 : vector<2x128xf32>
    %444 = vector.extract_strided_slice %442 {offsets = [0, 0], sizes = [2, 32], strides = [1, 1]} : vector<2x128xf32> to vector<2x32xf32>
    %445 = vector.extract_strided_slice %442 {offsets = [0, 32], sizes = [2, 32], strides = [1, 1]} : vector<2x128xf32> to vector<2x32xf32>
    %446 = vector.extract_strided_slice %443 {offsets = [0, 64], sizes = [2, 32], strides = [1, 1]} : vector<2x128xf32> to vector<2x32xf32>
    %447 = vector.extract_strided_slice %442 {offsets = [0, 96], sizes = [2, 32], strides = [1, 1]} : vector<2x128xf32> to vector<2x32xf32>
    %448 = arith.mulf %445, %431 : vector<2x32xf32>
    %449 = arith.mulf %444, %446 : vector<2x32xf32>
    %450 = arith.addf %448, %449 : vector<2x32xf32>
    %451 = math.tanh %450 : vector<2x32xf32>
    %452 = arith.mulf %447, %451 : vector<2x32xf32>
    %c10_118 = arith.constant 10 : index
    %c0_119 = arith.constant 0 : index
    %453 = vector.load %arg7[%c10_118, %c0_119] : memref<16x32xf32, #tpu.memory_space<vmem>>, vector<2x32xf32>
    tpu.vector_store %arg7[%c10_118, %c0_119], %452 {strides = array<i32>} : memref<16x32xf32, #tpu.memory_space<vmem>>, vector<2x32xf32>,
    %454 = vector.extract_strided_slice %337 {offsets = [12, 0], sizes = [2, 128], strides = [1, 1]} : vector<16x128xf32> to vector<2x128xf32>
    %cst_120 = arith.constant dense<0.000000e+00> : vector<2x128xf32>
    %455 = tpu.matmul %452, %331, %cst_120 {dimension_numbers = #tpu.dot_dimension_numbers<[1], [0], [0], [1], [0, 0, 1, 1], [], []>} : vector<2x32xf32>, vector<32x128xf32>, vector<2x128xf32> -> vector<2x128xf32>
    %456 = arith.addf %454, %455 : vector<2x128xf32>
    %457 = arith.negf %456 : vector<2x128xf32>
    %458 = math.exp %457 : vector<2x128xf32>
    %cst_121 = arith.constant 1.000000e+00 : f32
    %459 = vector.broadcast %cst_121 : f32 to vector<2x128xf32>
    %460 = arith.addf %459, %458 : vector<2x128xf32>
    %461 = arith.divf %459, %460 : vector<2x128xf32>
    %462 = math.tanh %456 : vector<2x128xf32>
    %463 = vector.extract_strided_slice %461 {offsets = [0, 0], sizes = [2, 32], strides = [1, 1]} : vector<2x128xf32> to vector<2x32xf32>
    %464 = vector.extract_strided_slice %461 {offsets = [0, 32], sizes = [2, 32], strides = [1, 1]} : vector<2x128xf32> to vector<2x32xf32>
    %465 = vector.extract_strided_slice %462 {offsets = [0, 64], sizes = [2, 32], strides = [1, 1]} : vector<2x128xf32> to vector<2x32xf32>
    %466 = vector.extract_strided_slice %461 {offsets = [0, 96], sizes = [2, 32], strides = [1, 1]} : vector<2x128xf32> to vector<2x32xf32>
    %467 = arith.mulf %464, %450 : vector<2x32xf32>
    %468 = arith.mulf %463, %465 : vector<2x32xf32>
    %469 = arith.addf %467, %468 : vector<2x32xf32>
    %470 = math.tanh %469 : vector<2x32xf32>
    %471 = arith.mulf %466, %470 : vector<2x32xf32>
    %c12_122 = arith.constant 12 : index
    %c0_123 = arith.constant 0 : index
    %472 = vector.load %arg7[%c12_122, %c0_123] : memref<16x32xf32, #tpu.memory_space<vmem>>, vector<2x32xf32>
    tpu.vector_store %arg7[%c12_122, %c0_123], %471 {strides = array<i32>} : memref<16x32xf32, #tpu.memory_space<vmem>>, vector<2x32xf32>,
    %473 = vector.extract_strided_slice %337 {offsets = [14, 0], sizes = [2, 128], strides = [1, 1]} : vector<16x128xf32> to vector<2x128xf32>
    %cst_124 = arith.constant dense<0.000000e+00> : vector<2x128xf32>
    %474 = tpu.matmul %471, %331, %cst_124 {dimension_numbers = #tpu.dot_dimension_numbers<[1], [0], [0], [1], [0, 0, 1, 1], [], []>} : vector<2x32xf32>, vector<32x128xf32>, vector<2x128xf32> -> vector<2x128xf32>
    %475 = arith.addf %473, %474 : vector<2x128xf32>
    %476 = arith.negf %475 : vector<2x128xf32>
    %477 = math.exp %476 : vector<2x128xf32>
    %cst_125 = arith.constant 1.000000e+00 : f32
    %478 = vector.broadcast %cst_125 : f32 to vector<2x128xf32>
    %479 = arith.addf %478, %477 : vector<2x128xf32>
    %480 = arith.divf %478, %479 : vector<2x128xf32>
    %481 = math.tanh %475 : vector<2x128xf32>
    %482 = vector.extract_strided_slice %480 {offsets = [0, 0], sizes = [2, 32], strides = [1, 1]} : vector<2x128xf32> to vector<2x32xf32>
    %483 = vector.extract_strided_slice %480 {offsets = [0, 32], sizes = [2, 32], strides = [1, 1]} : vector<2x128xf32> to vector<2x32xf32>
    %484 = vector.extract_strided_slice %481 {offsets = [0, 64], sizes = [2, 32], strides = [1, 1]} : vector<2x128xf32> to vector<2x32xf32>
    %485 = vector.extract_strided_slice %480 {offsets = [0, 96], sizes = [2, 32], strides = [1, 1]} : vector<2x128xf32> to vector<2x32xf32>
    %486 = arith.mulf %483, %469 : vector<2x32xf32>
    %487 = arith.mulf %482, %484 : vector<2x32xf32>
    %488 = arith.addf %486, %487 : vector<2x32xf32>
    %489 = math.tanh %488 : vector<2x32xf32>
    %490 = arith.mulf %485, %489 : vector<2x32xf32>
    %c14_126 = arith.constant 14 : index
    %c0_127 = arith.constant 0 : index
    %491 = vector.load %arg7[%c14_126, %c0_127] : memref<16x32xf32, #tpu.memory_space<vmem>>, vector<2x32xf32>
    tpu.vector_store %arg7[%c14_126, %c0_127], %490 {strides = array<i32>} : memref<16x32xf32, #tpu.memory_space<vmem>>, vector<2x32xf32>,
    %c3 = arith.constant 3 : index
    %c0_128 = arith.constant 0 : index
    %c0_129 = arith.constant 0 : index
    %492 = vector.load %arg1[%c3, %c0_128, %c0_129] : memref<4x32x128xf32, #tpu.memory_space<vmem>>, vector<1x32x128xf32>
    %493 = vector.shape_cast %492 : vector<1x32x128xf32> to vector<32x128xf32>
    %c3_130 = arith.constant 3 : index
    %c0_131 = arith.constant 0 : index
    %c0_132 = arith.constant 0 : index
    %494 = vector.load %arg2[%c3_130, %c0_131, %c0_132] : memref<4x32x128xf32, #tpu.memory_space<vmem>>, vector<1x32x128xf32>
    %495 = vector.shape_cast %494 : vector<1x32x128xf32> to vector<32x128xf32>
    %c3_133 = arith.constant 3 : index
    %c0_134 = arith.constant 0 : index
    %c0_135 = arith.constant 0 : index
    %496 = vector.load %arg3[%c3_133, %c0_134, %c0_135] : memref<4x1x128xf32, #tpu.memory_space<vmem>>, vector<1x1x128xf32>
    %497 = vector.shape_cast %496 : vector<1x1x128xf32> to vector<1x128xf32>
    %c0_136 = arith.constant 0 : index
    %c0_137 = arith.constant 0 : index
    %498 = vector.load %arg7[%c0_136, %c0_137] : memref<16x32xf32, #tpu.memory_space<vmem>>, vector<16x32xf32>
    %cst_138 = arith.constant dense<0.000000e+00> : vector<16x128xf32>
    %499 = tpu.matmul %498, %493, %cst_138 {dimension_numbers = #tpu.dot_dimension_numbers<[1], [0], [0], [1], [0, 0, 1, 1], [], []>} : vector<16x32xf32>, vector<32x128xf32>, vector<16x128xf32> -> vector<16x128xf32>
    %500 = vector.broadcast %497 : vector<1x128xf32> to vector<16x128xf32>
    %501 = arith.addf %499, %500 : vector<16x128xf32>
    %cst_139 = arith.constant 0.000000e+00 : f32
    %502 = vector.broadcast %cst_139 : f32 to vector<2x32xf32>
    %cst_140 = arith.constant 0.000000e+00 : f32
    %503 = vector.broadcast %cst_140 : f32 to vector<2x32xf32>
    %504 = vector.extract_strided_slice %501 {offsets = [0, 0], sizes = [2, 128], strides = [1, 1]} : vector<16x128xf32> to vector<2x128xf32>
    %cst_141 = arith.constant dense<0.000000e+00> : vector<2x128xf32>
    %505 = tpu.matmul %502, %495, %cst_141 {dimension_numbers = #tpu.dot_dimension_numbers<[1], [0], [0], [1], [0, 0, 1, 1], [], []>} : vector<2x32xf32>, vector<32x128xf32>, vector<2x128xf32> -> vector<2x128xf32>
    %506 = arith.addf %504, %505 : vector<2x128xf32>
    %507 = arith.negf %506 : vector<2x128xf32>
    %508 = math.exp %507 : vector<2x128xf32>
    %cst_142 = arith.constant 1.000000e+00 : f32
    %509 = vector.broadcast %cst_142 : f32 to vector<2x128xf32>
    %510 = arith.addf %509, %508 : vector<2x128xf32>
    %511 = arith.divf %509, %510 : vector<2x128xf32>
    %512 = math.tanh %506 : vector<2x128xf32>
    %513 = vector.extract_strided_slice %511 {offsets = [0, 0], sizes = [2, 32], strides = [1, 1]} : vector<2x128xf32> to vector<2x32xf32>
    %514 = vector.extract_strided_slice %511 {offsets = [0, 32], sizes = [2, 32], strides = [1, 1]} : vector<2x128xf32> to vector<2x32xf32>
    %515 = vector.extract_strided_slice %512 {offsets = [0, 64], sizes = [2, 32], strides = [1, 1]} : vector<2x128xf32> to vector<2x32xf32>
    %516 = vector.extract_strided_slice %511 {offsets = [0, 96], sizes = [2, 32], strides = [1, 1]} : vector<2x128xf32> to vector<2x32xf32>
    %517 = arith.mulf %514, %503 : vector<2x32xf32>
    %518 = arith.mulf %513, %515 : vector<2x32xf32>
    %519 = arith.addf %517, %518 : vector<2x32xf32>
    %520 = math.tanh %519 : vector<2x32xf32>
    %521 = arith.mulf %516, %520 : vector<2x32xf32>
    %522 = vector.extract_strided_slice %521 {offsets = [1, 0], sizes = [1, 32], strides = [1, 1]} : vector<2x32xf32> to vector<1x32xf32>
    %c0_143 = arith.constant 0 : index
    %c0_144 = arith.constant 0 : index
    %523 = vector.load %arg8[%c0_143, %c0_144] : memref<8x32xf32, #tpu.memory_space<vmem>>, vector<1x32xf32>
    tpu.vector_store %arg8[%c0_143, %c0_144], %522 {strides = array<i32>} : memref<8x32xf32, #tpu.memory_space<vmem>>, vector<1x32xf32>,
    %524 = vector.extract_strided_slice %501 {offsets = [2, 0], sizes = [2, 128], strides = [1, 1]} : vector<16x128xf32> to vector<2x128xf32>
    %cst_145 = arith.constant dense<0.000000e+00> : vector<2x128xf32>
    %525 = tpu.matmul %521, %495, %cst_145 {dimension_numbers = #tpu.dot_dimension_numbers<[1], [0], [0], [1], [0, 0, 1, 1], [], []>} : vector<2x32xf32>, vector<32x128xf32>, vector<2x128xf32> -> vector<2x128xf32>
    %526 = arith.addf %524, %525 : vector<2x128xf32>
    %527 = arith.negf %526 : vector<2x128xf32>
    %528 = math.exp %527 : vector<2x128xf32>
    %cst_146 = arith.constant 1.000000e+00 : f32
    %529 = vector.broadcast %cst_146 : f32 to vector<2x128xf32>
    %530 = arith.addf %529, %528 : vector<2x128xf32>
    %531 = arith.divf %529, %530 : vector<2x128xf32>
    %532 = math.tanh %526 : vector<2x128xf32>
    %533 = vector.extract_strided_slice %531 {offsets = [0, 0], sizes = [2, 32], strides = [1, 1]} : vector<2x128xf32> to vector<2x32xf32>
    %534 = vector.extract_strided_slice %531 {offsets = [0, 32], sizes = [2, 32], strides = [1, 1]} : vector<2x128xf32> to vector<2x32xf32>
    %535 = vector.extract_strided_slice %532 {offsets = [0, 64], sizes = [2, 32], strides = [1, 1]} : vector<2x128xf32> to vector<2x32xf32>
    %536 = vector.extract_strided_slice %531 {offsets = [0, 96], sizes = [2, 32], strides = [1, 1]} : vector<2x128xf32> to vector<2x32xf32>
    %537 = arith.mulf %534, %519 : vector<2x32xf32>
    %538 = arith.mulf %533, %535 : vector<2x32xf32>
    %539 = arith.addf %537, %538 : vector<2x32xf32>
    %540 = math.tanh %539 : vector<2x32xf32>
    %541 = arith.mulf %536, %540 : vector<2x32xf32>
    %542 = vector.extract_strided_slice %541 {offsets = [1, 0], sizes = [1, 32], strides = [1, 1]} : vector<2x32xf32> to vector<1x32xf32>
    %c1_147 = arith.constant 1 : index
    %c0_148 = arith.constant 0 : index
    %543 = vector.load %arg8[%c1_147, %c0_148] : memref<8x32xf32, #tpu.memory_space<vmem>>, vector<1x32xf32>
    tpu.vector_store %arg8[%c1_147, %c0_148], %542 {strides = array<i32>} : memref<8x32xf32, #tpu.memory_space<vmem>>, vector<1x32xf32>,
    %544 = vector.extract_strided_slice %501 {offsets = [4, 0], sizes = [2, 128], strides = [1, 1]} : vector<16x128xf32> to vector<2x128xf32>
    %cst_149 = arith.constant dense<0.000000e+00> : vector<2x128xf32>
    %545 = tpu.matmul %541, %495, %cst_149 {dimension_numbers = #tpu.dot_dimension_numbers<[1], [0], [0], [1], [0, 0, 1, 1], [], []>} : vector<2x32xf32>, vector<32x128xf32>, vector<2x128xf32> -> vector<2x128xf32>
    %546 = arith.addf %544, %545 : vector<2x128xf32>
    %547 = arith.negf %546 : vector<2x128xf32>
    %548 = math.exp %547 : vector<2x128xf32>
    %cst_150 = arith.constant 1.000000e+00 : f32
    %549 = vector.broadcast %cst_150 : f32 to vector<2x128xf32>
    %550 = arith.addf %549, %548 : vector<2x128xf32>
    %551 = arith.divf %549, %550 : vector<2x128xf32>
    %552 = math.tanh %546 : vector<2x128xf32>
    %553 = vector.extract_strided_slice %551 {offsets = [0, 0], sizes = [2, 32], strides = [1, 1]} : vector<2x128xf32> to vector<2x32xf32>
    %554 = vector.extract_strided_slice %551 {offsets = [0, 32], sizes = [2, 32], strides = [1, 1]} : vector<2x128xf32> to vector<2x32xf32>
    %555 = vector.extract_strided_slice %552 {offsets = [0, 64], sizes = [2, 32], strides = [1, 1]} : vector<2x128xf32> to vector<2x32xf32>
    %556 = vector.extract_strided_slice %551 {offsets = [0, 96], sizes = [2, 32], strides = [1, 1]} : vector<2x128xf32> to vector<2x32xf32>
    %557 = arith.mulf %554, %539 : vector<2x32xf32>
    %558 = arith.mulf %553, %555 : vector<2x32xf32>
    %559 = arith.addf %557, %558 : vector<2x32xf32>
    %560 = math.tanh %559 : vector<2x32xf32>
    %561 = arith.mulf %556, %560 : vector<2x32xf32>
    %562 = vector.extract_strided_slice %561 {offsets = [1, 0], sizes = [1, 32], strides = [1, 1]} : vector<2x32xf32> to vector<1x32xf32>
    %c2_151 = arith.constant 2 : index
    %c0_152 = arith.constant 0 : index
    %563 = vector.load %arg8[%c2_151, %c0_152] : memref<8x32xf32, #tpu.memory_space<vmem>>, vector<1x32xf32>
    tpu.vector_store %arg8[%c2_151, %c0_152], %562 {strides = array<i32>} : memref<8x32xf32, #tpu.memory_space<vmem>>, vector<1x32xf32>,
    %564 = vector.extract_strided_slice %501 {offsets = [6, 0], sizes = [2, 128], strides = [1, 1]} : vector<16x128xf32> to vector<2x128xf32>
    %cst_153 = arith.constant dense<0.000000e+00> : vector<2x128xf32>
    %565 = tpu.matmul %561, %495, %cst_153 {dimension_numbers = #tpu.dot_dimension_numbers<[1], [0], [0], [1], [0, 0, 1, 1], [], []>} : vector<2x32xf32>, vector<32x128xf32>, vector<2x128xf32> -> vector<2x128xf32>
    %566 = arith.addf %564, %565 : vector<2x128xf32>
    %567 = arith.negf %566 : vector<2x128xf32>
    %568 = math.exp %567 : vector<2x128xf32>
    %cst_154 = arith.constant 1.000000e+00 : f32
    %569 = vector.broadcast %cst_154 : f32 to vector<2x128xf32>
    %570 = arith.addf %569, %568 : vector<2x128xf32>
    %571 = arith.divf %569, %570 : vector<2x128xf32>
    %572 = math.tanh %566 : vector<2x128xf32>
    %573 = vector.extract_strided_slice %571 {offsets = [0, 0], sizes = [2, 32], strides = [1, 1]} : vector<2x128xf32> to vector<2x32xf32>
    %574 = vector.extract_strided_slice %571 {offsets = [0, 32], sizes = [2, 32], strides = [1, 1]} : vector<2x128xf32> to vector<2x32xf32>
    %575 = vector.extract_strided_slice %572 {offsets = [0, 64], sizes = [2, 32], strides = [1, 1]} : vector<2x128xf32> to vector<2x32xf32>
    %576 = vector.extract_strided_slice %571 {offsets = [0, 96], sizes = [2, 32], strides = [1, 1]} : vector<2x128xf32> to vector<2x32xf32>
    %577 = arith.mulf %574, %559 : vector<2x32xf32>
    %578 = arith.mulf %573, %575 : vector<2x32xf32>
    %579 = arith.addf %577, %578 : vector<2x32xf32>
    %580 = math.tanh %579 : vector<2x32xf32>
    %581 = arith.mulf %576, %580 : vector<2x32xf32>
    %582 = vector.extract_strided_slice %581 {offsets = [1, 0], sizes = [1, 32], strides = [1, 1]} : vector<2x32xf32> to vector<1x32xf32>
    %c3_155 = arith.constant 3 : index
    %c0_156 = arith.constant 0 : index
    %583 = vector.load %arg8[%c3_155, %c0_156] : memref<8x32xf32, #tpu.memory_space<vmem>>, vector<1x32xf32>
    tpu.vector_store %arg8[%c3_155, %c0_156], %582 {strides = array<i32>} : memref<8x32xf32, #tpu.memory_space<vmem>>, vector<1x32xf32>,
    %584 = vector.extract_strided_slice %501 {offsets = [8, 0], sizes = [2, 128], strides = [1, 1]} : vector<16x128xf32> to vector<2x128xf32>
    %cst_157 = arith.constant dense<0.000000e+00> : vector<2x128xf32>
    %585 = tpu.matmul %581, %495, %cst_157 {dimension_numbers = #tpu.dot_dimension_numbers<[1], [0], [0], [1], [0, 0, 1, 1], [], []>} : vector<2x32xf32>, vector<32x128xf32>, vector<2x128xf32> -> vector<2x128xf32>
    %586 = arith.addf %584, %585 : vector<2x128xf32>
    %587 = arith.negf %586 : vector<2x128xf32>
    %588 = math.exp %587 : vector<2x128xf32>
    %cst_158 = arith.constant 1.000000e+00 : f32
    %589 = vector.broadcast %cst_158 : f32 to vector<2x128xf32>
    %590 = arith.addf %589, %588 : vector<2x128xf32>
    %591 = arith.divf %589, %590 : vector<2x128xf32>
    %592 = math.tanh %586 : vector<2x128xf32>
    %593 = vector.extract_strided_slice %591 {offsets = [0, 0], sizes = [2, 32], strides = [1, 1]} : vector<2x128xf32> to vector<2x32xf32>
    %594 = vector.extract_strided_slice %591 {offsets = [0, 32], sizes = [2, 32], strides = [1, 1]} : vector<2x128xf32> to vector<2x32xf32>
    %595 = vector.extract_strided_slice %592 {offsets = [0, 64], sizes = [2, 32], strides = [1, 1]} : vector<2x128xf32> to vector<2x32xf32>
    %596 = vector.extract_strided_slice %591 {offsets = [0, 96], sizes = [2, 32], strides = [1, 1]} : vector<2x128xf32> to vector<2x32xf32>
    %597 = arith.mulf %594, %579 : vector<2x32xf32>
    %598 = arith.mulf %593, %595 : vector<2x32xf32>
    %599 = arith.addf %597, %598 : vector<2x32xf32>
    %600 = math.tanh %599 : vector<2x32xf32>
    %601 = arith.mulf %596, %600 : vector<2x32xf32>
    %602 = vector.extract_strided_slice %601 {offsets = [1, 0], sizes = [1, 32], strides = [1, 1]} : vector<2x32xf32> to vector<1x32xf32>
    %c4_159 = arith.constant 4 : index
    %c0_160 = arith.constant 0 : index
    %603 = vector.load %arg8[%c4_159, %c0_160] : memref<8x32xf32, #tpu.memory_space<vmem>>, vector<1x32xf32>
    tpu.vector_store %arg8[%c4_159, %c0_160], %602 {strides = array<i32>} : memref<8x32xf32, #tpu.memory_space<vmem>>, vector<1x32xf32>,
    %604 = vector.extract_strided_slice %501 {offsets = [10, 0], sizes = [2, 128], strides = [1, 1]} : vector<16x128xf32> to vector<2x128xf32>
    %cst_161 = arith.constant dense<0.000000e+00> : vector<2x128xf32>
    %605 = tpu.matmul %601, %495, %cst_161 {dimension_numbers = #tpu.dot_dimension_numbers<[1], [0], [0], [1], [0, 0, 1, 1], [], []>} : vector<2x32xf32>, vector<32x128xf32>, vector<2x128xf32> -> vector<2x128xf32>
    %606 = arith.addf %604, %605 : vector<2x128xf32>
    %607 = arith.negf %606 : vector<2x128xf32>
    %608 = math.exp %607 : vector<2x128xf32>
    %cst_162 = arith.constant 1.000000e+00 : f32
    %609 = vector.broadcast %cst_162 : f32 to vector<2x128xf32>
    %610 = arith.addf %609, %608 : vector<2x128xf32>
    %611 = arith.divf %609, %610 : vector<2x128xf32>
    %612 = math.tanh %606 : vector<2x128xf32>
    %613 = vector.extract_strided_slice %611 {offsets = [0, 0], sizes = [2, 32], strides = [1, 1]} : vector<2x128xf32> to vector<2x32xf32>
    %614 = vector.extract_strided_slice %611 {offsets = [0, 32], sizes = [2, 32], strides = [1, 1]} : vector<2x128xf32> to vector<2x32xf32>
    %615 = vector.extract_strided_slice %612 {offsets = [0, 64], sizes = [2, 32], strides = [1, 1]} : vector<2x128xf32> to vector<2x32xf32>
    %616 = vector.extract_strided_slice %611 {offsets = [0, 96], sizes = [2, 32], strides = [1, 1]} : vector<2x128xf32> to vector<2x32xf32>
    %617 = arith.mulf %614, %599 : vector<2x32xf32>
    %618 = arith.mulf %613, %615 : vector<2x32xf32>
    %619 = arith.addf %617, %618 : vector<2x32xf32>
    %620 = math.tanh %619 : vector<2x32xf32>
    %621 = arith.mulf %616, %620 : vector<2x32xf32>
    %622 = vector.extract_strided_slice %621 {offsets = [1, 0], sizes = [1, 32], strides = [1, 1]} : vector<2x32xf32> to vector<1x32xf32>
    %c5 = arith.constant 5 : index
    %c0_163 = arith.constant 0 : index
    %623 = vector.load %arg8[%c5, %c0_163] : memref<8x32xf32, #tpu.memory_space<vmem>>, vector<1x32xf32>
    tpu.vector_store %arg8[%c5, %c0_163], %622 {strides = array<i32>} : memref<8x32xf32, #tpu.memory_space<vmem>>, vector<1x32xf32>,
    %624 = vector.extract_strided_slice %501 {offsets = [12, 0], sizes = [2, 128], strides = [1, 1]} : vector<16x128xf32> to vector<2x128xf32>
    %cst_164 = arith.constant dense<0.000000e+00> : vector<2x128xf32>
    %625 = tpu.matmul %621, %495, %cst_164 {dimension_numbers = #tpu.dot_dimension_numbers<[1], [0], [0], [1], [0, 0, 1, 1], [], []>} : vector<2x32xf32>, vector<32x128xf32>, vector<2x128xf32> -> vector<2x128xf32>
    %626 = arith.addf %624, %625 : vector<2x128xf32>
    %627 = arith.negf %626 : vector<2x128xf32>
    %628 = math.exp %627 : vector<2x128xf32>
    %cst_165 = arith.constant 1.000000e+00 : f32
    %629 = vector.broadcast %cst_165 : f32 to vector<2x128xf32>
    %630 = arith.addf %629, %628 : vector<2x128xf32>
    %631 = arith.divf %629, %630 : vector<2x128xf32>
    %632 = math.tanh %626 : vector<2x128xf32>
    %633 = vector.extract_strided_slice %631 {offsets = [0, 0], sizes = [2, 32], strides = [1, 1]} : vector<2x128xf32> to vector<2x32xf32>
    %634 = vector.extract_strided_slice %631 {offsets = [0, 32], sizes = [2, 32], strides = [1, 1]} : vector<2x128xf32> to vector<2x32xf32>
    %635 = vector.extract_strided_slice %632 {offsets = [0, 64], sizes = [2, 32], strides = [1, 1]} : vector<2x128xf32> to vector<2x32xf32>
    %636 = vector.extract_strided_slice %631 {offsets = [0, 96], sizes = [2, 32], strides = [1, 1]} : vector<2x128xf32> to vector<2x32xf32>
    %637 = arith.mulf %634, %619 : vector<2x32xf32>
    %638 = arith.mulf %633, %635 : vector<2x32xf32>
    %639 = arith.addf %637, %638 : vector<2x32xf32>
    %640 = math.tanh %639 : vector<2x32xf32>
    %641 = arith.mulf %636, %640 : vector<2x32xf32>
    %642 = vector.extract_strided_slice %641 {offsets = [1, 0], sizes = [1, 32], strides = [1, 1]} : vector<2x32xf32> to vector<1x32xf32>
    %c6_166 = arith.constant 6 : index
    %c0_167 = arith.constant 0 : index
    %643 = vector.load %arg8[%c6_166, %c0_167] : memref<8x32xf32, #tpu.memory_space<vmem>>, vector<1x32xf32>
    tpu.vector_store %arg8[%c6_166, %c0_167], %642 {strides = array<i32>} : memref<8x32xf32, #tpu.memory_space<vmem>>, vector<1x32xf32>,
    %644 = vector.extract_strided_slice %501 {offsets = [14, 0], sizes = [2, 128], strides = [1, 1]} : vector<16x128xf32> to vector<2x128xf32>
    %cst_168 = arith.constant dense<0.000000e+00> : vector<2x128xf32>
    %645 = tpu.matmul %641, %495, %cst_168 {dimension_numbers = #tpu.dot_dimension_numbers<[1], [0], [0], [1], [0, 0, 1, 1], [], []>} : vector<2x32xf32>, vector<32x128xf32>, vector<2x128xf32> -> vector<2x128xf32>
    %646 = arith.addf %644, %645 : vector<2x128xf32>
    %647 = arith.negf %646 : vector<2x128xf32>
    %648 = math.exp %647 : vector<2x128xf32>
    %cst_169 = arith.constant 1.000000e+00 : f32
    %649 = vector.broadcast %cst_169 : f32 to vector<2x128xf32>
    %650 = arith.addf %649, %648 : vector<2x128xf32>
    %651 = arith.divf %649, %650 : vector<2x128xf32>
    %652 = math.tanh %646 : vector<2x128xf32>
    %653 = vector.extract_strided_slice %651 {offsets = [0, 0], sizes = [2, 32], strides = [1, 1]} : vector<2x128xf32> to vector<2x32xf32>
    %654 = vector.extract_strided_slice %651 {offsets = [0, 32], sizes = [2, 32], strides = [1, 1]} : vector<2x128xf32> to vector<2x32xf32>
    %655 = vector.extract_strided_slice %652 {offsets = [0, 64], sizes = [2, 32], strides = [1, 1]} : vector<2x128xf32> to vector<2x32xf32>
    %656 = vector.extract_strided_slice %651 {offsets = [0, 96], sizes = [2, 32], strides = [1, 1]} : vector<2x128xf32> to vector<2x32xf32>
    %657 = arith.mulf %654, %639 : vector<2x32xf32>
    %658 = arith.mulf %653, %655 : vector<2x32xf32>
    %659 = arith.addf %657, %658 : vector<2x32xf32>
    %660 = math.tanh %659 : vector<2x32xf32>
    %661 = arith.mulf %656, %660 : vector<2x32xf32>
    %662 = vector.extract_strided_slice %661 {offsets = [1, 0], sizes = [1, 32], strides = [1, 1]} : vector<2x32xf32> to vector<1x32xf32>
    %c7 = arith.constant 7 : index
    %c0_170 = arith.constant 0 : index
    %663 = vector.load %arg8[%c7, %c0_170] : memref<8x32xf32, #tpu.memory_space<vmem>>, vector<1x32xf32>
    tpu.vector_store %arg8[%c7, %c0_170], %662 {strides = array<i32>} : memref<8x32xf32, #tpu.memory_space<vmem>>, vector<1x32xf32>,
    %c0_171 = arith.constant 0 : index
    %c0_172 = arith.constant 0 : index
    %664 = vector.load %arg8[%c0_171, %c0_172] : memref<8x32xf32, #tpu.memory_space<vmem>>, vector<8x32xf32>
    %c0_173 = arith.constant 0 : index
    %c0_174 = arith.constant 0 : index
    %665 = vector.load %arg4[%c0_173, %c0_174] : memref<1x32xf32, #tpu.memory_space<vmem>>, vector<1x32xf32>
    %666 = vector.broadcast %665 : vector<1x32xf32> to vector<8x32xf32>
    %667 = arith.mulf %664, %666 : vector<8x32xf32>
    %cst_175 = arith.constant dense<0.000000e+00> : vector<8xf32>
    %668 = vector.multi_reduction <add>, %667, %cst_175 [1] : vector<8x32xf32> to vector<8xf32>
    %669 = vector.shape_cast %668 : vector<8xf32> to vector<8x1xf32>
    %c0_176 = arith.constant 0 : index
    %c0_177 = arith.constant 0 : index
    %670 = vector.load %arg5[%c0_176, %c0_177] : memref<1x1xf32, #tpu.memory_space<vmem>>, vector<1x1xf32>
    %671 = vector.broadcast %670 : vector<1x1xf32> to vector<8x1xf32>
    %672 = arith.addf %669, %671 : vector<8x1xf32>
    %c0_178 = arith.constant 0 : index
    %c0_179 = arith.constant 0 : index
    %673 = vector.load %arg6[%c0_178, %c0_179] : memref<8x1xf32, #tpu.memory_space<vmem>>, vector<8x1xf32>
    tpu.vector_store %arg6[%c0_178, %c0_179], %672 {strides = array<i32>} : memref<8x1xf32, #tpu.memory_space<vmem>>, vector<8x1xf32>,
    return
  }
}

</mosaic_0001>

<llo_original>
// kernel: cpg_predictor_forward.1
$region0: #{cpg_predictor_forward.1}
  #allocation0 [shape = 'u32[]', space=smem, size = 0x4, offset = 0x4, fixed_abs, tag = 'smem constant byte address 0x4 - core index']
  #allocation1 [shape = 'u32[144,128]{1,0:T(1,128)}', space=vmem, size = 0x12000, scoped, tag = 'internal scratch']
  #allocation2 [shape = 'f32[16,32]{1,0:T(8,128)}', space=vmem, size = 0x2000, scoped, tag = 'scratch operand']
  #allocation3 [shape = 'f32[8,32]{1,0:T(8,128)}', space=vmem, size = 0x1000, scoped, tag = 'scratch operand']
  #allocation4 [shape = 'f32[1,1]{1,0:T(1,128)S(1)}', space=vmem, size = 0x200, scoped, tag = 'scoped memory for cpg_predictor_forward.1']
  %s0 = inlined_call_operand.vmem [shape: f32[16,32], index: 0, kind: input, shape index: {}]
  %s1 = inlined_call_operand.vmem [shape: f32[4,32,128], index: 1, kind: input, shape index: {}]
  %s2 = inlined_call_operand.vmem [shape: f32[4,32,128], index: 2, kind: input, shape index: {}]
  %s3 = inlined_call_operand.vmem [shape: f32[4,1,128], index: 3, kind: input, shape index: {}]
  %s4 = inlined_call_operand.vmem [shape: f32[1,32], index: 4, kind: input, shape index: {}]
  %s5 = inlined_call_operand.<no memory space> [shape: f32[1,1], index: 5, kind: input, shape index: {}]
  %s6 = inlined_call_operand.vmem [shape: f32[8,1], index: 6, kind: output, shape index: {}]
  %s7 = sld [smem:[#allocation0]]
  $region34: #{cpg_predictor_forward.1} parent=0
    _
  %s9 = ssub.s32 1, %s7
  %s10 = scalar_select 0, %s9, %s7
  %v11 = vstv %s5
  %12 = vst [vmem:[#allocation4] sm:$0x1] %v11
  // Predicated region
  $region2: #{cpg_predictor_forward.1} parent=0 // pred_check
    _
  $region3: #{cpg_predictor_forward.1} parent=0 // pred_check_branch
    %14 = sbr.rel (0) target = $region5
  $region4: #{cpg_predictor_forward.1} parent=0 // pred_region
    _
  $region5: #{cpg_predictor_forward.1} parent=0 // pred_fallthru
    _
  // Predicated region
  $region6: #{cpg_predictor_forward.1} parent=0 // pred_check
    _
  $region7: #{cpg_predictor_forward.1} parent=0 // pred_check_branch
    %16 = sbr.rel (0) target = $region9
  $region8: #{cpg_predictor_forward.1} parent=0 // pred_region
    _
  $region9: #{cpg_predictor_forward.1} parent=0 // pred_fallthru
    _
  // Predicated region
  $region10: #{cpg_predictor_forward.1} parent=0 // pred_check
    _
  $region11: #{cpg_predictor_forward.1} parent=0 // pred_check_branch
    %18 = sbr.rel (0) target = $region13
  $region12: #{cpg_predictor_forward.1} parent=0 // pred_region
    _
  $region13: #{cpg_predictor_forward.1} parent=0 // pred_fallthru
    _
  // Predicated region
  $region14: #{cpg_predictor_forward.1} parent=0 // pred_check
    _
  $region15: #{cpg_predictor_forward.1} parent=0 // pred_check_branch
    %20 = sbr.rel (0) target = $region17
  $region16: #{cpg_predictor_forward.1} parent=0 // pred_region
    _
  $region17: #{cpg_predictor_forward.1} parent=0 // pred_fallthru
    _
  // Predicated region
  $region18: #{cpg_predictor_forward.1} parent=0 // pred_check
    _
  $region19: #{cpg_predictor_forward.1} parent=0 // pred_check_branch
    %22 = sbr.rel (0) target = $region21
  $region20: #{cpg_predictor_forward.1} parent=0 // pred_region
    _
  $region21: #{cpg_predictor_forward.1} parent=0 // pred_fallthru
    _
  // Predicated region
  $region22: #{cpg_predictor_forward.1} parent=0 // pred_check
    _
  $region23: #{cpg_predictor_forward.1} parent=0 // pred_check_branch
    %24 = sbr.rel (0) target = $region25
  $region24: #{cpg_predictor_forward.1} parent=0 // pred_region
    _
  $region25: #{cpg_predictor_forward.1} parent=0 // pred_fallthru
    _
  %v25 = vld [vmem:[%s1] sm:$0xff]
  %v26 = vld [vmem:[%s1 + $0x8] sm:$0xff]
  %v27 = vld [vmem:[%s1 + $0x10] sm:$0xff]
  %v28 = vld [vmem:[%s1 + $0x18] sm:$0xff]
  %v29 = vld [vmem:[%s2] sm:$0xff]
  %v30 = vld [vmem:[%s2 + $0x8] sm:$0xff]
  %v31 = vld [vmem:[%s2 + $0x10] sm:$0xff]
  %v32 = vld [vmem:[%s2 + $0x18] sm:$0xff]
  %v33 = vld [vmem:[%s3] sm:$0x1]
  %v34 = vld [vmem:[%s0] sm:$0xff]
  %v35 = vld [vmem:[%s0 + $0x8] sm:$0xff]
  %v37 = vlaneseq
  %v38 = vshrl.u32 %v37, 7
  %v39 = vsub.s32 0, %v38
  %v40 = vrot.slane %v33, %v39
  %vm42 = vcmask 261120
  %v44 = vsel %vm42, %v34, 0
  %v47 = vsel %vm42, %v35, 0
  %49 = vmatprep.subr.mxu0 0.0
  %50 = vmatpush1.msra.mxu0 %v25
  %51 = vmatprep.subr.mxu0 0.0
  %52 = vmatpush1.msra.mxu0 %v26
  %53 = vmatprep.subr.mxu0 0.0
  %54 = vmatpush1.msra.mxu0 %v27
  %55 = vmatprep.subr.mxu0 0.0
  %56 = vmatpush1.msra.mxu0 %v28
  %57 = vmatprep.subr.mxu0 0.0
  %58 = vmatpush1.msra.mxu0 0.0
  %59 = vmatprep.subr.mxu0 0.0
  %60 = vmatpush1.msra.mxu0 0.0
  %61 = vmatprep.subr.mxu0 0.0
  %62 = vmatpush1.msra.mxu0 0.0
  %63 = vmatprep.subr.mxu0 0.0
  %64 = vmatpush1.msra.mxu0 0.0
  %65 = vmatprep.subr.mxu0 0.0
  %66 = vmatpush1.msra.mxu0 0.0
  %67 = vmatprep.subr.mxu0 0.0
  %68 = vmatpush1.msra.mxu0 0.0
  %69 = vmatprep.subr.mxu0 0.0
  %70 = vmatpush1.msra.mxu0 0.0
  %71 = vmatprep.subr.mxu0 0.0
  %72 = vmatpush1.msra.mxu0 0.0
  %73 = vmatprep.subr.mxu0 0.0
  %74 = vmatpush1.msra.mxu0 0.0
  %75 = vmatprep.subr.mxu0 0.0
  %76 = vmatpush1.msra.mxu0 0.0
  %77 = vmatprep.subr.mxu0 0.0
  %78 = vmatpush1.msra.mxu0 0.0
  %79 = vmatprep.subr.mxu0 0.0
  %80 = vmatpush1.msra.mxu0 0.0
  %81 = vmatprep.subr.mxu0 0.0
  %82 = vmatpush1.msra.mxu0 0.0
  %83 = vmatprep.subr.mxu0 0.0
  %84 = vmatpush1.msra.mxu0 0.0
  %85 = vmatprep.subr.mxu0 0.0
  %86 = vmatpush1.msra.mxu0 0.0
  %87 = vmatprep.subr.mxu0 0.0
  %88 = vmatpush1.msra.mxu0 0.0
  %89 = vmatprep.subr.mxu0 0.0
  %90 = vmatpush1.msra.mxu0 0.0
  %91 = vmatprep.subr.mxu0 0.0
  %92 = vmatpush1.msra.mxu0 0.0
  %93 = vmatprep.subr.mxu0 0.0
  %94 = vmatpush1.msra.mxu0 0.0
  %95 = vmatprep.subr.mxu0 0.0
  %96 = vmatpush1.msra.mxu0 0.0
  %97 = vmatprep.subr.mxu0 0.0
  %98 = vmatpush1.msra.mxu0 0.0
  %99 = vmatprep.subr.mxu0 0.0
  %100 = vmatpush1.msra.mxu0 0.0
  %101 = vmatprep.subr.mxu0 0.0
  %102 = vmatpush1.msra.mxu0 0.0
  %103 = vmatprep.subr.mxu0 0.0
  %104 = vmatpush1.msra.mxu0 0.0
  %105 = vmatprep.subr.mxu0 0.0
  %106 = vmatpush1.msra.mxu0 0.0
  %107 = vmatprep.subr.mxu0 0.0
  %108 = vmatpush1.msra.mxu0 0.0
  %109 = vmatprep.subr.mxu0 0.0
  %110 = vmatpush1.msra.mxu0 0.0
  %111 = vmatprep.subr.mxu0 0.0
  %112 = vmatpush1.msra.mxu0 0.0
  %113 = vmatprep.mubr.f32.mxu0 0.0
  %114 = vmatmul.mubr.f32.gmra.mrb[0].mxu0 %v44
  %v115 = vpop.f32.mrb[0].mxu0
  %v116 = vadd.f32 %v40, %v115
  %v117 = vpop.f32.mrb[0].mxu0
  %118 = vmatprep.mubr.f32.mxu0 0.0
  %119 = vmatmul.mubr.f32.gmra.mrb[0].mxu0 %v47
  %v120 = vpop.f32.mrb[0].mxu0
  %v121 = vadd.f32 %v40, %v120
  %v122 = vpop.f32.mrb[0].mxu0
  %123 = vdwg.mxu0
  %v125 = vsel %vm42, 0.0, 0
  %127 = vmatprep.subr.mxu0 0.0
  %128 = vmatpush1.msra.mxu0 %v29
  %129 = vmatprep.subr.mxu0 0.0
  %130 = vmatpush1.msra.mxu0 %v30
  %131 = vmatprep.subr.mxu0 0.0
  %132 = vmatpush1.msra.mxu0 %v31
  %133 = vmatprep.subr.mxu0 0.0
  %134 = vmatpush1.msra.mxu0 %v32
  %135 = vmatprep.subr.mxu0 0.0
  %136 = vmatpush1.msra.mxu0 0.0
  %137 = vmatprep.subr.mxu0 0.0
  %138 = vmatpush1.msra.mxu0 0.0
  %139 = vmatprep.subr.mxu0 0.0
  %140 = vmatpush1.msra.mxu0 0.0
  %141 = vmatprep.subr.mxu0 0.0
  %142 = vmatpush1.msra.mxu0 0.0
  %143 = vmatprep.subr.mxu0 0.0
  %144 = vmatpush1.msra.mxu0 0.0
  %145 = vmatprep.subr.mxu0 0.0
  %146 = vmatpush1.msra.mxu0 0.0
  %147 = vmatprep.subr.mxu0 0.0
  %148 = vmatpush1.msra.mxu0 0.0
  %149 = vmatprep.subr.mxu0 0.0
  %150 = vmatpush1.msra.mxu0 0.0
  %151 = vmatprep.subr.mxu0 0.0
  %152 = vmatpush1.msra.mxu0 0.0
  %153 = vmatprep.subr.mxu0 0.0
  %154 = vmatpush1.msra.mxu0 0.0
  %155 = vmatprep.subr.mxu0 0.0
  %156 = vmatpush1.msra.mxu0 0.0
  %157 = vmatprep.subr.mxu0 0.0
  %158 = vmatpush1.msra.mxu0 0.0
  %159 = vmatprep.subr.mxu0 0.0
  %160 = vmatpush1.msra.mxu0 0.0
  %161 = vmatprep.subr.mxu0 0.0
  %162 = vmatpush1.msra.mxu0 0.0
  %163 = vmatprep.subr.mxu0 0.0
  %164 = vmatpush1.msra.mxu0 0.0
  %165 = vmatprep.subr.mxu0 0.0
  %166 = vmatpush1.msra.mxu0 0.0
  %167 = vmatprep.subr.mxu0 0.0
  %168 = vmatpush1.msra.mxu0 0.0
  %169 = vmatprep.subr.mxu0 0.0
  %170 = vmatpush1.msra.mxu0 0.0
  %171 = vmatprep.subr.mxu0 0.0
  %172 = vmatpush1.msra.mxu0 0.0
  %173 = vmatprep.subr.mxu0 0.0
  %174 = vmatpush1.msra.mxu0 0.0
  %175 = vmatprep.subr.mxu0 0.0
  %176 = vmatpush1.msra.mxu0 0.0
  %177 = vmatprep.subr.mxu0 0.0
  %178 = vmatpush1.msra.mxu0 0.0
  %179 = vmatprep.subr.mxu0 0.0
  %180 = vmatpush1.msra.mxu0 0.0
  %181 = vmatprep.subr.mxu0 0.0
  %182 = vmatpush1.msra.mxu0 0.0
  %183 = vmatprep.subr.mxu0 0.0
  %184 = vmatpush1.msra.mxu0 0.0
  %185 = vmatprep.subr.mxu0 0.0
  %186 = vmatpush1.msra.mxu0 0.0
  %187 = vmatprep.subr.mxu0 0.0
  %188 = vmatpush1.msra.mxu0 0.0
  %189 = vmatprep.subr.mxu0 0.0
  %190 = vmatpush1.msra.mxu0 0.0
  %191 = vmatprep.mubr.f32.mxu0 0.0
  %192 = vmatmul.mubr.f32.gmra.mrb[0].mxu0 %v125
  %v193 = vpop.f32.mrb[0].mxu0
  %v194 = vadd.f32 0.0, %v193
  %v195 = vpop.f32.mrb[0].mxu0
  %196 = vdwg.mxu0
  %v197 = vadd.f32 %v116, %v194
  %v198 = vxor.u32 %v197, 2147483648
  %v199 = vmul.f32 %v198, 1.442695
  %v200 = vpow.pop %v199
  %v201 = vadd.f32 %v200, 1.0
  %v202 = vrcp.pop %v201
  %v203 = vmul.f32 1.0, %v202
  %v204 = vtanh.pop %v197
  %v205 = vmul.f32 %v203, 0.0
  %207 = vrot.lane.b32.xlu0 %v204, 64
  %v208 = vpop.permute.xlu0 %207
  %v210 = vmul.f32 %v203, %v208
  %212 = vrot.lane.b32.xlu0 %v210, 32
  %v213 = vpop.permute.xlu0 %212
  %v215 = vadd.f32 %v205, %v213
  %v216 = vtanh.pop %v215
  %218 = vrot.lane.b32.xlu0 %v216, 64
  %v219 = vpop.permute.xlu0 %218
  %v221 = vmul.f32 %v203, %v219
  %223 = vrot.lane.b32.xlu0 %v221, 32
  %v224 = vpop.permute.xlu0 %223
  %vm226 = vcmask 254976
  %227 = vst.msk [vmem:[#allocation2] sm:$0x3] %vm226, %v224
  %v228 = vsel %vm42, %v224, 0
  %230 = vmatprep.subr.mxu0 0.0
  %231 = vmatpush1.msra.mxu0 %v29
  %232 = vmatprep.subr.mxu0 0.0
  %233 = vmatpush1.msra.mxu0 %v30
  %234 = vmatprep.subr.mxu0 0.0
  %235 = vmatpush1.msra.mxu0 %v31
  %236 = vmatprep.subr.mxu0 0.0
  %237 = vmatpush1.msra.mxu0 %v32
  %238 = vmatprep.subr.mxu0 0.0
  %239 = vmatpush1.msra.mxu0 0.0
  %240 = vmatprep.subr.mxu0 0.0
  %241 = vmatpush1.msra.mxu0 0.0
  %242 = vmatprep.subr.mxu0 0.0
  %243 = vmatpush1.msra.mxu0 0.0
  %244 = vmatprep.subr.mxu0 0.0
  %245 = vmatpush1.msra.mxu0 0.0
  %246 = vmatprep.subr.mxu0 0.0
  %247 = vmatpush1.msra.mxu0 0.0
  %248 = vmatprep.subr.mxu0 0.0
  %249 = vmatpush1.msra.mxu0 0.0
  %250 = vmatprep.subr.mxu0 0.0
  %251 = vmatpush1.msra.mxu0 0.0
  %252 = vmatprep.subr.mxu0 0.0
  %253 = vmatpush1.msra.mxu0 0.0
  %254 = vmatprep.subr.mxu0 0.0
  %255 = vmatpush1.msra.mxu0 0.0
  %256 = vmatprep.subr.mxu0 0.0
  %257 = vmatpush1.msra.mxu0 0.0
  %258 = vmatprep.subr.mxu0 0.0
  %259 = vmatpush1.msra.mxu0 0.0
  %260 = vmatprep.subr.mxu0 0.0
  %261 = vmatpush1.msra.mxu0 0.0
  %262 = vmatprep.subr.mxu0 0.0
  %263 = vmatpush1.msra.mxu0 0.0
  %264 = vmatprep.subr.mxu0 0.0
  %265 = vmatpush1.msra.mxu0 0.0
  %266 = vmatprep.subr.mxu0 0.0
  %267 = vmatpush1.msra.mxu0 0.0
  %268 = vmatprep.subr.mxu0 0.0
  %269 = vmatpush1.msra.mxu0 0.0
  %270 = vmatprep.subr.mxu0 0.0
  %271 = vmatpush1.msra.mxu0 0.0
  %272 = vmatprep.subr.mxu0 0.0
  %273 = vmatpush1.msra.mxu0 0.0
  %274 = vmatprep.subr.mxu0 0.0
  %275 = vmatpush1.msra.mxu0 0.0
  %276 = vmatprep.subr.mxu0 0.0
  %277 = vmatpush1.msra.mxu0 0.0
  %278 = vmatprep.subr.mxu0 0.0
  %279 = vmatpush1.msra.mxu0 0.0
  %280 = vmatprep.subr.mxu0 0.0
  %281 = vmatpush1.msra.mxu0 0.0
  %282 = vmatprep.subr.mxu0 0.0
  %283 = vmatpush1.msra.mxu0 0.0
  %284 = vmatprep.subr.mxu0 0.0
  %285 = vmatpush1.msra.mxu0 0.0
  %286 = vmatprep.subr.mxu0 0.0
  %287 = vmatpush1.msra.mxu0 0.0
  %288 = vmatprep.subr.mxu0 0.0
  %289 = vmatpush1.msra.mxu0 0.0
  %290 = vmatprep.subr.mxu0 0.0
  %291 = vmatpush1.msra.mxu0 0.0
  %292 = vmatprep.subr.mxu0 0.0
  %293 = vmatpush1.msra.mxu0 0.0
  %294 = vmatprep.mubr.f32.mxu0 0.0
  %295 = vmatmul.mubr.f32.gmra.mrb[0].mxu0 %v228
  %v296 = vpop.f32.mrb[0].mxu0
  %v297 = vadd.f32 0.0, %v296
  %v298 = vpop.f32.mrb[0].mxu0
  %299 = vdwg.mxu0
  %v301 = vrot.slane %v297, 6
  %v303 = vadd.f32 %v116, %v301
  %v304 = vxor.u32 %v303, 2147483648
  %v305 = vmul.f32 %v304, 1.442695
  %v306 = vpow.pop %v305
  %v307 = vadd.f32 %v306, 1.0
  %v308 = vrcp.pop %v307
  %v309 = vmul.f32 1.0, %v308
  %v310 = vtanh.pop %v303
  %v312 = vrot.slane %v215, 6
  %v314 = vmul.f32 %v309, %v312
  %316 = vrot.lane.b32.xlu0 %v310, 64
  %v317 = vpop.permute.xlu0 %316
  %v319 = vmul.f32 %v309, %v317
  %321 = vrot.lane.b32.xlu0 %v319, 32
  %v322 = vpop.permute.xlu0 %321
  %v324 = vadd.f32 %v314, %v322
  %v325 = vtanh.pop %v324
  %327 = vrot.lane.b32.xlu0 %v325, 64
  %v328 = vpop.permute.xlu0 %327
  %v330 = vmul.f32 %v309, %v328
  %332 = vrot.lane.b32.xlu0 %v330, 32
  %v333 = vpop.permute.xlu0 %332
  %vm335 = vcmask 257026
  %336 = vst.msk [vmem:[#allocation2] sm:$0xc] %vm335, %v333
  %v337 = vrot.slane %v330, 2
  %338 = vrot.lane.b32.xlu0 %v337, 32
  %v339 = vpop.permute.xlu0 %338
  %v340 = vsel %vm42, %v339, 0
  %342 = vmatprep.subr.mxu0 0.0
  %343 = vmatpush1.msra.mxu0 %v29
  %344 = vmatprep.subr.mxu0 0.0
  %345 = vmatpush1.msra.mxu0 %v30
  %346 = vmatprep.subr.mxu0 0.0
  %347 = vmatpush1.msra.mxu0 %v31
  %348 = vmatprep.subr.mxu0 0.0
  %349 = vmatpush1.msra.mxu0 %v32
  %350 = vmatprep.subr.mxu0 0.0
  %351 = vmatpush1.msra.mxu0 0.0
  %352 = vmatprep.subr.mxu0 0.0
  %353 = vmatpush1.msra.mxu0 0.0
  %354 = vmatprep.subr.mxu0 0.0
  %355 = vmatpush1.msra.mxu0 0.0
  %356 = vmatprep.subr.mxu0 0.0
  %357 = vmatpush1.msra.mxu0 0.0
  %358 = vmatprep.subr.mxu0 0.0
  %359 = vmatpush1.msra.mxu0 0.0
  %360 = vmatprep.subr.mxu0 0.0
  %361 = vmatpush1.msra.mxu0 0.0
  %362 = vmatprep.subr.mxu0 0.0
  %363 = vmatpush1.msra.mxu0 0.0
  %364 = vmatprep.subr.mxu0 0.0
  %365 = vmatpush1.msra.mxu0 0.0
  %366 = vmatprep.subr.mxu0 0.0
  %367 = vmatpush1.msra.mxu0 0.0
  %368 = vmatprep.subr.mxu0 0.0
  %369 = vmatpush1.msra.mxu0 0.0
  %370 = vmatprep.subr.mxu0 0.0
  %371 = vmatpush1.msra.mxu0 0.0
  %372 = vmatprep.subr.mxu0 0.0
  %373 = vmatpush1.msra.mxu0 0.0
  %374 = vmatprep.subr.mxu0 0.0
  %375 = vmatpush1.msra.mxu0 0.0
  %376 = vmatprep.subr.mxu0 0.0
  %377 = vmatpush1.msra.mxu0 0.0
  %378 = vmatprep.subr.mxu0 0.0
  %379 = vmatpush1.msra.mxu0 0.0
  %380 = vmatprep.subr.mxu0 0.0
  %381 = vmatpush1.msra.mxu0 0.0
  %382 = vmatprep.subr.mxu0 0.0
  %383 = vmatpush1.msra.mxu0 0.0
  %384 = vmatprep.subr.mxu0 0.0
  %385 = vmatpush1.msra.mxu0 0.0
  %386 = vmatprep.subr.mxu0 0.0
  %387 = vmatpush1.msra.mxu0 0.0
  %388 = vmatprep.subr.mxu0 0.0
  %389 = vmatpush1.msra.mxu0 0.0
  %390 = vmatprep.subr.mxu0 0.0
  %391 = vmatpush1.msra.mxu0 0.0
  %392 = vmatprep.subr.mxu0 0.0
  %393 = vmatpush1.msra.mxu0 0.0
  %394 = vmatprep.subr.mxu0 0.0
  %395 = vmatpush1.msra.mxu0 0.0
  %396 = vmatprep.subr.mxu0 0.0
  %397 = vmatpush1.msra.mxu0 0.0
  %398 = vmatprep.subr.mxu0 0.0
  %399 = vmatpush1.msra.mxu0 0.0
  %400 = vmatprep.subr.mxu0 0.0
  %401 = vmatpush1.msra.mxu0 0.0
  %402 = vmatprep.subr.mxu0 0.0
  %403 = vmatpush1.msra.mxu0 0.0
  %404 = vmatprep.subr.mxu0 0.0
  %405 = vmatpush1.msra.mxu0 0.0
  %406 = vmatprep.mubr.f32.mxu0 0.0
  %407 = vmatmul.mubr.f32.gmra.mrb[0].mxu0 %v340
  %v408 = vpop.f32.mrb[0].mxu0
  %v409 = vadd.f32 0.0, %v408
  %v410 = vpop.f32.mrb[0].mxu0
  %411 = vdwg.mxu0
  %v413 = vrot.slane %v409, 4
  %v415 = vadd.f32 %v116, %v413
  %v416 = vxor.u32 %v415, 2147483648
  %v417 = vmul.f32 %v416, 1.442695
  %v418 = vpow.pop %v417
  %v419 = vadd.f32 %v418, 1.0
  %v420 = vrcp.pop %v419
  %v421 = vmul.f32 1.0, %v420
  %v422 = vtanh.pop %v415
  %v424 = vrot.slane %v324, 6
  %v426 = vmul.f32 %v421, %v424
  %428 = vrot.lane.b32.xlu0 %v422, 64
  %v429 = vpop.permute.xlu0 %428
  %v431 = vmul.f32 %v421, %v429
  %433 = vrot.lane.b32.xlu0 %v431, 32
  %v434 = vpop.permute.xlu0 %433
  %v436 = vadd.f32 %v426, %v434
  %v437 = vtanh.pop %v436
  %439 = vrot.lane.b32.xlu0 %v437, 64
  %v440 = vpop.permute.xlu0 %439
  %v442 = vmul.f32 %v421, %v440
  %444 = vrot.lane.b32.xlu0 %v442, 32
  %v445 = vpop.permute.xlu0 %444
  %vm447 = vcmask 259076
  %448 = vst.msk [vmem:[#allocation2] sm:$0x30] %vm447, %v445
  %v449 = vrot.slane %v442, 4
  %450 = vrot.lane.b32.xlu0 %v449, 32
  %v451 = vpop.permute.xlu0 %450
  %v452 = vsel %vm42, %v451, 0
  %454 = vmatprep.subr.mxu0 0.0
  %455 = vmatpush1.msra.mxu0 %v29
  %456 = vmatprep.subr.mxu0 0.0
  %457 = vmatpush1.msra.mxu0 %v30
  %458 = vmatprep.subr.mxu0 0.0
  %459 = vmatpush1.msra.mxu0 %v31
  %460 = vmatprep.subr.mxu0 0.0
  %461 = vmatpush1.msra.mxu0 %v32
  %462 = vmatprep.subr.mxu0 0.0
  %463 = vmatpush1.msra.mxu0 0.0
  %464 = vmatprep.subr.mxu0 0.0
  %465 = vmatpush1.msra.mxu0 0.0
  %466 = vmatprep.subr.mxu0 0.0
  %467 = vmatpush1.msra.mxu0 0.0
  %468 = vmatprep.subr.mxu0 0.0
  %469 = vmatpush1.msra.mxu0 0.0
  %470 = vmatprep.subr.mxu0 0.0
  %471 = vmatpush1.msra.mxu0 0.0
  %472 = vmatprep.subr.mxu0 0.0
  %473 = vmatpush1.msra.mxu0 0.0
  %474 = vmatprep.subr.mxu0 0.0
  %475 = vmatpush1.msra.mxu0 0.0
  %476 = vmatprep.subr.mxu0 0.0
  %477 = vmatpush1.msra.mxu0 0.0
  %478 = vmatprep.subr.mxu0 0.0
  %479 = vmatpush1.msra.mxu0 0.0
  %480 = vmatprep.subr.mxu0 0.0
  %481 = vmatpush1.msra.mxu0 0.0
  %482 = vmatprep.subr.mxu0 0.0
  %483 = vmatpush1.msra.mxu0 0.0
  %484 = vmatprep.subr.mxu0 0.0
  %485 = vmatpush1.msra.mxu0 0.0
  %486 = vmatprep.subr.mxu0 0.0
  %487 = vmatpush1.msra.mxu0 0.0
  %488 = vmatprep.subr.mxu0 0.0
  %489 = vmatpush1.msra.mxu0 0.0
  %490 = vmatprep.subr.mxu0 0.0
  %491 = vmatpush1.msra.mxu0 0.0
  %492 = vmatprep.subr.mxu0 0.0
  %493 = vmatpush1.msra.mxu0 0.0
  %494 = vmatprep.subr.mxu0 0.0
  %495 = vmatpush1.msra.mxu0 0.0
  %496 = vmatprep.subr.mxu0 0.0
  %497 = vmatpush1.msra.mxu0 0.0
  %498 = vmatprep.subr.mxu0 0.0
  %499 = vmatpush1.msra.mxu0 0.0
  %500 = vmatprep.subr.mxu0 0.0
  %501 = vmatpush1.msra.mxu0 0.0
  %502 = vmatprep.subr.mxu0 0.0
  %503 = vmatpush1.msra.mxu0 0.0
  %504 = vmatprep.subr.mxu0 0.0
  %505 = vmatpush1.msra.mxu0 0.0
  %506 = vmatprep.subr.mxu0 0.0
  %507 = vmatpush1.msra.mxu0 0.0
  %508 = vmatprep.subr.mxu0 0.0
  %509 = vmatpush1.msra.mxu0 0.0
  %510 = vmatprep.subr.mxu0 0.0
  %511 = vmatpush1.msra.mxu0 0.0
  %512 = vmatprep.subr.mxu0 0.0
  %513 = vmatpush1.msra.mxu0 0.0
  %514 = vmatprep.subr.mxu0 0.0
  %515 = vmatpush1.msra.mxu0 0.0
  %516 = vmatprep.subr.mxu0 0.0
  %517 = vmatpush1.msra.mxu0 0.0
  %518 = vmatprep.mubr.f32.mxu0 0.0
  %519 = vmatmul.mubr.f32.gmra.mrb[0].mxu0 %v452
  %v520 = vpop.f32.mrb[0].mxu0
  %v521 = vadd.f32 0.0, %v520
  %v522 = vpop.f32.mrb[0].mxu0
  %523 = vdwg.mxu0
  %v525 = vrot.slane %v521, 2
  %v527 = vadd.f32 %v116, %v525
  %v528 = vxor.u32 %v527, 2147483648
  %v529 = vmul.f32 %v528, 1.442695
  %v530 = vpow.pop %v529
  %v531 = vadd.f32 %v530, 1.0
  %v532 = vrcp.pop %v531
  %v533 = vmul.f32 1.0, %v532
  %v534 = vtanh.pop %v527
  %v536 = vrot.slane %v436, 6
  %v538 = vmul.f32 %v533, %v536
  %540 = vrot.lane.b32.xlu0 %v534, 64
  %v541 = vpop.permute.xlu0 %540
  %v543 = vmul.f32 %v533, %v541
  %545 = vrot.lane.b32.xlu0 %v543, 32
  %v546 = vpop.permute.xlu0 %545
  %v548 = vadd.f32 %v538, %v546
  %v549 = vtanh.pop %v548
  %551 = vrot.lane.b32.xlu0 %v549, 64
  %v552 = vpop.permute.xlu0 %551
  %v554 = vmul.f32 %v533, %v552
  %556 = vrot.lane.b32.xlu0 %v554, 32
  %v557 = vpop.permute.xlu0 %556
  %vm559 = vcmask 261126
  %560 = vst.msk [vmem:[#allocation2] sm:$0xc0] %vm559, %v557
  %v561 = vrot.slane %v554, 6
  %562 = vrot.lane.b32.xlu0 %v561, 32
  %v563 = vpop.permute.xlu0 %562
  %v564 = vsel %vm42, %v563, 0
  %566 = vmatprep.subr.mxu0 0.0
  %567 = vmatpush1.msra.mxu0 %v29
  %568 = vmatprep.subr.mxu0 0.0
  %569 = vmatpush1.msra.mxu0 %v30
  %570 = vmatprep.subr.mxu0 0.0
  %571 = vmatpush1.msra.mxu0 %v31
  %572 = vmatprep.subr.mxu0 0.0
  %573 = vmatpush1.msra.mxu0 %v32
  %574 = vmatprep.subr.mxu0 0.0
  %575 = vmatpush1.msra.mxu0 0.0
  %576 = vmatprep.subr.mxu0 0.0
  %577 = vmatpush1.msra.mxu0 0.0
  %578 = vmatprep.subr.mxu0 0.0
  %579 = vmatpush1.msra.mxu0 0.0
  %580 = vmatprep.subr.mxu0 0.0
  %581 = vmatpush1.msra.mxu0 0.0
  %582 = vmatprep.subr.mxu0 0.0
  %583 = vmatpush1.msra.mxu0 0.0
  %584 = vmatprep.subr.mxu0 0.0
  %585 = vmatpush1.msra.mxu0 0.0
  %586 = vmatprep.subr.mxu0 0.0
  %587 = vmatpush1.msra.mxu0 0.0
  %588 = vmatprep.subr.mxu0 0.0
  %589 = vmatpush1.msra.mxu0 0.0
  %590 = vmatprep.subr.mxu0 0.0
  %591 = vmatpush1.msra.mxu0 0.0
  %592 = vmatprep.subr.mxu0 0.0
  %593 = vmatpush1.msra.mxu0 0.0
  %594 = vmatprep.subr.mxu0 0.0
  %595 = vmatpush1.msra.mxu0 0.0
  %596 = vmatprep.subr.mxu0 0.0
  %597 = vmatpush1.msra.mxu0 0.0
  %598 = vmatprep.subr.mxu0 0.0
  %599 = vmatpush1.msra.mxu0 0.0
  %600 = vmatprep.subr.mxu0 0.0
  %601 = vmatpush1.msra.mxu0 0.0
  %602 = vmatprep.subr.mxu0 0.0
  %603 = vmatpush1.msra.mxu0 0.0
  %604 = vmatprep.subr.mxu0 0.0
  %605 = vmatpush1.msra.mxu0 0.0
  %606 = vmatprep.subr.mxu0 0.0
  %607 = vmatpush1.msra.mxu0 0.0
  %608 = vmatprep.subr.mxu0 0.0
  %609 = vmatpush1.msra.mxu0 0.0
  %610 = vmatprep.subr.mxu0 0.0
  %611 = vmatpush1.msra.mxu0 0.0
  %612 = vmatprep.subr.mxu0 0.0
  %613 = vmatpush1.msra.mxu0 0.0
  %614 = vmatprep.subr.mxu0 0.0
  %615 = vmatpush1.msra.mxu0 0.0
  %616 = vmatprep.subr.mxu0 0.0
  %617 = vmatpush1.msra.mxu0 0.0
  %618 = vmatprep.subr.mxu0 0.0
  %619 = vmatpush1.msra.mxu0 0.0
  %620 = vmatprep.subr.mxu0 0.0
  %621 = vmatpush1.msra.mxu0 0.0
  %622 = vmatprep.subr.mxu0 0.0
  %623 = vmatpush1.msra.mxu0 0.0
  %624 = vmatprep.subr.mxu0 0.0
  %625 = vmatpush1.msra.mxu0 0.0
  %626 = vmatprep.subr.mxu0 0.0
  %627 = vmatpush1.msra.mxu0 0.0
  %628 = vmatprep.subr.mxu0 0.0
  %629 = vmatpush1.msra.mxu0 0.0
  %630 = vmatprep.mubr.f32.mxu0 0.0
  %631 = vmatmul.mubr.f32.gmra.mrb[0].mxu0 %v564
  %v632 = vpop.f32.mrb[0].mxu0
  %v633 = vadd.f32 0.0, %v632
  %v634 = vpop.f32.mrb[0].mxu0
  %635 = vdwg.mxu0
  %v636 = vadd.f32 %v121, %v633
  %v637 = vxor.u32 %v636, 2147483648
  %v638 = vmul.f32 %v637, 1.442695
  %v639 = vpow.pop %v638
  %v640 = vadd.f32 %v639, 1.0
  %v641 = vrcp.pop %v640
  %v642 = vmul.f32 1.0, %v641
  %v643 = vtanh.pop %v636
  %v645 = vrot.slane %v548, 6
  %v647 = vmul.f32 %v642, %v645
  %649 = vrot.lane.b32.xlu0 %v643, 64
  %v650 = vpop.permute.xlu0 %649
  %v652 = vmul.f32 %v642, %v650
  %654 = vrot.lane.b32.xlu0 %v652, 32
  %v655 = vpop.permute.xlu0 %654
  %v657 = vadd.f32 %v647, %v655
  %v658 = vtanh.pop %v657
  %660 = vrot.lane.b32.xlu0 %v658, 64
  %v661 = vpop.permute.xlu0 %660
  %v663 = vmul.f32 %v642, %v661
  %665 = vrot.lane.b32.xlu0 %v663, 32
  %v666 = vpop.permute.xlu0 %665
  %668 = vst.msk [vmem:[#allocation2 + $0x8] sm:$0x3] %vm226, %v666
  %v669 = vsel %vm42, %v666, 0
  %671 = vmatprep.subr.mxu0 0.0
  %672 = vmatpush1.msra.mxu0 %v29
  %673 = vmatprep.subr.mxu0 0.0
  %674 = vmatpush1.msra.mxu0 %v30
  %675 = vmatprep.subr.mxu0 0.0
  %676 = vmatpush1.msra.mxu0 %v31
  %677 = vmatprep.subr.mxu0 0.0
  %678 = vmatpush1.msra.mxu0 %v32
  %679 = vmatprep.subr.mxu0 0.0
  %680 = vmatpush1.msra.mxu0 0.0
  %681 = vmatprep.subr.mxu0 0.0
  %682 = vmatpush1.msra.mxu0 0.0
  %683 = vmatprep.subr.mxu0 0.0
  %684 = vmatpush1.msra.mxu0 0.0
  %685 = vmatprep.subr.mxu0 0.0
  %686 = vmatpush1.msra.mxu0 0.0
  %687 = vmatprep.subr.mxu0 0.0
  %688 = vmatpush1.msra.mxu0 0.0
  %689 = vmatprep.subr.mxu0 0.0
  %690 = vmatpush1.msra.mxu0 0.0
  %691 = vmatprep.subr.mxu0 0.0
  %692 = vmatpush1.msra.mxu0 0.0
  %693 = vmatprep.subr.mxu0 0.0
  %694 = vmatpush1.msra.mxu0 0.0
  %695 = vmatprep.subr.mxu0 0.0
  %696 = vmatpush1.msra.mxu0 0.0
  %697 = vmatprep.subr.mxu0 0.0
  %698 = vmatpush1.msra.mxu0 0.0
  %699 = vmatprep.subr.mxu0 0.0
  %700 = vmatpush1.msra.mxu0 0.0
  %701 = vmatprep.subr.mxu0 0.0
  %702 = vmatpush1.msra.mxu0 0.0
  %703 = vmatprep.subr.mxu0 0.0
  %704 = vmatpush1.msra.mxu0 0.0
  %705 = vmatprep.subr.mxu0 0.0
  %706 = vmatpush1.msra.mxu0 0.0
  %707 = vmatprep.subr.mxu0 0.0
  %708 = vmatpush1.msra.mxu0 0.0
  %709 = vmatprep.subr.mxu0 0.0
  %710 = vmatpush1.msra.mxu0 0.0
  %711 = vmatprep.subr.mxu0 0.0
  %712 = vmatpush1.msra.mxu0 0.0
  %713 = vmatprep.subr.mxu0 0.0
  %714 = vmatpush1.msra.mxu0 0.0
  %715 = vmatprep.subr.mxu0 0.0
  %716 = vmatpush1.msra.mxu0 0.0
  %717 = vmatprep.subr.mxu0 0.0
  %718 = vmatpush1.msra.mxu0 0.0
  %719 = vmatprep.subr.mxu0 0.0
  %720 = vmatpush1.msra.mxu0 0.0
  %721 = vmatprep.subr.mxu0 0.0
  %722 = vmatpush1.msra.mxu0 0.0
  %723 = vmatprep.subr.mxu0 0.0
  %724 = vmatpush1.msra.mxu0 0.0
  %725 = vmatprep.subr.mxu0 0.0
  %726 = vmatpush1.msra.mxu0 0.0
  %727 = vmatprep.subr.mxu0 0.0
  %728 = vmatpush1.msra.mxu0 0.0
  %729 = vmatprep.subr.mxu0 0.0
  %730 = vmatpush1.msra.mxu0 0.0
  %731 = vmatprep.subr.mxu0 0.0
  %732 = vmatpush1.msra.mxu0 0.0
  %733 = vmatprep.subr.mxu0 0.0
  %734 = vmatpush1.msra.mxu0 0.0
  %735 = vmatprep.mubr.f32.mxu0 0.0
  %736 = vmatmul.mubr.f32.gmra.mrb[0].mxu0 %v669
  %v737 = vpop.f32.mrb[0].mxu0
  %v738 = vadd.f32 0.0, %v737
  %v739 = vpop.f32.mrb[0].mxu0
  %740 = vdwg.mxu0
  %v742 = vrot.slane %v738, 6
  %v744 = vadd.f32 %v121, %v742
  %v745 = vxor.u32 %v744, 2147483648
  %v746 = vmul.f32 %v745, 1.442695
  %v747 = vpow.pop %v746
  %v748 = vadd.f32 %v747, 1.0
  %v749 = vrcp.pop %v748
  %v750 = vmul.f32 1.0, %v749
  %v751 = vtanh.pop %v744
  %v753 = vrot.slane %v657, 6
  %v755 = vmul.f32 %v750, %v753
  %757 = vrot.lane.b32.xlu0 %v751, 64
  %v758 = vpop.permute.xlu0 %757
  %v760 = vmul.f32 %v750, %v758
  %762 = vrot.lane.b32.xlu0 %v760, 32
  %v763 = vpop.permute.xlu0 %762
  %v765 = vadd.f32 %v755, %v763
  %v766 = vtanh.pop %v765
  %768 = vrot.lane.b32.xlu0 %v766, 64
  %v769 = vpop.permute.xlu0 %768
  %v771 = vmul.f32 %v750, %v769
  %773 = vrot.lane.b32.xlu0 %v771, 32
  %v774 = vpop.permute.xlu0 %773
  %776 = vst.msk [vmem:[#allocation2 + $0x8] sm:$0xc] %vm335, %v774
  %v777 = vrot.slane %v771, 2
  %778 = vrot.lane.b32.xlu0 %v777, 32
  %v779 = vpop.permute.xlu0 %778
  %v780 = vsel %vm42, %v779, 0
  %782 = vmatprep.subr.mxu0 0.0
  %783 = vmatpush1.msra.mxu0 %v29
  %784 = vmatprep.subr.mxu0 0.0
  %785 = vmatpush1.msra.mxu0 %v30
  %786 = vmatprep.subr.mxu0 0.0
  %787 = vmatpush1.msra.mxu0 %v31
  %788 = vmatprep.subr.mxu0 0.0
  %789 = vmatpush1.msra.mxu0 %v32
  %790 = vmatprep.subr.mxu0 0.0
  %791 = vmatpush1.msra.mxu0 0.0
  %792 = vmatprep.subr.mxu0 0.0
  %793 = vmatpush1.msra.mxu0 0.0
  %794 = vmatprep.subr.mxu0 0.0
  %795 = vmatpush1.msra.mxu0 0.0
  %796 = vmatprep.subr.mxu0 0.0
  %797 = vmatpush1.msra.mxu0 0.0
  %798 = vmatprep.subr.mxu0 0.0
  %799 = vmatpush1.msra.mxu0 0.0
  %800 = vmatprep.subr.mxu0 0.0
  %801 = vmatpush1.msra.mxu0 0.0
  %802 = vmatprep.subr.mxu0 0.0
  %803 = vmatpush1.msra.mxu0 0.0
  %804 = vmatprep.subr.mxu0 0.0
  %805 = vmatpush1.msra.mxu0 0.0
  %806 = vmatprep.subr.mxu0 0.0
  %807 = vmatpush1.msra.mxu0 0.0
  %808 = vmatprep.subr.mxu0 0.0
  %809 = vmatpush1.msra.mxu0 0.0
  %810 = vmatprep.subr.mxu0 0.0
  %811 = vmatpush1.msra.mxu0 0.0
  %812 = vmatprep.subr.mxu0 0.0
  %813 = vmatpush1.msra.mxu0 0.0
  %814 = vmatprep.subr.mxu0 0.0
  %815 = vmatpush1.msra.mxu0 0.0
  %816 = vmatprep.subr.mxu0 0.0
  %817 = vmatpush1.msra.mxu0 0.0
  %818 = vmatprep.subr.mxu0 0.0
  %819 = vmatpush1.msra.mxu0 0.0
  %820 = vmatprep.subr.mxu0 0.0
  %821 = vmatpush1.msra.mxu0 0.0
  %822 = vmatprep.subr.mxu0 0.0
  %823 = vmatpush1.msra.mxu0 0.0
  %824 = vmatprep.subr.mxu0 0.0
  %825 = vmatpush1.msra.mxu0 0.0
  %826 = vmatprep.subr.mxu0 0.0
  %827 = vmatpush1.msra.mxu0 0.0
  %828 = vmatprep.subr.mxu0 0.0
  %829 = vmatpush1.msra.mxu0 0.0
  %830 = vmatprep.subr.mxu0 0.0
  %831 = vmatpush1.msra.mxu0 0.0
  %832 = vmatprep.subr.mxu0 0.0
  %833 = vmatpush1.msra.mxu0 0.0
  %834 = vmatprep.subr.mxu0 0.0
  %835 = vmatpush1.msra.mxu0 0.0
  %836 = vmatprep.subr.mxu0 0.0
  %837 = vmatpush1.msra.mxu0 0.0
  %838 = vmatprep.subr.mxu0 0.0
  %839 = vmatpush1.msra.mxu0 0.0
  %840 = vmatprep.subr.mxu0 0.0
  %841 = vmatpush1.msra.mxu0 0.0
  %842 = vmatprep.subr.mxu0 0.0
  %843 = vmatpush1.msra.mxu0 0.0
  %844 = vmatprep.subr.mxu0 0.0
  %845 = vmatpush1.msra.mxu0 0.0
  %846 = vmatprep.mubr.f32.mxu0 0.0
  %847 = vmatmul.mubr.f32.gmra.mrb[0].mxu0 %v780
  %v848 = vpop.f32.mrb[0].mxu0
  %v849 = vadd.f32 0.0, %v848
  %v850 = vpop.f32.mrb[0].mxu0
  %851 = vdwg.mxu0
  %v853 = vrot.slane %v849, 4
  %v855 = vadd.f32 %v121, %v853
  %v856 = vxor.u32 %v855, 2147483648
  %v857 = vmul.f32 %v856, 1.442695
  %v858 = vpow.pop %v857
  %v859 = vadd.f32 %v858, 1.0
  %v860 = vrcp.pop %v859
  %v861 = vmul.f32 1.0, %v860
  %v862 = vtanh.pop %v855
  %v864 = vrot.slane %v765, 6
  %v866 = vmul.f32 %v861, %v864
  %868 = vrot.lane.b32.xlu0 %v862, 64
  %v869 = vpop.permute.xlu0 %868
  %v871 = vmul.f32 %v861, %v869
  %873 = vrot.lane.b32.xlu0 %v871, 32
  %v874 = vpop.permute.xlu0 %873
  %v876 = vadd.f32 %v866, %v874
  %v877 = vtanh.pop %v876
  %879 = vrot.lane.b32.xlu0 %v877, 64
  %v880 = vpop.permute.xlu0 %879
  %v882 = vmul.f32 %v861, %v880
  %884 = vrot.lane.b32.xlu0 %v882, 32
  %v885 = vpop.permute.xlu0 %884
  %887 = vst.msk [vmem:[#allocation2 + $0x8] sm:$0x30] %vm447, %v885
  %v888 = vrot.slane %v882, 4
  %889 = vrot.lane.b32.xlu0 %v888, 32
  %v890 = vpop.permute.xlu0 %889
  %v891 = vsel %vm42, %v890, 0
  %893 = vmatprep.subr.mxu0 0.0
  %894 = vmatpush1.msra.mxu0 %v29
  %895 = vmatprep.subr.mxu0 0.0
  %896 = vmatpush1.msra.mxu0 %v30
  %897 = vmatprep.subr.mxu0 0.0
  %898 = vmatpush1.msra.mxu0 %v31
  %899 = vmatprep.subr.mxu0 0.0
  %900 = vmatpush1.msra.mxu0 %v32
  %901 = vmatprep.subr.mxu0 0.0
  %902 = vmatpush1.msra.mxu0 0.0
  %903 = vmatprep.subr.mxu0 0.0
  %904 = vmatpush1.msra.mxu0 0.0
  %905 = vmatprep.subr.mxu0 0.0
  %906 = vmatpush1.msra.mxu0 0.0
  %907 = vmatprep.subr.mxu0 0.0
  %908 = vmatpush1.msra.mxu0 0.0
  %909 = vmatprep.subr.mxu0 0.0
  %910 = vmatpush1.msra.mxu0 0.0
  %911 = vmatprep.subr.mxu0 0.0
  %912 = vmatpush1.msra.mxu0 0.0
  %913 = vmatprep.subr.mxu0 0.0
  %914 = vmatpush1.msra.mxu0 0.0
  %915 = vmatprep.subr.mxu0 0.0
  %916 = vmatpush1.msra.mxu0 0.0
  %917 = vmatprep.subr.mxu0 0.0
  %918 = vmatpush1.msra.mxu0 0.0
  %919 = vmatprep.subr.mxu0 0.0
  %920 = vmatpush1.msra.mxu0 0.0
  %921 = vmatprep.subr.mxu0 0.0
  %922 = vmatpush1.msra.mxu0 0.0
  %923 = vmatprep.subr.mxu0 0.0
  %924 = vmatpush1.msra.mxu0 0.0
  %925 = vmatprep.subr.mxu0 0.0
  %926 = vmatpush1.msra.mxu0 0.0
  %927 = vmatprep.subr.mxu0 0.0
  %928 = vmatpush1.msra.mxu0 0.0
  %929 = vmatprep.subr.mxu0 0.0
  %930 = vmatpush1.msra.mxu0 0.0
  %931 = vmatprep.subr.mxu0 0.0
  %932 = vmatpush1.msra.mxu0 0.0
  %933 = vmatprep.subr.mxu0 0.0
  %934 = vmatpush1.msra.mxu0 0.0
  %935 = vmatprep.subr.mxu0 0.0
  %936 = vmatpush1.msra.mxu0 0.0
  %937 = vmatprep.subr.mxu0 0.0
  %938 = vmatpush1.msra.mxu0 0.0
  %939 = vmatprep.subr.mxu0 0.0
  %940 = vmatpush1.msra.mxu0 0.0
  %941 = vmatprep.subr.mxu0 0.0
  %942 = vmatpush1.msra.mxu0 0.0
  %943 = vmatprep.subr.mxu0 0.0
  %944 = vmatpush1.msra.mxu0 0.0
  %945 = vmatprep.subr.mxu0 0.0
  %946 = vmatpush1.msra.mxu0 0.0
  %947 = vmatprep.subr.mxu0 0.0
  %948 = vmatpush1.msra.mxu0 0.0
  %949 = vmatprep.subr.mxu0 0.0
  %950 = vmatpush1.msra.mxu0 0.0
  %951 = vmatprep.subr.mxu0 0.0
  %952 = vmatpush1.msra.mxu0 0.0
  %953 = vmatprep.subr.mxu0 0.0
  %954 = vmatpush1.msra.mxu0 0.0
  %955 = vmatprep.subr.mxu0 0.0
  %956 = vmatpush1.msra.mxu0 0.0
  %957 = vmatprep.mubr.f32.mxu0 0.0
  %958 = vmatmul.mubr.f32.gmra.mrb[0].mxu0 %v891
  %v959 = vpop.f32.mrb[0].mxu0
  %v960 = vadd.f32 0.0, %v959
  %v961 = vpop.f32.mrb[0].mxu0
  %962 = vdwg.mxu0
  %v964 = vrot.slane %v960, 2
  %v966 = vadd.f32 %v121, %v964
  %v967 = vxor.u32 %v966, 2147483648
  %v968 = vmul.f32 %v967, 1.442695
  %v969 = vpow.pop %v968
  %v970 = vadd.f32 %v969, 1.0
  %v971 = vrcp.pop %v970
  %v972 = vmul.f32 1.0, %v971
  %v973 = vtanh.pop %v966
  %v975 = vrot.slane %v876, 6
  %v977 = vmul.f32 %v972, %v975
  %979 = vrot.lane.b32.xlu0 %v973, 64
  %v980 = vpop.permute.xlu0 %979
  %v982 = vmul.f32 %v972, %v980
  %984 = vrot.lane.b32.xlu0 %v982, 32
  %v985 = vpop.permute.xlu0 %984
  %v987 = vadd.f32 %v977, %v985
  %v988 = vtanh.pop %v987
  %990 = vrot.lane.b32.xlu0 %v988, 64
  %v991 = vpop.permute.xlu0 %990
  %v993 = vmul.f32 %v972, %v991
  %995 = vrot.lane.b32.xlu0 %v993, 32
  %v996 = vpop.permute.xlu0 %995
  %998 = vst.msk [vmem:[#allocation2 + $0x8] sm:$0xc0] %vm559, %v996
  %s999 = scalar_lea.vmem %s1, 32
  %v1000 = vld [vmem:[%s999] sm:$0xff]
  %v1001 = vld [vmem:[%s999 + $0x8] sm:$0xff]
  %v1002 = vld [vmem:[%s999 + $0x10] sm:$0xff]
  %v1003 = vld [vmem:[%s999 + $0x18] sm:$0xff]
  %s1004 = scalar_lea.vmem %s2, 32
  %v1005 = vld [vmem:[%s1004] sm:$0xff]
  %v1006 = vld [vmem:[%s1004 + $0x8] sm:$0xff]
  %v1007 = vld [vmem:[%s1004 + $0x10] sm:$0xff]
  %v1008 = vld [vmem:[%s1004 + $0x18] sm:$0xff]
  %s1009 = scalar_lea.vmem %s3, 1
  %v1010 = vld [vmem:[%s1009] sm:$0x1]
  %v1011 = vld [vmem:[#allocation2] sm:$0xff]
  %v1012 = vld [vmem:[#allocation2 + $0x8] sm:$0xff]
  %v1014 = vlaneseq
  %v1015 = vshrl.u32 %v1014, 7
  %v1016 = vsub.s32 0, %v1015
  %v1017 = vrot.slane %v1010, %v1016
  %v1020 = vsel %vm42, %v1011, 0
  %v1023 = vsel %vm42, %v1012, 0
  %1025 = vmatprep.subr.mxu0 0.0
  %1026 = vmatpush1.msra.mxu0 %v1000
  %1027 = vmatprep.subr.mxu0 0.0
  %1028 = vmatpush1.msra.mxu0 %v1001
  %1029 = vmatprep.subr.mxu0 0.0
  %1030 = vmatpush1.msra.mxu0 %v1002
  %1031 = vmatprep.subr.mxu0 0.0
  %1032 = vmatpush1.msra.mxu0 %v1003
  %1033 = vmatprep.subr.mxu0 0.0
  %1034 = vmatpush1.msra.mxu0 0.0
  %1035 = vmatprep.subr.mxu0 0.0
  %1036 = vmatpush1.msra.mxu0 0.0
  %1037 = vmatprep.subr.mxu0 0.0
  %1038 = vmatpush1.msra.mxu0 0.0
  %1039 = vmatprep.subr.mxu0 0.0
  %1040 = vmatpush1.msra.mxu0 0.0
  %1041 = vmatprep.subr.mxu0 0.0
  %1042 = vmatpush1.msra.mxu0 0.0
  %1043 = vmatprep.subr.mxu0 0.0
  %1044 = vmatpush1.msra.mxu0 0.0
  %1045 = vmatprep.subr.mxu0 0.0
  %1046 = vmatpush1.msra.mxu0 0.0
  %1047 = vmatprep.subr.mxu0 0.0
  %1048 = vmatpush1.msra.mxu0 0.0
  %1049 = vmatprep.subr.mxu0 0.0
  %1050 = vmatpush1.msra.mxu0 0.0
  %1051 = vmatprep.subr.mxu0 0.0
  %1052 = vmatpush1.msra.mxu0 0.0
  %1053 = vmatprep.subr.mxu0 0.0
  %1054 = vmatpush1.msra.mxu0 0.0
  %1055 = vmatprep.subr.mxu0 0.0
  %1056 = vmatpush1.msra.mxu0 0.0
  %1057 = vmatprep.subr.mxu0 0.0
  %1058 = vmatpush1.msra.mxu0 0.0
  %1059 = vmatprep.subr.mxu0 0.0
  %1060 = vmatpush1.msra.mxu0 0.0
  %1061 = vmatprep.subr.mxu0 0.0
  %1062 = vmatpush1.msra.mxu0 0.0
  %1063 = vmatprep.subr.mxu0 0.0
  %1064 = vmatpush1.msra.mxu0 0.0
  %1065 = vmatprep.subr.mxu0 0.0
  %1066 = vmatpush1.msra.mxu0 0.0
  %1067 = vmatprep.subr.mxu0 0.0
  %1068 = vmatpush1.msra.mxu0 0.0
  %1069 = vmatprep.subr.mxu0 0.0
  %1070 = vmatpush1.msra.mxu0 0.0
  %1071 = vmatprep.subr.mxu0 0.0
  %1072 = vmatpush1.msra.mxu0 0.0
  %1073 = vmatprep.subr.mxu0 0.0
  %1074 = vmatpush1.msra.mxu0 0.0
  %1075 = vmatprep.subr.mxu0 0.0
  %1076 = vmatpush1.msra.mxu0 0.0
  %1077 = vmatprep.subr.mxu0 0.0
  %1078 = vmatpush1.msra.mxu0 0.0
  %1079 = vmatprep.subr.mxu0 0.0
  %1080 = vmatpush1.msra.mxu0 0.0
  %1081 = vmatprep.subr.mxu0 0.0
  %1082 = vmatpush1.msra.mxu0 0.0
  %1083 = vmatprep.subr.mxu0 0.0
  %1084 = vmatpush1.msra.mxu0 0.0
  %1085 = vmatprep.subr.mxu0 0.0
  %1086 = vmatpush1.msra.mxu0 0.0
  %1087 = vmatprep.subr.mxu0 0.0
  %1088 = vmatpush1.msra.mxu0 0.0
  %1089 = vmatprep.mubr.f32.mxu0 0.0
  %1090 = vmatmul.mubr.f32.gmra.mrb[0].mxu0 %v1020
  %v1091 = vpop.f32.mrb[0].mxu0
  %v1092 = vadd.f32 %v1017, %v1091
  %v1093 = vpop.f32.mrb[0].mxu0
  %1094 = vmatprep.mubr.f32.mxu0 0.0
  %1095 = vmatmul.mubr.f32.gmra.mrb[0].mxu0 %v1023
  %v1096 = vpop.f32.mrb[0].mxu0
  %v1097 = vadd.f32 %v1017, %v1096
  %v1098 = vpop.f32.mrb[0].mxu0
  %1099 = vdwg.mxu0
  %1100 = vmatprep.subr.mxu0 0.0
  %1101 = vmatpush1.msra.mxu0 %v1005
  %1102 = vmatprep.subr.mxu0 0.0
  %1103 = vmatpush1.msra.mxu0 %v1006
  %1104 = vmatprep.subr.mxu0 0.0
  %1105 = vmatpush1.msra.mxu0 %v1007
  %1106 = vmatprep.subr.mxu0 0.0
  %1107 = vmatpush1.msra.mxu0 %v1008
  %1108 = vmatprep.subr.mxu0 0.0
  %1109 = vmatpush1.msra.mxu0 0.0
  %1110 = vmatprep.subr.mxu0 0.0
  %1111 = vmatpush1.msra.mxu0 0.0
  %1112 = vmatprep.subr.mxu0 0.0
  %1113 = vmatpush1.msra.mxu0 0.0
  %1114 = vmatprep.subr.mxu0 0.0
  %1115 = vmatpush1.msra.mxu0 0.0
  %1116 = vmatprep.subr.mxu0 0.0
  %1117 = vmatpush1.msra.mxu0 0.0
  %1118 = vmatprep.subr.mxu0 0.0
  %1119 = vmatpush1.msra.mxu0 0.0
  %1120 = vmatprep.subr.mxu0 0.0
  %1121 = vmatpush1.msra.mxu0 0.0
  %1122 = vmatprep.subr.mxu0 0.0
  %1123 = vmatpush1.msra.mxu0 0.0
  %1124 = vmatprep.subr.mxu0 0.0
  %1125 = vmatpush1.msra.mxu0 0.0
  %1126 = vmatprep.subr.mxu0 0.0
  %1127 = vmatpush1.msra.mxu0 0.0
  %1128 = vmatprep.subr.mxu0 0.0
  %1129 = vmatpush1.msra.mxu0 0.0
  %1130 = vmatprep.subr.mxu0 0.0
  %1131 = vmatpush1.msra.mxu0 0.0
  %1132 = vmatprep.subr.mxu0 0.0
  %1133 = vmatpush1.msra.mxu0 0.0
  %1134 = vmatprep.subr.mxu0 0.0
  %1135 = vmatpush1.msra.mxu0 0.0
  %1136 = vmatprep.subr.mxu0 0.0
  %1137 = vmatpush1.msra.mxu0 0.0
  %1138 = vmatprep.subr.mxu0 0.0
  %1139 = vmatpush1.msra.mxu0 0.0
  %1140 = vmatprep.subr.mxu0 0.0
  %1141 = vmatpush1.msra.mxu0 0.0
  %1142 = vmatprep.subr.mxu0 0.0
  %1143 = vmatpush1.msra.mxu0 0.0
  %1144 = vmatprep.subr.mxu0 0.0
  %1145 = vmatpush1.msra.mxu0 0.0
  %1146 = vmatprep.subr.mxu0 0.0
  %1147 = vmatpush1.msra.mxu0 0.0
  %1148 = vmatprep.subr.mxu0 0.0
  %1149 = vmatpush1.msra.mxu0 0.0
  %1150 = vmatprep.subr.mxu0 0.0
  %1151 = vmatpush1.msra.mxu0 0.0
  %1152 = vmatprep.subr.mxu0 0.0
  %1153 = vmatpush1.msra.mxu0 0.0
  %1154 = vmatprep.subr.mxu0 0.0
  %1155 = vmatpush1.msra.mxu0 0.0
  %1156 = vmatprep.subr.mxu0 0.0
  %1157 = vmatpush1.msra.mxu0 0.0
  %1158 = vmatprep.subr.mxu0 0.0
  %1159 = vmatpush1.msra.mxu0 0.0
  %1160 = vmatprep.subr.mxu0 0.0
  %1161 = vmatpush1.msra.mxu0 0.0
  %1162 = vmatprep.subr.mxu0 0.0
  %1163 = vmatpush1.msra.mxu0 0.0
  %1164 = vmatprep.mubr.f32.mxu0 0.0
  %1165 = vmatmul.mubr.f32.gmra.mrb[0].mxu0 %v125
  %v1166 = vpop.f32.mrb[0].mxu0
  %v1167 = vadd.f32 0.0, %v1166
  %v1168 = vpop.f32.mrb[0].mxu0
  %1169 = vdwg.mxu0
  %v1170 = vadd.f32 %v1092, %v1167
  %v1171 = vxor.u32 %v1170, 2147483648
  %v1172 = vmul.f32 %v1171, 1.442695
  %v1173 = vpow.pop %v1172
  %v1174 = vadd.f32 %v1173, 1.0
  %v1175 = vrcp.pop %v1174
  %v1176 = vmul.f32 1.0, %v1175
  %v1177 = vtanh.pop %v1170
  %v1178 = vmul.f32 %v1176, 0.0
  %1180 = vrot.lane.b32.xlu0 %v1177, 64
  %v1181 = vpop.permute.xlu0 %1180
  %v1183 = vmul.f32 %v1176, %v1181
  %1185 = vrot.lane.b32.xlu0 %v1183, 32
  %v1186 = vpop.permute.xlu0 %1185
  %v1188 = vadd.f32 %v1178, %v1186
  %v1189 = vtanh.pop %v1188
  %1191 = vrot.lane.b32.xlu0 %v1189, 64
  %v1192 = vpop.permute.xlu0 %1191
  %v1194 = vmul.f32 %v1176, %v1192
  %1196 = vrot.lane.b32.xlu0 %v1194, 32
  %v1197 = vpop.permute.xlu0 %1196
  %1199 = vst.msk [vmem:[#allocation2] sm:$0x3] %vm226, %v1197
  %v1200 = vsel %vm42, %v1197, 0
  %1202 = vmatprep.subr.mxu0 0.0
  %1203 = vmatpush1.msra.mxu0 %v1005
  %1204 = vmatprep.subr.mxu0 0.0
  %1205 = vmatpush1.msra.mxu0 %v1006
  %1206 = vmatprep.subr.mxu0 0.0
  %1207 = vmatpush1.msra.mxu0 %v1007
  %1208 = vmatprep.subr.mxu0 0.0
  %1209 = vmatpush1.msra.mxu0 %v1008
  %1210 = vmatprep.subr.mxu0 0.0
  %1211 = vmatpush1.msra.mxu0 0.0
  %1212 = vmatprep.subr.mxu0 0.0
  %1213 = vmatpush1.msra.mxu0 0.0
  %1214 = vmatprep.subr.mxu0 0.0
  %1215 = vmatpush1.msra.mxu0 0.0
  %1216 = vmatprep.subr.mxu0 0.0
  %1217 = vmatpush1.msra.mxu0 0.0
  %1218 = vmatprep.subr.mxu0 0.0
  %1219 = vmatpush1.msra.mxu0 0.0
  %1220 = vmatprep.subr.mxu0 0.0
  %1221 = vmatpush1.msra.mxu0 0.0
  %1222 = vmatprep.subr.mxu0 0.0
  %1223 = vmatpush1.msra.mxu0 0.0
  %1224 = vmatprep.subr.mxu0 0.0
  %1225 = vmatpush1.msra.mxu0 0.0
  %1226 = vmatprep.subr.mxu0 0.0
  %1227 = vmatpush1.msra.mxu0 0.0
  %1228 = vmatprep.subr.mxu0 0.0
  %1229 = vmatpush1.msra.mxu0 0.0
  %1230 = vmatprep.subr.mxu0 0.0
  %1231 = vmatpush1.msra.mxu0 0.0
  %1232 = vmatprep.subr.mxu0 0.0
  %1233 = vmatpush1.msra.mxu0 0.0
  %1234 = vmatprep.subr.mxu0 0.0
  %1235 = vmatpush1.msra.mxu0 0.0
  %1236 = vmatprep.subr.mxu0 0.0
  %1237 = vmatpush1.msra.mxu0 0.0
  %1238 = vmatprep.subr.mxu0 0.0
  %1239 = vmatpush1.msra.mxu0 0.0
  %1240 = vmatprep.subr.mxu0 0.0
  %1241 = vmatpush1.msra.mxu0 0.0
  %1242 = vmatprep.subr.mxu0 0.0
  %1243 = vmatpush1.msra.mxu0 0.0
  %1244 = vmatprep.subr.mxu0 0.0
  %1245 = vmatpush1.msra.mxu0 0.0
  %1246 = vmatprep.subr.mxu0 0.0
  %1247 = vmatpush1.msra.mxu0 0.0
  %1248 = vmatprep.subr.mxu0 0.0
  %1249 = vmatpush1.msra.mxu0 0.0
  %1250 = vmatprep.subr.mxu0 0.0
  %1251 = vmatpush1.msra.mxu0 0.0
  %1252 = vmatprep.subr.mxu0 0.0
  %1253 = vmatpush1.msra.mxu0 0.0
  %1254 = vmatprep.subr.mxu0 0.0
  %1255 = vmatpush1.msra.mxu0 0.0
  %1256 = vmatprep.subr.mxu0 0.0
  %1257 = vmatpush1.msra.mxu0 0.0
  %1258 = vmatprep.subr.mxu0 0.0
  %1259 = vmatpush1.msra.mxu0 0.0
  %1260 = vmatprep.subr.mxu0 0.0
  %1261 = vmatpush1.msra.mxu0 0.0
  %1262 = vmatprep.subr.mxu0 0.0
  %1263 = vmatpush1.msra.mxu0 0.0
  %1264 = vmatprep.subr.mxu0 0.0
  %1265 = vmatpush1.msra.mxu0 0.0
  %1266 = vmatprep.mubr.f32.mxu0 0.0
  %1267 = vmatmul.mubr.f32.gmra.mrb[0].mxu0 %v1200
  %v1268 = vpop.f32.mrb[0].mxu0
  %v1269 = vadd.f32 0.0, %v1268
  %v1270 = vpop.f32.mrb[0].mxu0
  %1271 = vdwg.mxu0
  %v1273 = vrot.slane %v1269, 6
  %v1275 = vadd.f32 %v1092, %v1273
  %v1276 = vxor.u32 %v1275, 2147483648
  %v1277 = vmul.f32 %v1276, 1.442695
  %v1278 = vpow.pop %v1277
  %v1279 = vadd.f32 %v1278, 1.0
  %v1280 = vrcp.pop %v1279
  %v1281 = vmul.f32 1.0, %v1280
  %v1282 = vtanh.pop %v1275
  %v1284 = vrot.slane %v1188, 6
  %v1286 = vmul.f32 %v1281, %v1284
  %1288 = vrot.lane.b32.xlu0 %v1282, 64
  %v1289 = vpop.permute.xlu0 %1288
  %v1291 = vmul.f32 %v1281, %v1289
  %1293 = vrot.lane.b32.xlu0 %v1291, 32
  %v1294 = vpop.permute.xlu0 %1293
  %v1296 = vadd.f32 %v1286, %v1294
  %v1297 = vtanh.pop %v1296
  %1299 = vrot.lane.b32.xlu0 %v1297, 64
  %v1300 = vpop.permute.xlu0 %1299
  %v1302 = vmul.f32 %v1281, %v1300
  %1304 = vrot.lane.b32.xlu0 %v1302, 32
  %v1305 = vpop.permute.xlu0 %1304
  %1307 = vst.msk [vmem:[#allocation2] sm:$0xc] %vm335, %v1305
  %v1308 = vrot.slane %v1302, 2
  %1309 = vrot.lane.b32.xlu0 %v1308, 32
  %v1310 = vpop.permute.xlu0 %1309
  %v1311 = vsel %vm42, %v1310, 0
  %1313 = vmatprep.subr.mxu0 0.0
  %1314 = vmatpush1.msra.mxu0 %v1005
  %1315 = vmatprep.subr.mxu0 0.0
  %1316 = vmatpush1.msra.mxu0 %v1006
  %1317 = vmatprep.subr.mxu0 0.0
  %1318 = vmatpush1.msra.mxu0 %v1007
  %1319 = vmatprep.subr.mxu0 0.0
  %1320 = vmatpush1.msra.mxu0 %v1008
  %1321 = vmatprep.subr.mxu0 0.0
  %1322 = vmatpush1.msra.mxu0 0.0
  %1323 = vmatprep.subr.mxu0 0.0
  %1324 = vmatpush1.msra.mxu0 0.0
  %1325 = vmatprep.subr.mxu0 0.0
  %1326 = vmatpush1.msra.mxu0 0.0
  %1327 = vmatprep.subr.mxu0 0.0
  %1328 = vmatpush1.msra.mxu0 0.0
  %1329 = vmatprep.subr.mxu0 0.0
  %1330 = vmatpush1.msra.mxu0 0.0
  %1331 = vmatprep.subr.mxu0 0.0
  %1332 = vmatpush1.msra.mxu0 0.0
  %1333 = vmatprep.subr.mxu0 0.0
  %1334 = vmatpush1.msra.mxu0 0.0
  %1335 = vmatprep.subr.mxu0 0.0
  %1336 = vmatpush1.msra.mxu0 0.0
  %1337 = vmatprep.subr.mxu0 0.0
  %1338 = vmatpush1.msra.mxu0 0.0
  %1339 = vmatprep.subr.mxu0 0.0
  %1340 = vmatpush1.msra.mxu0 0.0
  %1341 = vmatprep.subr.mxu0 0.0
  %1342 = vmatpush1.msra.mxu0 0.0
  %1343 = vmatprep.subr.mxu0 0.0
  %1344 = vmatpush1.msra.mxu0 0.0
  %1345 = vmatprep.subr.mxu0 0.0
  %1346 = vmatpush1.msra.mxu0 0.0
  %1347 = vmatprep.subr.mxu0 0.0
  %1348 = vmatpush1.msra.mxu0 0.0
  %1349 = vmatprep.subr.mxu0 0.0
  %1350 = vmatpush1.msra.mxu0 0.0
  %1351 = vmatprep.subr.mxu0 0.0
  %1352 = vmatpush1.msra.mxu0 0.0
  %1353 = vmatprep.subr.mxu0 0.0
  %1354 = vmatpush1.msra.mxu0 0.0
  %1355 = vmatprep.subr.mxu0 0.0
  %1356 = vmatpush1.msra.mxu0 0.0
  %1357 = vmatprep.subr.mxu0 0.0
  %1358 = vmatpush1.msra.mxu0 0.0
  %1359 = vmatprep.subr.mxu0 0.0
  %1360 = vmatpush1.msra.mxu0 0.0
  %1361 = vmatprep.subr.mxu0 0.0
  %1362 = vmatpush1.msra.mxu0 0.0
  %1363 = vmatprep.subr.mxu0 0.0
  %1364 = vmatpush1.msra.mxu0 0.0
  %1365 = vmatprep.subr.mxu0 0.0
  %1366 = vmatpush1.msra.mxu0 0.0
  %1367 = vmatprep.subr.mxu0 0.0
  %1368 = vmatpush1.msra.mxu0 0.0
  %1369 = vmatprep.subr.mxu0 0.0
  %1370 = vmatpush1.msra.mxu0 0.0
  %1371 = vmatprep.subr.mxu0 0.0
  %1372 = vmatpush1.msra.mxu0 0.0
  %1373 = vmatprep.subr.mxu0 0.0
  %1374 = vmatpush1.msra.mxu0 0.0
  %1375 = vmatprep.subr.mxu0 0.0
  %1376 = vmatpush1.msra.mxu0 0.0
  %1377 = vmatprep.mubr.f32.mxu0 0.0
  %1378 = vmatmul.mubr.f32.gmra.mrb[0].mxu0 %v1311
  %v1379 = vpop.f32.mrb[0].mxu0
  %v1380 = vadd.f32 0.0, %v1379
  %v1381 = vpop.f32.mrb[0].mxu0
  %1382 = vdwg.mxu0
  %v1384 = vrot.slane %v1380, 4
  %v1386 = vadd.f32 %v1092, %v1384
  %v1387 = vxor.u32 %v1386, 2147483648
  %v1388 = vmul.f32 %v1387, 1.442695
  %v1389 = vpow.pop %v1388
  %v1390 = vadd.f32 %v1389, 1.0
  %v1391 = vrcp.pop %v1390
  %v1392 = vmul.f32 1.0, %v1391
  %v1393 = vtanh.pop %v1386
  %v1395 = vrot.slane %v1296, 6
  %v1397 = vmul.f32 %v1392, %v1395
  %1399 = vrot.lane.b32.xlu0 %v1393, 64
  %v1400 = vpop.permute.xlu0 %1399
  %v1402 = vmul.f32 %v1392, %v1400
  %1404 = vrot.lane.b32.xlu0 %v1402, 32
  %v1405 = vpop.permute.xlu0 %1404
  %v1407 = vadd.f32 %v1397, %v1405
  %v1408 = vtanh.pop %v1407
  %1410 = vrot.lane.b32.xlu0 %v1408, 64
  %v1411 = vpop.permute.xlu0 %1410
  %v1413 = vmul.f32 %v1392, %v1411
  %1415 = vrot.lane.b32.xlu0 %v1413, 32
  %v1416 = vpop.permute.xlu0 %1415
  %1418 = vst.msk [vmem:[#allocation2] sm:$0x30] %vm447, %v1416
  %v1419 = vrot.slane %v1413, 4
  %1420 = vrot.lane.b32.xlu0 %v1419, 32
  %v1421 = vpop.permute.xlu0 %1420
  %v1422 = vsel %vm42, %v1421, 0
  %1424 = vmatprep.subr.mxu0 0.0
  %1425 = vmatpush1.msra.mxu0 %v1005
  %1426 = vmatprep.subr.mxu0 0.0
  %1427 = vmatpush1.msra.mxu0 %v1006
  %1428 = vmatprep.subr.mxu0 0.0
  %1429 = vmatpush1.msra.mxu0 %v1007
  %1430 = vmatprep.subr.mxu0 0.0
  %1431 = vmatpush1.msra.mxu0 %v1008
  %1432 = vmatprep.subr.mxu0 0.0
  %1433 = vmatpush1.msra.mxu0 0.0
  %1434 = vmatprep.subr.mxu0 0.0
  %1435 = vmatpush1.msra.mxu0 0.0
  %1436 = vmatprep.subr.mxu0 0.0
  %1437 = vmatpush1.msra.mxu0 0.0
  %1438 = vmatprep.subr.mxu0 0.0
  %1439 = vmatpush1.msra.mxu0 0.0
  %1440 = vmatprep.subr.mxu0 0.0
  %1441 = vmatpush1.msra.mxu0 0.0
  %1442 = vmatprep.subr.mxu0 0.0
  %1443 = vmatpush1.msra.mxu0 0.0
  %1444 = vmatprep.subr.mxu0 0.0
  %1445 = vmatpush1.msra.mxu0 0.0
  %1446 = vmatprep.subr.mxu0 0.0
  %1447 = vmatpush1.msra.mxu0 0.0
  %1448 = vmatprep.subr.mxu0 0.0
  %1449 = vmatpush1.msra.mxu0 0.0
  %1450 = vmatprep.subr.mxu0 0.0
  %1451 = vmatpush1.msra.mxu0 0.0
  %1452 = vmatprep.subr.mxu0 0.0
  %1453 = vmatpush1.msra.mxu0 0.0
  %1454 = vmatprep.subr.mxu0 0.0
  %1455 = vmatpush1.msra.mxu0 0.0
  %1456 = vmatprep.subr.mxu0 0.0
  %1457 = vmatpush1.msra.mxu0 0.0
  %1458 = vmatprep.subr.mxu0 0.0
  %1459 = vmatpush1.msra.mxu0 0.0
  %1460 = vmatprep.subr.mxu0 0.0
  %1461 = vmatpush1.msra.mxu0 0.0
  %1462 = vmatprep.subr.mxu0 0.0
  %1463 = vmatpush1.msra.mxu0 0.0
  %1464 = vmatprep.subr.mxu0 0.0
  %1465 = vmatpush1.msra.mxu0 0.0
  %1466 = vmatprep.subr.mxu0 0.0
  %1467 = vmatpush1.msra.mxu0 0.0
  %1468 = vmatprep.subr.mxu0 0.0
  %1469 = vmatpush1.msra.mxu0 0.0
  %1470 = vmatprep.subr.mxu0 0.0
  %1471 = vmatpush1.msra.mxu0 0.0
  %1472 = vmatprep.subr.mxu0 0.0
  %1473 = vmatpush1.msra.mxu0 0.0
  %1474 = vmatprep.subr.mxu0 0.0
  %1475 = vmatpush1.msra.mxu0 0.0
  %1476 = vmatprep.subr.mxu0 0.0
  %1477 = vmatpush1.msra.mxu0 0.0
  %1478 = vmatprep.subr.mxu0 0.0
  %1479 = vmatpush1.msra.mxu0 0.0
  %1480 = vmatprep.subr.mxu0 0.0
  %1481 = vmatpush1.msra.mxu0 0.0
  %1482 = vmatprep.subr.mxu0 0.0
  %1483 = vmatpush1.msra.mxu0 0.0
  %1484 = vmatprep.subr.mxu0 0.0
  %1485 = vmatpush1.msra.mxu0 0.0
  %1486 = vmatprep.subr.mxu0 0.0
  %1487 = vmatpush1.msra.mxu0 0.0
  %1488 = vmatprep.mubr.f32.mxu0 0.0
  %1489 = vmatmul.mubr.f32.gmra.mrb[0].mxu0 %v1422
  %v1490 = vpop.f32.mrb[0].mxu0
  %v1491 = vadd.f32 0.0, %v1490
  %v1492 = vpop.f32.mrb[0].mxu0
  %1493 = vdwg.mxu0
  %v1495 = vrot.slane %v1491, 2
  %v1497 = vadd.f32 %v1092, %v1495
  %v1498 = vxor.u32 %v1497, 2147483648
  %v1499 = vmul.f32 %v1498, 1.442695
  %v1500 = vpow.pop %v1499
  %v1501 = vadd.f32 %v1500, 1.0
  %v1502 = vrcp.pop %v1501
  %v1503 = vmul.f32 1.0, %v1502
  %v1504 = vtanh.pop %v1497
  %v1506 = vrot.slane %v1407, 6
  %v1508 = vmul.f32 %v1503, %v1506
  %1510 = vrot.lane.b32.xlu0 %v1504, 64
  %v1511 = vpop.permute.xlu0 %1510
  %v1513 = vmul.f32 %v1503, %v1511
  %1515 = vrot.lane.b32.xlu0 %v1513, 32
  %v1516 = vpop.permute.xlu0 %1515
  %v1518 = vadd.f32 %v1508, %v1516
  %v1519 = vtanh.pop %v1518
  %1521 = vrot.lane.b32.xlu0 %v1519, 64
  %v1522 = vpop.permute.xlu0 %1521
  %v1524 = vmul.f32 %v1503, %v1522
  %1526 = vrot.lane.b32.xlu0 %v1524, 32
  %v1527 = vpop.permute.xlu0 %1526
  %1529 = vst.msk [vmem:[#allocation2] sm:$0xc0] %vm559, %v1527
  %v1530 = vrot.slane %v1524, 6
  %1531 = vrot.lane.b32.xlu0 %v1530, 32
  %v1532 = vpop.permute.xlu0 %1531
  %v1533 = vsel %vm42, %v1532, 0
  %1535 = vmatprep.subr.mxu0 0.0
  %1536 = vmatpush1.msra.mxu0 %v1005
  %1537 = vmatprep.subr.mxu0 0.0
  %1538 = vmatpush1.msra.mxu0 %v1006
  %1539 = vmatprep.subr.mxu0 0.0
  %1540 = vmatpush1.msra.mxu0 %v1007
  %1541 = vmatprep.subr.mxu0 0.0
  %1542 = vmatpush1.msra.mxu0 %v1008
  %1543 = vmatprep.subr.mxu0 0.0
  %1544 = vmatpush1.msra.mxu0 0.0
  %1545 = vmatprep.subr.mxu0 0.0
  %1546 = vmatpush1.msra.mxu0 0.0
  %1547 = vmatprep.subr.mxu0 0.0
  %1548 = vmatpush1.msra.mxu0 0.0
  %1549 = vmatprep.subr.mxu0 0.0
  %1550 = vmatpush1.msra.mxu0 0.0
  %1551 = vmatprep.subr.mxu0 0.0
  %1552 = vmatpush1.msra.mxu0 0.0
  %1553 = vmatprep.subr.mxu0 0.0
  %1554 = vmatpush1.msra.mxu0 0.0
  %1555 = vmatprep.subr.mxu0 0.0
  %1556 = vmatpush1.msra.mxu0 0.0
  %1557 = vmatprep.subr.mxu0 0.0
  %1558 = vmatpush1.msra.mxu0 0.0
  %1559 = vmatprep.subr.mxu0 0.0
  %1560 = vmatpush1.msra.mxu0 0.0
  %1561 = vmatprep.subr.mxu0 0.0
  %1562 = vmatpush1.msra.mxu0 0.0
  %1563 = vmatprep.subr.mxu0 0.0
  %1564 = vmatpush1.msra.mxu0 0.0
  %1565 = vmatprep.subr.mxu0 0.0
  %1566 = vmatpush1.msra.mxu0 0.0
  %1567 = vmatprep.subr.mxu0 0.0
  %1568 = vmatpush1.msra.mxu0 0.0
  %1569 = vmatprep.subr.mxu0 0.0
  %1570 = vmatpush1.msra.mxu0 0.0
  %1571 = vmatprep.subr.mxu0 0.0
  %1572 = vmatpush1.msra.mxu0 0.0
  %1573 = vmatprep.subr.mxu0 0.0
  %1574 = vmatpush1.msra.mxu0 0.0
  %1575 = vmatprep.subr.mxu0 0.0
  %1576 = vmatpush1.msra.mxu0 0.0
  %1577 = vmatprep.subr.mxu0 0.0
  %1578 = vmatpush1.msra.mxu0 0.0
  %1579 = vmatprep.subr.mxu0 0.0
  %1580 = vmatpush1.msra.mxu0 0.0
  %1581 = vmatprep.subr.mxu0 0.0
  %1582 = vmatpush1.msra.mxu0 0.0
  %1583 = vmatprep.subr.mxu0 0.0
  %1584 = vmatpush1.msra.mxu0 0.0
  %1585 = vmatprep.subr.mxu0 0.0
  %1586 = vmatpush1.msra.mxu0 0.0
  %1587 = vmatprep.subr.mxu0 0.0
  %1588 = vmatpush1.msra.mxu0 0.0
  %1589 = vmatprep.subr.mxu0 0.0
  %1590 = vmatpush1.msra.mxu0 0.0
  %1591 = vmatprep.subr.mxu0 0.0
  %1592 = vmatpush1.msra.mxu0 0.0
  %1593 = vmatprep.subr.mxu0 0.0
  %1594 = vmatpush1.msra.mxu0 0.0
  %1595 = vmatprep.subr.mxu0 0.0
  %1596 = vmatpush1.msra.mxu0 0.0
  %1597 = vmatprep.subr.mxu0 0.0
  %1598 = vmatpush1.msra.mxu0 0.0
  %1599 = vmatprep.mubr.f32.mxu0 0.0
  %1600 = vmatmul.mubr.f32.gmra.mrb[0].mxu0 %v1533
  %v1601 = vpop.f32.mrb[0].mxu0
  %v1602 = vadd.f32 0.0, %v1601
  %v1603 = vpop.f32.mrb[0].mxu0
  %1604 = vdwg.mxu0
  %v1605 = vadd.f32 %v1097, %v1602
  %v1606 = vxor.u32 %v1605, 2147483648
  %v1607 = vmul.f32 %v1606, 1.442695
  %v1608 = vpow.pop %v1607
  %v1609 = vadd.f32 %v1608, 1.0
  %v1610 = vrcp.pop %v1609
  %v1611 = vmul.f32 1.0, %v1610
  %v1612 = vtanh.pop %v1605
  %v1614 = vrot.slane %v1518, 6
  %v1616 = vmul.f32 %v1611, %v1614
  %1618 = vrot.lane.b32.xlu0 %v1612, 64
  %v1619 = vpop.permute.xlu0 %1618
  %v1621 = vmul.f32 %v1611, %v1619
  %1623 = vrot.lane.b32.xlu0 %v1621, 32
  %v1624 = vpop.permute.xlu0 %1623
  %v1626 = vadd.f32 %v1616, %v1624
  %v1627 = vtanh.pop %v1626
  %1629 = vrot.lane.b32.xlu0 %v1627, 64
  %v1630 = vpop.permute.xlu0 %1629
  %v1632 = vmul.f32 %v1611, %v1630
  %1634 = vrot.lane.b32.xlu0 %v1632, 32
  %v1635 = vpop.permute.xlu0 %1634
  %1637 = vst.msk [vmem:[#allocation2 + $0x8] sm:$0x3] %vm226, %v1635
  %v1638 = vsel %vm42, %v1635, 0
  %1640 = vmatprep.subr.mxu0 0.0
  %1641 = vmatpush1.msra.mxu0 %v1005
  %1642 = vmatprep.subr.mxu0 0.0
  %1643 = vmatpush1.msra.mxu0 %v1006
  %1644 = vmatprep.subr.mxu0 0.0
  %1645 = vmatpush1.msra.mxu0 %v1007
  %1646 = vmatprep.subr.mxu0 0.0
  %1647 = vmatpush1.msra.mxu0 %v1008
  %1648 = vmatprep.subr.mxu0 0.0
  %1649 = vmatpush1.msra.mxu0 0.0
  %1650 = vmatprep.subr.mxu0 0.0
  %1651 = vmatpush1.msra.mxu0 0.0
  %1652 = vmatprep.subr.mxu0 0.0
  %1653 = vmatpush1.msra.mxu0 0.0
  %1654 = vmatprep.subr.mxu0 0.0
  %1655 = vmatpush1.msra.mxu0 0.0
  %1656 = vmatprep.subr.mxu0 0.0
  %1657 = vmatpush1.msra.mxu0 0.0
  %1658 = vmatprep.subr.mxu0 0.0
  %1659 = vmatpush1.msra.mxu0 0.0
  %1660 = vmatprep.subr.mxu0 0.0
  %1661 = vmatpush1.msra.mxu0 0.0
  %1662 = vmatprep.subr.mxu0 0.0
  %1663 = vmatpush1.msra.mxu0 0.0
  %1664 = vmatprep.subr.mxu0 0.0
  %1665 = vmatpush1.msra.mxu0 0.0
  %1666 = vmatprep.subr.mxu0 0.0
  %1667 = vmatpush1.msra.mxu0 0.0
  %1668 = vmatprep.subr.mxu0 0.0
  %1669 = vmatpush1.msra.mxu0 0.0
  %1670 = vmatprep.subr.mxu0 0.0
  %1671 = vmatpush1.msra.mxu0 0.0
  %1672 = vmatprep.subr.mxu0 0.0
  %1673 = vmatpush1.msra.mxu0 0.0
  %1674 = vmatprep.subr.mxu0 0.0
  %1675 = vmatpush1.msra.mxu0 0.0
  %1676 = vmatprep.subr.mxu0 0.0
  %1677 = vmatpush1.msra.mxu0 0.0
  %1678 = vmatprep.subr.mxu0 0.0
  %1679 = vmatpush1.msra.mxu0 0.0
  %1680 = vmatprep.subr.mxu0 0.0
  %1681 = vmatpush1.msra.mxu0 0.0
  %1682 = vmatprep.subr.mxu0 0.0
  %1683 = vmatpush1.msra.mxu0 0.0
  %1684 = vmatprep.subr.mxu0 0.0
  %1685 = vmatpush1.msra.mxu0 0.0
  %1686 = vmatprep.subr.mxu0 0.0
  %1687 = vmatpush1.msra.mxu0 0.0
  %1688 = vmatprep.subr.mxu0 0.0
  %1689 = vmatpush1.msra.mxu0 0.0
  %1690 = vmatprep.subr.mxu0 0.0
  %1691 = vmatpush1.msra.mxu0 0.0
  %1692 = vmatprep.subr.mxu0 0.0
  %1693 = vmatpush1.msra.mxu0 0.0
  %1694 = vmatprep.subr.mxu0 0.0
  %1695 = vmatpush1.msra.mxu0 0.0
  %1696 = vmatprep.subr.mxu0 0.0
  %1697 = vmatpush1.msra.mxu0 0.0
  %1698 = vmatprep.subr.mxu0 0.0
  %1699 = vmatpush1.msra.mxu0 0.0
  %1700 = vmatprep.subr.mxu0 0.0
  %1701 = vmatpush1.msra.mxu0 0.0
  %1702 = vmatprep.subr.mxu0 0.0
  %1703 = vmatpush1.msra.mxu0 0.0
  %1704 = vmatprep.mubr.f32.mxu0 0.0
  %1705 = vmatmul.mubr.f32.gmra.mrb[0].mxu0 %v1638
  %v1706 = vpop.f32.mrb[0].mxu0
  %v1707 = vadd.f32 0.0, %v1706
  %v1708 = vpop.f32.mrb[0].mxu0
  %1709 = vdwg.mxu0
  %v1711 = vrot.slane %v1707, 6
  %v1713 = vadd.f32 %v1097, %v1711
  %v1714 = vxor.u32 %v1713, 2147483648
  %v1715 = vmul.f32 %v1714, 1.442695
  %v1716 = vpow.pop %v1715
  %v1717 = vadd.f32 %v1716, 1.0
  %v1718 = vrcp.pop %v1717
  %v1719 = vmul.f32 1.0, %v1718
  %v1720 = vtanh.pop %v1713
  %v1722 = vrot.slane %v1626, 6
  %v1724 = vmul.f32 %v1719, %v1722
  %1726 = vrot.lane.b32.xlu0 %v1720, 64
  %v1727 = vpop.permute.xlu0 %1726
  %v1729 = vmul.f32 %v1719, %v1727
  %1731 = vrot.lane.b32.xlu0 %v1729, 32
  %v1732 = vpop.permute.xlu0 %1731
  %v1734 = vadd.f32 %v1724, %v1732
  %v1735 = vtanh.pop %v1734
  %1737 = vrot.lane.b32.xlu0 %v1735, 64
  %v1738 = vpop.permute.xlu0 %1737
  %v1740 = vmul.f32 %v1719, %v1738
  %1742 = vrot.lane.b32.xlu0 %v1740, 32
  %v1743 = vpop.permute.xlu0 %1742
  %1745 = vst.msk [vmem:[#allocation2 + $0x8] sm:$0xc] %vm335, %v1743
  %v1746 = vrot.slane %v1740, 2
  %1747 = vrot.lane.b32.xlu0 %v1746, 32
  %v1748 = vpop.permute.xlu0 %1747
  %v1749 = vsel %vm42, %v1748, 0
  %1751 = vmatprep.subr.mxu0 0.0
  %1752 = vmatpush1.msra.mxu0 %v1005
  %1753 = vmatprep.subr.mxu0 0.0
  %1754 = vmatpush1.msra.mxu0 %v1006
  %1755 = vmatprep.subr.mxu0 0.0
  %1756 = vmatpush1.msra.mxu0 %v1007
  %1757 = vmatprep.subr.mxu0 0.0
  %1758 = vmatpush1.msra.mxu0 %v1008
  %1759 = vmatprep.subr.mxu0 0.0
  %1760 = vmatpush1.msra.mxu0 0.0
  %1761 = vmatprep.subr.mxu0 0.0
  %1762 = vmatpush1.msra.mxu0 0.0
  %1763 = vmatprep.subr.mxu0 0.0
  %1764 = vmatpush1.msra.mxu0 0.0
  %1765 = vmatprep.subr.mxu0 0.0
  %1766 = vmatpush1.msra.mxu0 0.0
  %1767 = vmatprep.subr.mxu0 0.0
  %1768 = vmatpush1.msra.mxu0 0.0
  %1769 = vmatprep.subr.mxu0 0.0
  %1770 = vmatpush1.msra.mxu0 0.0
  %1771 = vmatprep.subr.mxu0 0.0
  %1772 = vmatpush1.msra.mxu0 0.0
  %1773 = vmatprep.subr.mxu0 0.0
  %1774 = vmatpush1.msra.mxu0 0.0
  %1775 = vmatprep.subr.mxu0 0.0
  %1776 = vmatpush1.msra.mxu0 0.0
  %1777 = vmatprep.subr.mxu0 0.0
  %1778 = vmatpush1.msra.mxu0 0.0
  %1779 = vmatprep.subr.mxu0 0.0
  %1780 = vmatpush1.msra.mxu0 0.0
  %1781 = vmatprep.subr.mxu0 0.0
  %1782 = vmatpush1.msra.mxu0 0.0
  %1783 = vmatprep.subr.mxu0 0.0
  %1784 = vmatpush1.msra.mxu0 0.0
  %1785 = vmatprep.subr.mxu0 0.0
  %1786 = vmatpush1.msra.mxu0 0.0
  %1787 = vmatprep.subr.mxu0 0.0
  %1788 = vmatpush1.msra.mxu0 0.0
  %1789 = vmatprep.subr.mxu0 0.0
  %1790 = vmatpush1.msra.mxu0 0.0
  %1791 = vmatprep.subr.mxu0 0.0
  %1792 = vmatpush1.msra.mxu0 0.0
  %1793 = vmatprep.subr.mxu0 0.0
  %1794 = vmatpush1.msra.mxu0 0.0
  %1795 = vmatprep.subr.mxu0 0.0
  %1796 = vmatpush1.msra.mxu0 0.0
  %1797 = vmatprep.subr.mxu0 0.0
  %1798 = vmatpush1.msra.mxu0 0.0
  %1799 = vmatprep.subr.mxu0 0.0
  %1800 = vmatpush1.msra.mxu0 0.0
  %1801 = vmatprep.subr.mxu0 0.0
  %1802 = vmatpush1.msra.mxu0 0.0
  %1803 = vmatprep.subr.mxu0 0.0
  %1804 = vmatpush1.msra.mxu0 0.0
  %1805 = vmatprep.subr.mxu0 0.0
  %1806 = vmatpush1.msra.mxu0 0.0
  %1807 = vmatprep.subr.mxu0 0.0
  %1808 = vmatpush1.msra.mxu0 0.0
  %1809 = vmatprep.subr.mxu0 0.0
  %1810 = vmatpush1.msra.mxu0 0.0
  %1811 = vmatprep.subr.mxu0 0.0
  %1812 = vmatpush1.msra.mxu0 0.0
  %1813 = vmatprep.subr.mxu0 0.0
  %1814 = vmatpush1.msra.mxu0 0.0
  %1815 = vmatprep.mubr.f32.mxu0 0.0
  %1816 = vmatmul.mubr.f32.gmra.mrb[0].mxu0 %v1749
  %v1817 = vpop.f32.mrb[0].mxu0
  %v1818 = vadd.f32 0.0, %v1817
  %v1819 = vpop.f32.mrb[0].mxu0
  %1820 = vdwg.mxu0
  %v1822 = vrot.slane %v1818, 4
  %v1824 = vadd.f32 %v1097, %v1822
  %v1825 = vxor.u32 %v1824, 2147483648
  %v1826 = vmul.f32 %v1825, 1.442695
  %v1827 = vpow.pop %v1826
  %v1828 = vadd.f32 %v1827, 1.0
  %v1829 = vrcp.pop %v1828
  %v1830 = vmul.f32 1.0, %v1829
  %v1831 = vtanh.pop %v1824
  %v1833 = vrot.slane %v1734, 6
  %v1835 = vmul.f32 %v1830, %v1833
  %1837 = vrot.lane.b32.xlu0 %v1831, 64
  %v1838 = vpop.permute.xlu0 %1837
  %v1840 = vmul.f32 %v1830, %v1838
  %1842 = vrot.lane.b32.xlu0 %v1840, 32
  %v1843 = vpop.permute.xlu0 %1842
  %v1845 = vadd.f32 %v1835, %v1843
  %v1846 = vtanh.pop %v1845
  %1848 = vrot.lane.b32.xlu0 %v1846, 64
  %v1849 = vpop.permute.xlu0 %1848
  %v1851 = vmul.f32 %v1830, %v1849
  %1853 = vrot.lane.b32.xlu0 %v1851, 32
  %v1854 = vpop.permute.xlu0 %1853
  %1856 = vst.msk [vmem:[#allocation2 + $0x8] sm:$0x30] %vm447, %v1854
  %v1857 = vrot.slane %v1851, 4
  %1858 = vrot.lane.b32.xlu0 %v1857, 32
  %v1859 = vpop.permute.xlu0 %1858
  %v1860 = vsel %vm42, %v1859, 0
  %1862 = vmatprep.subr.mxu0 0.0
  %1863 = vmatpush1.msra.mxu0 %v1005
  %1864 = vmatprep.subr.mxu0 0.0
  %1865 = vmatpush1.msra.mxu0 %v1006
  %1866 = vmatprep.subr.mxu0 0.0
  %1867 = vmatpush1.msra.mxu0 %v1007
  %1868 = vmatprep.subr.mxu0 0.0
  %1869 = vmatpush1.msra.mxu0 %v1008
  %1870 = vmatprep.subr.mxu0 0.0
  %1871 = vmatpush1.msra.mxu0 0.0
  %1872 = vmatprep.subr.mxu0 0.0
  %1873 = vmatpush1.msra.mxu0 0.0
  %1874 = vmatprep.subr.mxu0 0.0
  %1875 = vmatpush1.msra.mxu0 0.0
  %1876 = vmatprep.subr.mxu0 0.0
  %1877 = vmatpush1.msra.mxu0 0.0
  %1878 = vmatprep.subr.mxu0 0.0
  %1879 = vmatpush1.msra.mxu0 0.0
  %1880 = vmatprep.subr.mxu0 0.0
  %1881 = vmatpush1.msra.mxu0 0.0
  %1882 = vmatprep.subr.mxu0 0.0
  %1883 = vmatpush1.msra.mxu0 0.0
  %1884 = vmatprep.subr.mxu0 0.0
  %1885 = vmatpush1.msra.mxu0 0.0
  %1886 = vmatprep.subr.mxu0 0.0
  %1887 = vmatpush1.msra.mxu0 0.0
  %1888 = vmatprep.subr.mxu0 0.0
  %1889 = vmatpush1.msra.mxu0 0.0
  %1890 = vmatprep.subr.mxu0 0.0
  %1891 = vmatpush1.msra.mxu0 0.0
  %1892 = vmatprep.subr.mxu0 0.0
  %1893 = vmatpush1.msra.mxu0 0.0
  %1894 = vmatprep.subr.mxu0 0.0
  %1895 = vmatpush1.msra.mxu0 0.0
  %1896 = vmatprep.subr.mxu0 0.0
  %1897 = vmatpush1.msra.mxu0 0.0
  %1898 = vmatprep.subr.mxu0 0.0
  %1899 = vmatpush1.msra.mxu0 0.0
  %1900 = vmatprep.subr.mxu0 0.0
  %1901 = vmatpush1.msra.mxu0 0.0
  %1902 = vmatprep.subr.mxu0 0.0
  %1903 = vmatpush1.msra.mxu0 0.0
  %1904 = vmatprep.subr.mxu0 0.0
  %1905 = vmatpush1.msra.mxu0 0.0
  %1906 = vmatprep.subr.mxu0 0.0
  %1907 = vmatpush1.msra.mxu0 0.0
  %1908 = vmatprep.subr.mxu0 0.0
  %1909 = vmatpush1.msra.mxu0 0.0
  %1910 = vmatprep.subr.mxu0 0.0
  %1911 = vmatpush1.msra.mxu0 0.0
  %1912 = vmatprep.subr.mxu0 0.0
  %1913 = vmatpush1.msra.mxu0 0.0
  %1914 = vmatprep.subr.mxu0 0.0
  %1915 = vmatpush1.msra.mxu0 0.0
  %1916 = vmatprep.subr.mxu0 0.0
  %1917 = vmatpush1.msra.mxu0 0.0
  %1918 = vmatprep.subr.mxu0 0.0
  %1919 = vmatpush1.msra.mxu0 0.0
  %1920 = vmatprep.subr.mxu0 0.0
  %1921 = vmatpush1.msra.mxu0 0.0
  %1922 = vmatprep.subr.mxu0 0.0
  %1923 = vmatpush1.msra.mxu0 0.0
  %1924 = vmatprep.subr.mxu0 0.0
  %1925 = vmatpush1.msra.mxu0 0.0
  %1926 = vmatprep.mubr.f32.mxu0 0.0
  %1927 = vmatmul.mubr.f32.gmra.mrb[0].mxu0 %v1860
  %v1928 = vpop.f32.mrb[0].mxu0
  %v1929 = vadd.f32 0.0, %v1928
  %v1930 = vpop.f32.mrb[0].mxu0
  %1931 = vdwg.mxu0
  %v1933 = vrot.slane %v1929, 2
  %v1935 = vadd.f32 %v1097, %v1933
  %v1936 = vxor.u32 %v1935, 2147483648
  %v1937 = vmul.f32 %v1936, 1.442695
  %v1938 = vpow.pop %v1937
  %v1939 = vadd.f32 %v1938, 1.0
  %v1940 = vrcp.pop %v1939
  %v1941 = vmul.f32 1.0, %v1940
  %v1942 = vtanh.pop %v1935
  %v1944 = vrot.slane %v1845, 6
  %v1946 = vmul.f32 %v1941, %v1944
  %1948 = vrot.lane.b32.xlu0 %v1942, 64
  %v1949 = vpop.permute.xlu0 %1948
  %v1951 = vmul.f32 %v1941, %v1949
  %1953 = vrot.lane.b32.xlu0 %v1951, 32
  %v1954 = vpop.permute.xlu0 %1953
  %v1956 = vadd.f32 %v1946, %v1954
  %v1957 = vtanh.pop %v1956
  %1959 = vrot.lane.b32.xlu0 %v1957, 64
  %v1960 = vpop.permute.xlu0 %1959
  %v1962 = vmul.f32 %v1941, %v1960
  %1964 = vrot.lane.b32.xlu0 %v1962, 32
  %v1965 = vpop.permute.xlu0 %1964
  %1967 = vst.msk [vmem:[#allocation2 + $0x8] sm:$0xc0] %vm559, %v1965
  %s1968 = scalar_lea.vmem %s1, 64
  %v1969 = vld [vmem:[%s1968] sm:$0xff]
  %v1970 = vld [vmem:[%s1968 + $0x8] sm:$0xff]
  %v1971 = vld [vmem:[%s1968 + $0x10] sm:$0xff]
  %v1972 = vld [vmem:[%s1968 + $0x18] sm:$0xff]
  %s1973 = scalar_lea.vmem %s2, 64
  %v1974 = vld [vmem:[%s1973] sm:$0xff]
  %v1975 = vld [vmem:[%s1973 + $0x8] sm:$0xff]
  %v1976 = vld [vmem:[%s1973 + $0x10] sm:$0xff]
  %v1977 = vld [vmem:[%s1973 + $0x18] sm:$0xff]
  %s1978 = scalar_lea.vmem %s3, 2
  %v1979 = vld [vmem:[%s1978] sm:$0x1]
  %v1980 = vld [vmem:[#allocation2] sm:$0xff]
  %v1981 = vld [vmem:[#allocation2 + $0x8] sm:$0xff]
  %v1983 = vlaneseq
  %v1984 = vshrl.u32 %v1983, 7
  %v1985 = vsub.s32 0, %v1984
  %v1986 = vrot.slane %v1979, %v1985
  %v1989 = vsel %vm42, %v1980, 0
  %v1992 = vsel %vm42, %v1981, 0
  %1994 = vmatprep.subr.mxu0 0.0
  %1995 = vmatpush1.msra.mxu0 %v1969
  %1996 = vmatprep.subr.mxu0 0.0
  %1997 = vmatpush1.msra.mxu0 %v1970
  %1998 = vmatprep.subr.mxu0 0.0
  %1999 = vmatpush1.msra.mxu0 %v1971
  %2000 = vmatprep.subr.mxu0 0.0
  %2001 = vmatpush1.msra.mxu0 %v1972
  %2002 = vmatprep.subr.mxu0 0.0
  %2003 = vmatpush1.msra.mxu0 0.0
  %2004 = vmatprep.subr.mxu0 0.0
  %2005 = vmatpush1.msra.mxu0 0.0
  %2006 = vmatprep.subr.mxu0 0.0
  %2007 = vmatpush1.msra.mxu0 0.0
  %2008 = vmatprep.subr.mxu0 0.0
  %2009 = vmatpush1.msra.mxu0 0.0
  %2010 = vmatprep.subr.mxu0 0.0
  %2011 = vmatpush1.msra.mxu0 0.0
  %2012 = vmatprep.subr.mxu0 0.0
  %2013 = vmatpush1.msra.mxu0 0.0
  %2014 = vmatprep.subr.mxu0 0.0
  %2015 = vmatpush1.msra.mxu0 0.0
  %2016 = vmatprep.subr.mxu0 0.0
  %2017 = vmatpush1.msra.mxu0 0.0
  %2018 = vmatprep.subr.mxu0 0.0
  %2019 = vmatpush1.msra.mxu0 0.0
  %2020 = vmatprep.subr.mxu0 0.0
  %2021 = vmatpush1.msra.mxu0 0.0
  %2022 = vmatprep.subr.mxu0 0.0
  %2023 = vmatpush1.msra.mxu0 0.0
  %2024 = vmatprep.subr.mxu0 0.0
  %2025 = vmatpush1.msra.mxu0 0.0
  %2026 = vmatprep.subr.mxu0 0.0
  %2027 = vmatpush1.msra.mxu0 0.0
  %2028 = vmatprep.subr.mxu0 0.0
  %2029 = vmatpush1.msra.mxu0 0.0
  %2030 = vmatprep.subr.mxu0 0.0
  %2031 = vmatpush1.msra.mxu0 0.0
  %2032 = vmatprep.subr.mxu0 0.0
  %2033 = vmatpush1.msra.mxu0 0.0
  %2034 = vmatprep.subr.mxu0 0.0
  %2035 = vmatpush1.msra.mxu0 0.0
  %2036 = vmatprep.subr.mxu0 0.0
  %2037 = vmatpush1.msra.mxu0 0.0
  %2038 = vmatprep.subr.mxu0 0.0
  %2039 = vmatpush1.msra.mxu0 0.0
  %2040 = vmatprep.subr.mxu0 0.0
  %2041 = vmatpush1.msra.mxu0 0.0
  %2042 = vmatprep.subr.mxu0 0.0
  %2043 = vmatpush1.msra.mxu0 0.0
  %2044 = vmatprep.subr.mxu0 0.0
  %2045 = vmatpush1.msra.mxu0 0.0
  %2046 = vmatprep.subr.mxu0 0.0
  %2047 = vmatpush1.msra.mxu0 0.0
  %2048 = vmatprep.subr.mxu0 0.0
  %2049 = vmatpush1.msra.mxu0 0.0
  %2050 = vmatprep.subr.mxu0 0.0
  %2051 = vmatpush1.msra.mxu0 0.0
  %2052 = vmatprep.subr.mxu0 0.0
  %2053 = vmatpush1.msra.mxu0 0.0
  %2054 = vmatprep.subr.mxu0 0.0
  %2055 = vmatpush1.msra.mxu0 0.0
  %2056 = vmatprep.subr.mxu0 0.0
  %2057 = vmatpush1.msra.mxu0 0.0
  %2058 = vmatprep.mubr.f32.mxu0 0.0
  %2059 = vmatmul.mubr.f32.gmra.mrb[0].mxu0 %v1989
  %v2060 = vpop.f32.mrb[0].mxu0
  %v2061 = vadd.f32 %v1986, %v2060
  %v2062 = vpop.f32.mrb[0].mxu0
  %2063 = vmatprep.mubr.f32.mxu0 0.0
  %2064 = vmatmul.mubr.f32.gmra.mrb[0].mxu0 %v1992
  %v2065 = vpop.f32.mrb[0].mxu0
  %v2066 = vadd.f32 %v1986, %v2065
  %v2067 = vpop.f32.mrb[0].mxu0
  %2068 = vdwg.mxu0
  %2069 = vmatprep.subr.mxu0 0.0
  %2070 = vmatpush1.msra.mxu0 %v1974
  %2071 = vmatprep.subr.mxu0 0.0
  %2072 = vmatpush1.msra.mxu0 %v1975
  %2073 = vmatprep.subr.mxu0 0.0
  %2074 = vmatpush1.msra.mxu0 %v1976
  %2075 = vmatprep.subr.mxu0 0.0
  %2076 = vmatpush1.msra.mxu0 %v1977
  %2077 = vmatprep.subr.mxu0 0.0
  %2078 = vmatpush1.msra.mxu0 0.0
  %2079 = vmatprep.subr.mxu0 0.0
  %2080 = vmatpush1.msra.mxu0 0.0
  %2081 = vmatprep.subr.mxu0 0.0
  %2082 = vmatpush1.msra.mxu0 0.0
  %2083 = vmatprep.subr.mxu0 0.0
  %2084 = vmatpush1.msra.mxu0 0.0
  %2085 = vmatprep.subr.mxu0 0.0
  %2086 = vmatpush1.msra.mxu0 0.0
  %2087 = vmatprep.subr.mxu0 0.0
  %2088 = vmatpush1.msra.mxu0 0.0
  %2089 = vmatprep.subr.mxu0 0.0
  %2090 = vmatpush1.msra.mxu0 0.0
  %2091 = vmatprep.subr.mxu0 0.0
  %2092 = vmatpush1.msra.mxu0 0.0
  %2093 = vmatprep.subr.mxu0 0.0
  %2094 = vmatpush1.msra.mxu0 0.0
  %2095 = vmatprep.subr.mxu0 0.0
  %2096 = vmatpush1.msra.mxu0 0.0
  %2097 = vmatprep.subr.mxu0 0.0
  %2098 = vmatpush1.msra.mxu0 0.0
  %2099 = vmatprep.subr.mxu0 0.0
  %2100 = vmatpush1.msra.mxu0 0.0
  %2101 = vmatprep.subr.mxu0 0.0
  %2102 = vmatpush1.msra.mxu0 0.0
  %2103 = vmatprep.subr.mxu0 0.0
  %2104 = vmatpush1.msra.mxu0 0.0
  %2105 = vmatprep.subr.mxu0 0.0
  %2106 = vmatpush1.msra.mxu0 0.0
  %2107 = vmatprep.subr.mxu0 0.0
  %2108 = vmatpush1.msra.mxu0 0.0
  %2109 = vmatprep.subr.mxu0 0.0
  %2110 = vmatpush1.msra.mxu0 0.0
  %2111 = vmatprep.subr.mxu0 0.0
  %2112 = vmatpush1.msra.mxu0 0.0
  %2113 = vmatprep.subr.mxu0 0.0
  %2114 = vmatpush1.msra.mxu0 0.0
  %2115 = vmatprep.subr.mxu0 0.0
  %2116 = vmatpush1.msra.mxu0 0.0
  %2117 = vmatprep.subr.mxu0 0.0
  %2118 = vmatpush1.msra.mxu0 0.0
  %2119 = vmatprep.subr.mxu0 0.0
  %2120 = vmatpush1.msra.mxu0 0.0
  %2121 = vmatprep.subr.mxu0 0.0
  %2122 = vmatpush1.msra.mxu0 0.0
  %2123 = vmatprep.subr.mxu0 0.0
  %2124 = vmatpush1.msra.mxu0 0.0
  %2125 = vmatprep.subr.mxu0 0.0
  %2126 = vmatpush1.msra.mxu0 0.0
  %2127 = vmatprep.subr.mxu0 0.0
  %2128 = vmatpush1.msra.mxu0 0.0
  %2129 = vmatprep.subr.mxu0 0.0
  %2130 = vmatpush1.msra.mxu0 0.0
  %2131 = vmatprep.subr.mxu0 0.0
  %2132 = vmatpush1.msra.mxu0 0.0
  %2133 = vmatprep.mubr.f32.mxu0 0.0
  %2134 = vmatmul.mubr.f32.gmra.mrb[0].mxu0 %v125
  %v2135 = vpop.f32.mrb[0].mxu0
  %v2136 = vadd.f32 0.0, %v2135
  %v2137 = vpop.f32.mrb[0].mxu0
  %2138 = vdwg.mxu0
  %v2139 = vadd.f32 %v2061, %v2136
  %v2140 = vxor.u32 %v2139, 2147483648
  %v2141 = vmul.f32 %v2140, 1.442695
  %v2142 = vpow.pop %v2141
  %v2143 = vadd.f32 %v2142, 1.0
  %v2144 = vrcp.pop %v2143
  %v2145 = vmul.f32 1.0, %v2144
  %v2146 = vtanh.pop %v2139
  %v2147 = vmul.f32 %v2145, 0.0
  %2149 = vrot.lane.b32.xlu0 %v2146, 64
  %v2150 = vpop.permute.xlu0 %2149
  %v2152 = vmul.f32 %v2145, %v2150
  %2154 = vrot.lane.b32.xlu0 %v2152, 32
  %v2155 = vpop.permute.xlu0 %2154
  %v2157 = vadd.f32 %v2147, %v2155
  %v2158 = vtanh.pop %v2157
  %2160 = vrot.lane.b32.xlu0 %v2158, 64
  %v2161 = vpop.permute.xlu0 %2160
  %v2163 = vmul.f32 %v2145, %v2161
  %2165 = vrot.lane.b32.xlu0 %v2163, 32
  %v2166 = vpop.permute.xlu0 %2165
  %2168 = vst.msk [vmem:[#allocation2] sm:$0x3] %vm226, %v2166
  %v2169 = vsel %vm42, %v2166, 0
  %2171 = vmatprep.subr.mxu0 0.0
  %2172 = vmatpush1.msra.mxu0 %v1974
  %2173 = vmatprep.subr.mxu0 0.0
  %2174 = vmatpush1.msra.mxu0 %v1975
  %2175 = vmatprep.subr.mxu0 0.0
  %2176 = vmatpush1.msra.mxu0 %v1976
  %2177 = vmatprep.subr.mxu0 0.0
  %2178 = vmatpush1.msra.mxu0 %v1977
  %2179 = vmatprep.subr.mxu0 0.0
  %2180 = vmatpush1.msra.mxu0 0.0
  %2181 = vmatprep.subr.mxu0 0.0
  %2182 = vmatpush1.msra.mxu0 0.0
  %2183 = vmatprep.subr.mxu0 0.0
  %2184 = vmatpush1.msra.mxu0 0.0
  %2185 = vmatprep.subr.mxu0 0.0
  %2186 = vmatpush1.msra.mxu0 0.0
  %2187 = vmatprep.subr.mxu0 0.0
  %2188 = vmatpush1.msra.mxu0 0.0
  %2189 = vmatprep.subr.mxu0 0.0
  %2190 = vmatpush1.msra.mxu0 0.0
  %2191 = vmatprep.subr.mxu0 0.0
  %2192 = vmatpush1.msra.mxu0 0.0
  %2193 = vmatprep.subr.mxu0 0.0
  %2194 = vmatpush1.msra.mxu0 0.0
  %2195 = vmatprep.subr.mxu0 0.0
  %2196 = vmatpush1.msra.mxu0 0.0
  %2197 = vmatprep.subr.mxu0 0.0
  %2198 = vmatpush1.msra.mxu0 0.0
  %2199 = vmatprep.subr.mxu0 0.0
  %2200 = vmatpush1.msra.mxu0 0.0
  %2201 = vmatprep.subr.mxu0 0.0
  %2202 = vmatpush1.msra.mxu0 0.0
  %2203 = vmatprep.subr.mxu0 0.0
  %2204 = vmatpush1.msra.mxu0 0.0
  %2205 = vmatprep.subr.mxu0 0.0
  %2206 = vmatpush1.msra.mxu0 0.0
  %2207 = vmatprep.subr.mxu0 0.0
  %2208 = vmatpush1.msra.mxu0 0.0
  %2209 = vmatprep.subr.mxu0 0.0
  %2210 = vmatpush1.msra.mxu0 0.0
  %2211 = vmatprep.subr.mxu0 0.0
  %2212 = vmatpush1.msra.mxu0 0.0
  %2213 = vmatprep.subr.mxu0 0.0
  %2214 = vmatpush1.msra.mxu0 0.0
  %2215 = vmatprep.subr.mxu0 0.0
  %2216 = vmatpush1.msra.mxu0 0.0
  %2217 = vmatprep.subr.mxu0 0.0
  %2218 = vmatpush1.msra.mxu0 0.0
  %2219 = vmatprep.subr.mxu0 0.0
  %2220 = vmatpush1.msra.mxu0 0.0
  %2221 = vmatprep.subr.mxu0 0.0
  %2222 = vmatpush1.msra.mxu0 0.0
  %2223 = vmatprep.subr.mxu0 0.0
  %2224 = vmatpush1.msra.mxu0 0.0
  %2225 = vmatprep.subr.mxu0 0.0
  %2226 = vmatpush1.msra.mxu0 0.0
  %2227 = vmatprep.subr.mxu0 0.0
  %2228 = vmatpush1.msra.mxu0 0.0
  %2229 = vmatprep.subr.mxu0 0.0
  %2230 = vmatpush1.msra.mxu0 0.0
  %2231 = vmatprep.subr.mxu0 0.0
  %2232 = vmatpush1.msra.mxu0 0.0
  %2233 = vmatprep.subr.mxu0 0.0
  %2234 = vmatpush1.msra.mxu0 0.0
  %2235 = vmatprep.mubr.f32.mxu0 0.0
  %2236 = vmatmul.mubr.f32.gmra.mrb[0].mxu0 %v2169
  %v2237 = vpop.f32.mrb[0].mxu0
  %v2238 = vadd.f32 0.0, %v2237
  %v2239 = vpop.f32.mrb[0].mxu0
  %2240 = vdwg.mxu0
  %v2242 = vrot.slane %v2238, 6
  %v2244 = vadd.f32 %v2061, %v2242
  %v2245 = vxor.u32 %v2244, 2147483648
  %v2246 = vmul.f32 %v2245, 1.442695
  %v2247 = vpow.pop %v2246
  %v2248 = vadd.f32 %v2247, 1.0
  %v2249 = vrcp.pop %v2248
  %v2250 = vmul.f32 1.0, %v2249
  %v2251 = vtanh.pop %v2244
  %v2253 = vrot.slane %v2157, 6
  %v2255 = vmul.f32 %v2250, %v2253
  %2257 = vrot.lane.b32.xlu0 %v2251, 64
  %v2258 = vpop.permute.xlu0 %2257
  %v2260 = vmul.f32 %v2250, %v2258
  %2262 = vrot.lane.b32.xlu0 %v2260, 32
  %v2263 = vpop.permute.xlu0 %2262
  %v2265 = vadd.f32 %v2255, %v2263
  %v2266 = vtanh.pop %v2265
  %2268 = vrot.lane.b32.xlu0 %v2266, 64
  %v2269 = vpop.permute.xlu0 %2268
  %v2271 = vmul.f32 %v2250, %v2269
  %2273 = vrot.lane.b32.xlu0 %v2271, 32
  %v2274 = vpop.permute.xlu0 %2273
  %2276 = vst.msk [vmem:[#allocation2] sm:$0xc] %vm335, %v2274
  %v2277 = vrot.slane %v2271, 2
  %2278 = vrot.lane.b32.xlu0 %v2277, 32
  %v2279 = vpop.permute.xlu0 %2278
  %v2280 = vsel %vm42, %v2279, 0
  %2282 = vmatprep.subr.mxu0 0.0
  %2283 = vmatpush1.msra.mxu0 %v1974
  %2284 = vmatprep.subr.mxu0 0.0
  %2285 = vmatpush1.msra.mxu0 %v1975
  %2286 = vmatprep.subr.mxu0 0.0
  %2287 = vmatpush1.msra.mxu0 %v1976
  %2288 = vmatprep.subr.mxu0 0.0
  %2289 = vmatpush1.msra.mxu0 %v1977
  %2290 = vmatprep.subr.mxu0 0.0
  %2291 = vmatpush1.msra.mxu0 0.0
  %2292 = vmatprep.subr.mxu0 0.0
  %2293 = vmatpush1.msra.mxu0 0.0
  %2294 = vmatprep.subr.mxu0 0.0
  %2295 = vmatpush1.msra.mxu0 0.0
  %2296 = vmatprep.subr.mxu0 0.0
  %2297 = vmatpush1.msra.mxu0 0.0
  %2298 = vmatprep.subr.mxu0 0.0
  %2299 = vmatpush1.msra.mxu0 0.0
  %2300 = vmatprep.subr.mxu0 0.0
  %2301 = vmatpush1.msra.mxu0 0.0
  %2302 = vmatprep.subr.mxu0 0.0
  %2303 = vmatpush1.msra.mxu0 0.0
  %2304 = vmatprep.subr.mxu0 0.0
  %2305 = vmatpush1.msra.mxu0 0.0
  %2306 = vmatprep.subr.mxu0 0.0
  %2307 = vmatpush1.msra.mxu0 0.0
  %2308 = vmatprep.subr.mxu0 0.0
  %2309 = vmatpush1.msra.mxu0 0.0
  %2310 = vmatprep.subr.mxu0 0.0
  %2311 = vmatpush1.msra.mxu0 0.0
  %2312 = vmatprep.subr.mxu0 0.0
  %2313 = vmatpush1.msra.mxu0 0.0
  %2314 = vmatprep.subr.mxu0 0.0
  %2315 = vmatpush1.msra.mxu0 0.0
  %2316 = vmatprep.subr.mxu0 0.0
  %2317 = vmatpush1.msra.mxu0 0.0
  %2318 = vmatprep.subr.mxu0 0.0
  %2319 = vmatpush1.msra.mxu0 0.0
  %2320 = vmatprep.subr.mxu0 0.0
  %2321 = vmatpush1.msra.mxu0 0.0
  %2322 = vmatprep.subr.mxu0 0.0
  %2323 = vmatpush1.msra.mxu0 0.0
  %2324 = vmatprep.subr.mxu0 0.0
  %2325 = vmatpush1.msra.mxu0 0.0
  %2326 = vmatprep.subr.mxu0 0.0
  %2327 = vmatpush1.msra.mxu0 0.0
  %2328 = vmatprep.subr.mxu0 0.0
  %2329 = vmatpush1.msra.mxu0 0.0
  %2330 = vmatprep.subr.mxu0 0.0
  %2331 = vmatpush1.msra.mxu0 0.0
  %2332 = vmatprep.subr.mxu0 0.0
  %2333 = vmatpush1.msra.mxu0 0.0
  %2334 = vmatprep.subr.mxu0 0.0
  %2335 = vmatpush1.msra.mxu0 0.0
  %2336 = vmatprep.subr.mxu0 0.0
  %2337 = vmatpush1.msra.mxu0 0.0
  %2338 = vmatprep.subr.mxu0 0.0
  %2339 = vmatpush1.msra.mxu0 0.0
  %2340 = vmatprep.subr.mxu0 0.0
  %2341 = vmatpush1.msra.mxu0 0.0
  %2342 = vmatprep.subr.mxu0 0.0
  %2343 = vmatpush1.msra.mxu0 0.0
  %2344 = vmatprep.subr.mxu0 0.0
  %2345 = vmatpush1.msra.mxu0 0.0
  %2346 = vmatprep.mubr.f32.mxu0 0.0
  %2347 = vmatmul.mubr.f32.gmra.mrb[0].mxu0 %v2280
  %v2348 = vpop.f32.mrb[0].mxu0
  %v2349 = vadd.f32 0.0, %v2348
  %v2350 = vpop.f32.mrb[0].mxu0
  %2351 = vdwg.mxu0
  %v2353 = vrot.slane %v2349, 4
  %v2355 = vadd.f32 %v2061, %v2353
  %v2356 = vxor.u32 %v2355, 2147483648
  %v2357 = vmul.f32 %v2356, 1.442695
  %v2358 = vpow.pop %v2357
  %v2359 = vadd.f32 %v2358, 1.0
  %v2360 = vrcp.pop %v2359
  %v2361 = vmul.f32 1.0, %v2360
  %v2362 = vtanh.pop %v2355
  %v2364 = vrot.slane %v2265, 6
  %v2366 = vmul.f32 %v2361, %v2364
  %2368 = vrot.lane.b32.xlu0 %v2362, 64
  %v2369 = vpop.permute.xlu0 %2368
  %v2371 = vmul.f32 %v2361, %v2369
  %2373 = vrot.lane.b32.xlu0 %v2371, 32
  %v2374 = vpop.permute.xlu0 %2373
  %v2376 = vadd.f32 %v2366, %v2374
  %v2377 = vtanh.pop %v2376
  %2379 = vrot.lane.b32.xlu0 %v2377, 64
  %v2380 = vpop.permute.xlu0 %2379
  %v2382 = vmul.f32 %v2361, %v2380
  %2384 = vrot.lane.b32.xlu0 %v2382, 32
  %v2385 = vpop.permute.xlu0 %2384
  %2387 = vst.msk [vmem:[#allocation2] sm:$0x30] %vm447, %v2385
  %v2388 = vrot.slane %v2382, 4
  %2389 = vrot.lane.b32.xlu0 %v2388, 32
  %v2390 = vpop.permute.xlu0 %2389
  %v2391 = vsel %vm42, %v2390, 0
  %2393 = vmatprep.subr.mxu0 0.0
  %2394 = vmatpush1.msra.mxu0 %v1974
  %2395 = vmatprep.subr.mxu0 0.0
  %2396 = vmatpush1.msra.mxu0 %v1975
  %2397 = vmatprep.subr.mxu0 0.0
  %2398 = vmatpush1.msra.mxu0 %v1976
  %2399 = vmatprep.subr.mxu0 0.0
  %2400 = vmatpush1.msra.mxu0 %v1977
  %2401 = vmatprep.subr.mxu0 0.0
  %2402 = vmatpush1.msra.mxu0 0.0
  %2403 = vmatprep.subr.mxu0 0.0
  %2404 = vmatpush1.msra.mxu0 0.0
  %2405 = vmatprep.subr.mxu0 0.0
  %2406 = vmatpush1.msra.mxu0 0.0
  %2407 = vmatprep.subr.mxu0 0.0
  %2408 = vmatpush1.msra.mxu0 0.0
  %2409 = vmatprep.subr.mxu0 0.0
  %2410 = vmatpush1.msra.mxu0 0.0
  %2411 = vmatprep.subr.mxu0 0.0
  %2412 = vmatpush1.msra.mxu0 0.0
  %2413 = vmatprep.subr.mxu0 0.0
  %2414 = vmatpush1.msra.mxu0 0.0
  %2415 = vmatprep.subr.mxu0 0.0
  %2416 = vmatpush1.msra.mxu0 0.0
  %2417 = vmatprep.subr.mxu0 0.0
  %2418 = vmatpush1.msra.mxu0 0.0
  %2419 = vmatprep.subr.mxu0 0.0
  %2420 = vmatpush1.msra.mxu0 0.0
  %2421 = vmatprep.subr.mxu0 0.0
  %2422 = vmatpush1.msra.mxu0 0.0
  %2423 = vmatprep.subr.mxu0 0.0
  %2424 = vmatpush1.msra.mxu0 0.0
  %2425 = vmatprep.subr.mxu0 0.0
  %2426 = vmatpush1.msra.mxu0 0.0
  %2427 = vmatprep.subr.mxu0 0.0
  %2428 = vmatpush1.msra.mxu0 0.0
  %2429 = vmatprep.subr.mxu0 0.0
  %2430 = vmatpush1.msra.mxu0 0.0
  %2431 = vmatprep.subr.mxu0 0.0
  %2432 = vmatpush1.msra.mxu0 0.0
  %2433 = vmatprep.subr.mxu0 0.0
  %2434 = vmatpush1.msra.mxu0 0.0
  %2435 = vmatprep.subr.mxu0 0.0
  %2436 = vmatpush1.msra.mxu0 0.0
  %2437 = vmatprep.subr.mxu0 0.0
  %2438 = vmatpush1.msra.mxu0 0.0
  %2439 = vmatprep.subr.mxu0 0.0
  %2440 = vmatpush1.msra.mxu0 0.0
  %2441 = vmatprep.subr.mxu0 0.0
  %2442 = vmatpush1.msra.mxu0 0.0
  %2443 = vmatprep.subr.mxu0 0.0
  %2444 = vmatpush1.msra.mxu0 0.0
  %2445 = vmatprep.subr.mxu0 0.0
  %2446 = vmatpush1.msra.mxu0 0.0
  %2447 = vmatprep.subr.mxu0 0.0
  %2448 = vmatpush1.msra.mxu0 0.0
  %2449 = vmatprep.subr.mxu0 0.0
  %2450 = vmatpush1.msra.mxu0 0.0
  %2451 = vmatprep.subr.mxu0 0.0
  %2452 = vmatpush1.msra.mxu0 0.0
  %2453 = vmatprep.subr.mxu0 0.0
  %2454 = vmatpush1.msra.mxu0 0.0
  %2455 = vmatprep.subr.mxu0 0.0
  %2456 = vmatpush1.msra.mxu0 0.0
  %2457 = vmatprep.mubr.f32.mxu0 0.0
  %2458 = vmatmul.mubr.f32.gmra.mrb[0].mxu0 %v2391
  %v2459 = vpop.f32.mrb[0].mxu0
  %v2460 = vadd.f32 0.0, %v2459
  %v2461 = vpop.f32.mrb[0].mxu0
  %2462 = vdwg.mxu0
  %v2464 = vrot.slane %v2460, 2
  %v2466 = vadd.f32 %v2061, %v2464
  %v2467 = vxor.u32 %v2466, 2147483648
  %v2468 = vmul.f32 %v2467, 1.442695
  %v2469 = vpow.pop %v2468
  %v2470 = vadd.f32 %v2469, 1.0
  %v2471 = vrcp.pop %v2470
  %v2472 = vmul.f32 1.0, %v2471
  %v2473 = vtanh.pop %v2466
  %v2475 = vrot.slane %v2376, 6
  %v2477 = vmul.f32 %v2472, %v2475
  %2479 = vrot.lane.b32.xlu0 %v2473, 64
  %v2480 = vpop.permute.xlu0 %2479
  %v2482 = vmul.f32 %v2472, %v2480
  %2484 = vrot.lane.b32.xlu0 %v2482, 32
  %v2485 = vpop.permute.xlu0 %2484
  %v2487 = vadd.f32 %v2477, %v2485
  %v2488 = vtanh.pop %v2487
  %2490 = vrot.lane.b32.xlu0 %v2488, 64
  %v2491 = vpop.permute.xlu0 %2490
  %v2493 = vmul.f32 %v2472, %v2491
  %2495 = vrot.lane.b32.xlu0 %v2493, 32
  %v2496 = vpop.permute.xlu0 %2495
  %2498 = vst.msk [vmem:[#allocation2] sm:$0xc0] %vm559, %v2496
  %v2499 = vrot.slane %v2493, 6
  %2500 = vrot.lane.b32.xlu0 %v2499, 32
  %v2501 = vpop.permute.xlu0 %2500
  %v2502 = vsel %vm42, %v2501, 0
  %2504 = vmatprep.subr.mxu0 0.0
  %2505 = vmatpush1.msra.mxu0 %v1974
  %2506 = vmatprep.subr.mxu0 0.0
  %2507 = vmatpush1.msra.mxu0 %v1975
  %2508 = vmatprep.subr.mxu0 0.0
  %2509 = vmatpush1.msra.mxu0 %v1976
  %2510 = vmatprep.subr.mxu0 0.0
  %2511 = vmatpush1.msra.mxu0 %v1977
  %2512 = vmatprep.subr.mxu0 0.0
  %2513 = vmatpush1.msra.mxu0 0.0
  %2514 = vmatprep.subr.mxu0 0.0
  %2515 = vmatpush1.msra.mxu0 0.0
  %2516 = vmatprep.subr.mxu0 0.0
  %2517 = vmatpush1.msra.mxu0 0.0
  %2518 = vmatprep.subr.mxu0 0.0
  %2519 = vmatpush1.msra.mxu0 0.0
  %2520 = vmatprep.subr.mxu0 0.0
  %2521 = vmatpush1.msra.mxu0 0.0
  %2522 = vmatprep.subr.mxu0 0.0
  %2523 = vmatpush1.msra.mxu0 0.0
  %2524 = vmatprep.subr.mxu0 0.0
  %2525 = vmatpush1.msra.mxu0 0.0
  %2526 = vmatprep.subr.mxu0 0.0
  %2527 = vmatpush1.msra.mxu0 0.0
  %2528 = vmatprep.subr.mxu0 0.0
  %2529 = vmatpush1.msra.mxu0 0.0
  %2530 = vmatprep.subr.mxu0 0.0
  %2531 = vmatpush1.msra.mxu0 0.0
  %2532 = vmatprep.subr.mxu0 0.0
  %2533 = vmatpush1.msra.mxu0 0.0
  %2534 = vmatprep.subr.mxu0 0.0
  %2535 = vmatpush1.msra.mxu0 0.0
  %2536 = vmatprep.subr.mxu0 0.0
  %2537 = vmatpush1.msra.mxu0 0.0
  %2538 = vmatprep.subr.mxu0 0.0
  %2539 = vmatpush1.msra.mxu0 0.0
  %2540 = vmatprep.subr.mxu0 0.0
  %2541 = vmatpush1.msra.mxu0 0.0
  %2542 = vmatprep.subr.mxu0 0.0
  %2543 = vmatpush1.msra.mxu0 0.0
  %2544 = vmatprep.subr.mxu0 0.0
  %2545 = vmatpush1.msra.mxu0 0.0
  %2546 = vmatprep.subr.mxu0 0.0
  %2547 = vmatpush1.msra.mxu0 0.0
  %2548 = vmatprep.subr.mxu0 0.0
  %2549 = vmatpush1.msra.mxu0 0.0
  %2550 = vmatprep.subr.mxu0 0.0
  %2551 = vmatpush1.msra.mxu0 0.0
  %2552 = vmatprep.subr.mxu0 0.0
  %2553 = vmatpush1.msra.mxu0 0.0
  %2554 = vmatprep.subr.mxu0 0.0
  %2555 = vmatpush1.msra.mxu0 0.0
  %2556 = vmatprep.subr.mxu0 0.0
  %2557 = vmatpush1.msra.mxu0 0.0
  %2558 = vmatprep.subr.mxu0 0.0
  %2559 = vmatpush1.msra.mxu0 0.0
  %2560 = vmatprep.subr.mxu0 0.0
  %2561 = vmatpush1.msra.mxu0 0.0
  %2562 = vmatprep.subr.mxu0 0.0
  %2563 = vmatpush1.msra.mxu0 0.0
  %2564 = vmatprep.subr.mxu0 0.0
  %2565 = vmatpush1.msra.mxu0 0.0
  %2566 = vmatprep.subr.mxu0 0.0
  %2567 = vmatpush1.msra.mxu0 0.0
  %2568 = vmatprep.mubr.f32.mxu0 0.0
  %2569 = vmatmul.mubr.f32.gmra.mrb[0].mxu0 %v2502
  %v2570 = vpop.f32.mrb[0].mxu0
  %v2571 = vadd.f32 0.0, %v2570
  %v2572 = vpop.f32.mrb[0].mxu0
  %2573 = vdwg.mxu0
  %v2574 = vadd.f32 %v2066, %v2571
  %v2575 = vxor.u32 %v2574, 2147483648
  %v2576 = vmul.f32 %v2575, 1.442695
  %v2577 = vpow.pop %v2576
  %v2578 = vadd.f32 %v2577, 1.0
  %v2579 = vrcp.pop %v2578
  %v2580 = vmul.f32 1.0, %v2579
  %v2581 = vtanh.pop %v2574
  %v2583 = vrot.slane %v2487, 6
  %v2585 = vmul.f32 %v2580, %v2583
  %2587 = vrot.lane.b32.xlu0 %v2581, 64
  %v2588 = vpop.permute.xlu0 %2587
  %v2590 = vmul.f32 %v2580, %v2588
  %2592 = vrot.lane.b32.xlu0 %v2590, 32
  %v2593 = vpop.permute.xlu0 %2592
  %v2595 = vadd.f32 %v2585, %v2593
  %v2596 = vtanh.pop %v2595
  %2598 = vrot.lane.b32.xlu0 %v2596, 64
  %v2599 = vpop.permute.xlu0 %2598
  %v2601 = vmul.f32 %v2580, %v2599
  %2603 = vrot.lane.b32.xlu0 %v2601, 32
  %v2604 = vpop.permute.xlu0 %2603
  %2606 = vst.msk [vmem:[#allocation2 + $0x8] sm:$0x3] %vm226, %v2604
  %v2607 = vsel %vm42, %v2604, 0
  %2609 = vmatprep.subr.mxu0 0.0
  %2610 = vmatpush1.msra.mxu0 %v1974
  %2611 = vmatprep.subr.mxu0 0.0
  %2612 = vmatpush1.msra.mxu0 %v1975
  %2613 = vmatprep.subr.mxu0 0.0
  %2614 = vmatpush1.msra.mxu0 %v1976
  %2615 = vmatprep.subr.mxu0 0.0
  %2616 = vmatpush1.msra.mxu0 %v1977
  %2617 = vmatprep.subr.mxu0 0.0
  %2618 = vmatpush1.msra.mxu0 0.0
  %2619 = vmatprep.subr.mxu0 0.0
  %2620 = vmatpush1.msra.mxu0 0.0
  %2621 = vmatprep.subr.mxu0 0.0
  %2622 = vmatpush1.msra.mxu0 0.0
  %2623 = vmatprep.subr.mxu0 0.0
  %2624 = vmatpush1.msra.mxu0 0.0
  %2625 = vmatprep.subr.mxu0 0.0
  %2626 = vmatpush1.msra.mxu0 0.0
  %2627 = vmatprep.subr.mxu0 0.0
  %2628 = vmatpush1.msra.mxu0 0.0
  %2629 = vmatprep.subr.mxu0 0.0
  %2630 = vmatpush1.msra.mxu0 0.0
  %2631 = vmatprep.subr.mxu0 0.0
  %2632 = vmatpush1.msra.mxu0 0.0
  %2633 = vmatprep.subr.mxu0 0.0
  %2634 = vmatpush1.msra.mxu0 0.0
  %2635 = vmatprep.subr.mxu0 0.0
  %2636 = vmatpush1.msra.mxu0 0.0
  %2637 = vmatprep.subr.mxu0 0.0
  %2638 = vmatpush1.msra.mxu0 0.0
  %2639 = vmatprep.subr.mxu0 0.0
  %2640 = vmatpush1.msra.mxu0 0.0
  %2641 = vmatprep.subr.mxu0 0.0
  %2642 = vmatpush1.msra.mxu0 0.0
  %2643 = vmatprep.subr.mxu0 0.0
  %2644 = vmatpush1.msra.mxu0 0.0
  %2645 = vmatprep.subr.mxu0 0.0
  %2646 = vmatpush1.msra.mxu0 0.0
  %2647 = vmatprep.subr.mxu0 0.0
  %2648 = vmatpush1.msra.mxu0 0.0
  %2649 = vmatprep.subr.mxu0 0.0
  %2650 = vmatpush1.msra.mxu0 0.0
  %2651 = vmatprep.subr.mxu0 0.0
  %2652 = vmatpush1.msra.mxu0 0.0
  %2653 = vmatprep.subr.mxu0 0.0
  %2654 = vmatpush1.msra.mxu0 0.0
  %2655 = vmatprep.subr.mxu0 0.0
  %2656 = vmatpush1.msra.mxu0 0.0
  %2657 = vmatprep.subr.mxu0 0.0
  %2658 = vmatpush1.msra.mxu0 0.0
  %2659 = vmatprep.subr.mxu0 0.0
  %2660 = vmatpush1.msra.mxu0 0.0
  %2661 = vmatprep.subr.mxu0 0.0
  %2662 = vmatpush1.msra.mxu0 0.0
  %2663 = vmatprep.subr.mxu0 0.0
  %2664 = vmatpush1.msra.mxu0 0.0
  %2665 = vmatprep.subr.mxu0 0.0
  %2666 = vmatpush1.msra.mxu0 0.0
  %2667 = vmatprep.subr.mxu0 0.0
  %2668 = vmatpush1.msra.mxu0 0.0
  %2669 = vmatprep.subr.mxu0 0.0
  %2670 = vmatpush1.msra.mxu0 0.0
  %2671 = vmatprep.subr.mxu0 0.0
  %2672 = vmatpush1.msra.mxu0 0.0
  %2673 = vmatprep.mubr.f32.mxu0 0.0
  %2674 = vmatmul.mubr.f32.gmra.mrb[0].mxu0 %v2607
  %v2675 = vpop.f32.mrb[0].mxu0
  %v2676 = vadd.f32 0.0, %v2675
  %v2677 = vpop.f32.mrb[0].mxu0
  %2678 = vdwg.mxu0
  %v2680 = vrot.slane %v2676, 6
  %v2682 = vadd.f32 %v2066, %v2680
  %v2683 = vxor.u32 %v2682, 2147483648
  %v2684 = vmul.f32 %v2683, 1.442695
  %v2685 = vpow.pop %v2684
  %v2686 = vadd.f32 %v2685, 1.0
  %v2687 = vrcp.pop %v2686
  %v2688 = vmul.f32 1.0, %v2687
  %v2689 = vtanh.pop %v2682
  %v2691 = vrot.slane %v2595, 6
  %v2693 = vmul.f32 %v2688, %v2691
  %2695 = vrot.lane.b32.xlu0 %v2689, 64
  %v2696 = vpop.permute.xlu0 %2695
  %v2698 = vmul.f32 %v2688, %v2696
  %2700 = vrot.lane.b32.xlu0 %v2698, 32
  %v2701 = vpop.permute.xlu0 %2700
  %v2703 = vadd.f32 %v2693, %v2701
  %v2704 = vtanh.pop %v2703
  %2706 = vrot.lane.b32.xlu0 %v2704, 64
  %v2707 = vpop.permute.xlu0 %2706
  %v2709 = vmul.f32 %v2688, %v2707
  %2711 = vrot.lane.b32.xlu0 %v2709, 32
  %v2712 = vpop.permute.xlu0 %2711
  %2714 = vst.msk [vmem:[#allocation2 + $0x8] sm:$0xc] %vm335, %v2712
  %v2715 = vrot.slane %v2709, 2
  %2716 = vrot.lane.b32.xlu0 %v2715, 32
  %v2717 = vpop.permute.xlu0 %2716
  %v2718 = vsel %vm42, %v2717, 0
  %2720 = vmatprep.subr.mxu0 0.0
  %2721 = vmatpush1.msra.mxu0 %v1974
  %2722 = vmatprep.subr.mxu0 0.0
  %2723 = vmatpush1.msra.mxu0 %v1975
  %2724 = vmatprep.subr.mxu0 0.0
  %2725 = vmatpush1.msra.mxu0 %v1976
  %2726 = vmatprep.subr.mxu0 0.0
  %2727 = vmatpush1.msra.mxu0 %v1977
  %2728 = vmatprep.subr.mxu0 0.0
  %2729 = vmatpush1.msra.mxu0 0.0
  %2730 = vmatprep.subr.mxu0 0.0
  %2731 = vmatpush1.msra.mxu0 0.0
  %2732 = vmatprep.subr.mxu0 0.0
  %2733 = vmatpush1.msra.mxu0 0.0
  %2734 = vmatprep.subr.mxu0 0.0
  %2735 = vmatpush1.msra.mxu0 0.0
  %2736 = vmatprep.subr.mxu0 0.0
  %2737 = vmatpush1.msra.mxu0 0.0
  %2738 = vmatprep.subr.mxu0 0.0
  %2739 = vmatpush1.msra.mxu0 0.0
  %2740 = vmatprep.subr.mxu0 0.0
  %2741 = vmatpush1.msra.mxu0 0.0
  %2742 = vmatprep.subr.mxu0 0.0
  %2743 = vmatpush1.msra.mxu0 0.0
  %2744 = vmatprep.subr.mxu0 0.0
  %2745 = vmatpush1.msra.mxu0 0.0
  %2746 = vmatprep.subr.mxu0 0.0
  %2747 = vmatpush1.msra.mxu0 0.0
  %2748 = vmatprep.subr.mxu0 0.0
  %2749 = vmatpush1.msra.mxu0 0.0
  %2750 = vmatprep.subr.mxu0 0.0
  %2751 = vmatpush1.msra.mxu0 0.0
  %2752 = vmatprep.subr.mxu0 0.0
  %2753 = vmatpush1.msra.mxu0 0.0
  %2754 = vmatprep.subr.mxu0 0.0
  %2755 = vmatpush1.msra.mxu0 0.0
  %2756 = vmatprep.subr.mxu0 0.0
  %2757 = vmatpush1.msra.mxu0 0.0
  %2758 = vmatprep.subr.mxu0 0.0
  %2759 = vmatpush1.msra.mxu0 0.0
  %2760 = vmatprep.subr.mxu0 0.0
  %2761 = vmatpush1.msra.mxu0 0.0
  %2762 = vmatprep.subr.mxu0 0.0
  %2763 = vmatpush1.msra.mxu0 0.0
  %2764 = vmatprep.subr.mxu0 0.0
  %2765 = vmatpush1.msra.mxu0 0.0
  %2766 = vmatprep.subr.mxu0 0.0
  %2767 = vmatpush1.msra.mxu0 0.0
  %2768 = vmatprep.subr.mxu0 0.0
  %2769 = vmatpush1.msra.mxu0 0.0
  %2770 = vmatprep.subr.mxu0 0.0
  %2771 = vmatpush1.msra.mxu0 0.0
  %2772 = vmatprep.subr.mxu0 0.0
  %2773 = vmatpush1.msra.mxu0 0.0
  %2774 = vmatprep.subr.mxu0 0.0
  %2775 = vmatpush1.msra.mxu0 0.0
  %2776 = vmatprep.subr.mxu0 0.0
  %2777 = vmatpush1.msra.mxu0 0.0
  %2778 = vmatprep.subr.mxu0 0.0
  %2779 = vmatpush1.msra.mxu0 0.0
  %2780 = vmatprep.subr.mxu0 0.0
  %2781 = vmatpush1.msra.mxu0 0.0
  %2782 = vmatprep.subr.mxu0 0.0
  %2783 = vmatpush1.msra.mxu0 0.0
  %2784 = vmatprep.mubr.f32.mxu0 0.0
  %2785 = vmatmul.mubr.f32.gmra.mrb[0].mxu0 %v2718
  %v2786 = vpop.f32.mrb[0].mxu0
  %v2787 = vadd.f32 0.0, %v2786
  %v2788 = vpop.f32.mrb[0].mxu0
  %2789 = vdwg.mxu0
  %v2791 = vrot.slane %v2787, 4
  %v2793 = vadd.f32 %v2066, %v2791
  %v2794 = vxor.u32 %v2793, 2147483648
  %v2795 = vmul.f32 %v2794, 1.442695
  %v2796 = vpow.pop %v2795
  %v2797 = vadd.f32 %v2796, 1.0
  %v2798 = vrcp.pop %v2797
  %v2799 = vmul.f32 1.0, %v2798
  %v2800 = vtanh.pop %v2793
  %v2802 = vrot.slane %v2703, 6
  %v2804 = vmul.f32 %v2799, %v2802
  %2806 = vrot.lane.b32.xlu0 %v2800, 64
  %v2807 = vpop.permute.xlu0 %2806
  %v2809 = vmul.f32 %v2799, %v2807
  %2811 = vrot.lane.b32.xlu0 %v2809, 32
  %v2812 = vpop.permute.xlu0 %2811
  %v2814 = vadd.f32 %v2804, %v2812
  %v2815 = vtanh.pop %v2814
  %2817 = vrot.lane.b32.xlu0 %v2815, 64
  %v2818 = vpop.permute.xlu0 %2817
  %v2820 = vmul.f32 %v2799, %v2818
  %2822 = vrot.lane.b32.xlu0 %v2820, 32
  %v2823 = vpop.permute.xlu0 %2822
  %2825 = vst.msk [vmem:[#allocation2 + $0x8] sm:$0x30] %vm447, %v2823
  %v2826 = vrot.slane %v2820, 4
  %2827 = vrot.lane.b32.xlu0 %v2826, 32
  %v2828 = vpop.permute.xlu0 %2827
  %v2829 = vsel %vm42, %v2828, 0
  %2831 = vmatprep.subr.mxu0 0.0
  %2832 = vmatpush1.msra.mxu0 %v1974
  %2833 = vmatprep.subr.mxu0 0.0
  %2834 = vmatpush1.msra.mxu0 %v1975
  %2835 = vmatprep.subr.mxu0 0.0
  %2836 = vmatpush1.msra.mxu0 %v1976
  %2837 = vmatprep.subr.mxu0 0.0
  %2838 = vmatpush1.msra.mxu0 %v1977
  %2839 = vmatprep.subr.mxu0 0.0
  %2840 = vmatpush1.msra.mxu0 0.0
  %2841 = vmatprep.subr.mxu0 0.0
  %2842 = vmatpush1.msra.mxu0 0.0
  %2843 = vmatprep.subr.mxu0 0.0
  %2844 = vmatpush1.msra.mxu0 0.0
  %2845 = vmatprep.subr.mxu0 0.0
  %2846 = vmatpush1.msra.mxu0 0.0
  %2847 = vmatprep.subr.mxu0 0.0
  %2848 = vmatpush1.msra.mxu0 0.0
  %2849 = vmatprep.subr.mxu0 0.0
  %2850 = vmatpush1.msra.mxu0 0.0
  %2851 = vmatprep.subr.mxu0 0.0
  %2852 = vmatpush1.msra.mxu0 0.0
  %2853 = vmatprep.subr.mxu0 0.0
  %2854 = vmatpush1.msra.mxu0 0.0
  %2855 = vmatprep.subr.mxu0 0.0
  %2856 = vmatpush1.msra.mxu0 0.0
  %2857 = vmatprep.subr.mxu0 0.0
  %2858 = vmatpush1.msra.mxu0 0.0
  %2859 = vmatprep.subr.mxu0 0.0
  %2860 = vmatpush1.msra.mxu0 0.0
  %2861 = vmatprep.subr.mxu0 0.0
  %2862 = vmatpush1.msra.mxu0 0.0
  %2863 = vmatprep.subr.mxu0 0.0
  %2864 = vmatpush1.msra.mxu0 0.0
  %2865 = vmatprep.subr.mxu0 0.0
  %2866 = vmatpush1.msra.mxu0 0.0
  %2867 = vmatprep.subr.mxu0 0.0
  %2868 = vmatpush1.msra.mxu0 0.0
  %2869 = vmatprep.subr.mxu0 0.0
  %2870 = vmatpush1.msra.mxu0 0.0
  %2871 = vmatprep.subr.mxu0 0.0
  %2872 = vmatpush1.msra.mxu0 0.0
  %2873 = vmatprep.subr.mxu0 0.0
  %2874 = vmatpush1.msra.mxu0 0.0
  %2875 = vmatprep.subr.mxu0 0.0
  %2876 = vmatpush1.msra.mxu0 0.0
  %2877 = vmatprep.subr.mxu0 0.0
  %2878 = vmatpush1.msra.mxu0 0.0
  %2879 = vmatprep.subr.mxu0 0.0
  %2880 = vmatpush1.msra.mxu0 0.0
  %2881 = vmatprep.subr.mxu0 0.0
  %2882 = vmatpush1.msra.mxu0 0.0
  %2883 = vmatprep.subr.mxu0 0.0
  %2884 = vmatpush1.msra.mxu0 0.0
  %2885 = vmatprep.subr.mxu0 0.0
  %2886 = vmatpush1.msra.mxu0 0.0
  %2887 = vmatprep.subr.mxu0 0.0
  %2888 = vmatpush1.msra.mxu0 0.0
  %2889 = vmatprep.subr.mxu0 0.0
  %2890 = vmatpush1.msra.mxu0 0.0
  %2891 = vmatprep.subr.mxu0 0.0
  %2892 = vmatpush1.msra.mxu0 0.0
  %2893 = vmatprep.subr.mxu0 0.0
  %2894 = vmatpush1.msra.mxu0 0.0
  %2895 = vmatprep.mubr.f32.mxu0 0.0
  %2896 = vmatmul.mubr.f32.gmra.mrb[0].mxu0 %v2829
  %v2897 = vpop.f32.mrb[0].mxu0
  %v2898 = vadd.f32 0.0, %v2897
  %v2899 = vpop.f32.mrb[0].mxu0
  %2900 = vdwg.mxu0
  %v2902 = vrot.slane %v2898, 2
  %v2904 = vadd.f32 %v2066, %v2902
  %v2905 = vxor.u32 %v2904, 2147483648
  %v2906 = vmul.f32 %v2905, 1.442695
  %v2907 = vpow.pop %v2906
  %v2908 = vadd.f32 %v2907, 1.0
  %v2909 = vrcp.pop %v2908
  %v2910 = vmul.f32 1.0, %v2909
  %v2911 = vtanh.pop %v2904
  %v2913 = vrot.slane %v2814, 6
  %v2915 = vmul.f32 %v2910, %v2913
  %2917 = vrot.lane.b32.xlu0 %v2911, 64
  %v2918 = vpop.permute.xlu0 %2917
  %v2920 = vmul.f32 %v2910, %v2918
  %2922 = vrot.lane.b32.xlu0 %v2920, 32
  %v2923 = vpop.permute.xlu0 %2922
  %v2925 = vadd.f32 %v2915, %v2923
  %v2926 = vtanh.pop %v2925
  %2928 = vrot.lane.b32.xlu0 %v2926, 64
  %v2929 = vpop.permute.xlu0 %2928
  %v2931 = vmul.f32 %v2910, %v2929
  %2933 = vrot.lane.b32.xlu0 %v2931, 32
  %v2934 = vpop.permute.xlu0 %2933
  %2936 = vst.msk [vmem:[#allocation2 + $0x8] sm:$0xc0] %vm559, %v2934
  %s2937 = scalar_lea.vmem %s1, 96
  %v2938 = vld [vmem:[%s2937] sm:$0xff]
  %v2939 = vld [vmem:[%s2937 + $0x8] sm:$0xff]
  %v2940 = vld [vmem:[%s2937 + $0x10] sm:$0xff]
  %v2941 = vld [vmem:[%s2937 + $0x18] sm:$0xff]
  %s2942 = scalar_lea.vmem %s2, 96
  %v2943 = vld [vmem:[%s2942] sm:$0xff]
  %v2944 = vld [vmem:[%s2942 + $0x8] sm:$0xff]
  %v2945 = vld [vmem:[%s2942 + $0x10] sm:$0xff]
  %v2946 = vld [vmem:[%s2942 + $0x18] sm:$0xff]
  %s2947 = scalar_lea.vmem %s3, 3
  %v2948 = vld [vmem:[%s2947] sm:$0x1]
  %v2949 = vld [vmem:[#allocation2] sm:$0xff]
  %v2950 = vld [vmem:[#allocation2 + $0x8] sm:$0xff]
  %v2952 = vlaneseq
  %v2953 = vshrl.u32 %v2952, 7
  %v2954 = vsub.s32 0, %v2953
  %v2955 = vrot.slane %v2948, %v2954
  %v2958 = vsel %vm42, %v2949, 0
  %v2961 = vsel %vm42, %v2950, 0
  %2963 = vmatprep.subr.mxu0 0.0
  %2964 = vmatpush1.msra.mxu0 %v2938
  %2965 = vmatprep.subr.mxu0 0.0
  %2966 = vmatpush1.msra.mxu0 %v2939
  %2967 = vmatprep.subr.mxu0 0.0
  %2968 = vmatpush1.msra.mxu0 %v2940
  %2969 = vmatprep.subr.mxu0 0.0
  %2970 = vmatpush1.msra.mxu0 %v2941
  %2971 = vmatprep.subr.mxu0 0.0
  %2972 = vmatpush1.msra.mxu0 0.0
  %2973 = vmatprep.subr.mxu0 0.0
  %2974 = vmatpush1.msra.mxu0 0.0
  %2975 = vmatprep.subr.mxu0 0.0
  %2976 = vmatpush1.msra.mxu0 0.0
  %2977 = vmatprep.subr.mxu0 0.0
  %2978 = vmatpush1.msra.mxu0 0.0
  %2979 = vmatprep.subr.mxu0 0.0
  %2980 = vmatpush1.msra.mxu0 0.0
  %2981 = vmatprep.subr.mxu0 0.0
  %2982 = vmatpush1.msra.mxu0 0.0
  %2983 = vmatprep.subr.mxu0 0.0
  %2984 = vmatpush1.msra.mxu0 0.0
  %2985 = vmatprep.subr.mxu0 0.0
  %2986 = vmatpush1.msra.mxu0 0.0
  %2987 = vmatprep.subr.mxu0 0.0
  %2988 = vmatpush1.msra.mxu0 0.0
  %2989 = vmatprep.subr.mxu0 0.0
  %2990 = vmatpush1.msra.mxu0 0.0
  %2991 = vmatprep.subr.mxu0 0.0
  %2992 = vmatpush1.msra.mxu0 0.0
  %2993 = vmatprep.subr.mxu0 0.0
  %2994 = vmatpush1.msra.mxu0 0.0
  %2995 = vmatprep.subr.mxu0 0.0
  %2996 = vmatpush1.msra.mxu0 0.0
  %2997 = vmatprep.subr.mxu0 0.0
  %2998 = vmatpush1.msra.mxu0 0.0
  %2999 = vmatprep.subr.mxu0 0.0
  %3000 = vmatpush1.msra.mxu0 0.0
  %3001 = vmatprep.subr.mxu0 0.0
  %3002 = vmatpush1.msra.mxu0 0.0
  %3003 = vmatprep.subr.mxu0 0.0
  %3004 = vmatpush1.msra.mxu0 0.0
  %3005 = vmatprep.subr.mxu0 0.0
  %3006 = vmatpush1.msra.mxu0 0.0
  %3007 = vmatprep.subr.mxu0 0.0
  %3008 = vmatpush1.msra.mxu0 0.0
  %3009 = vmatprep.subr.mxu0 0.0
  %3010 = vmatpush1.msra.mxu0 0.0
  %3011 = vmatprep.subr.mxu0 0.0
  %3012 = vmatpush1.msra.mxu0 0.0
  %3013 = vmatprep.subr.mxu0 0.0
  %3014 = vmatpush1.msra.mxu0 0.0
  %3015 = vmatprep.subr.mxu0 0.0
  %3016 = vmatpush1.msra.mxu0 0.0
  %3017 = vmatprep.subr.mxu0 0.0
  %3018 = vmatpush1.msra.mxu0 0.0
  %3019 = vmatprep.subr.mxu0 0.0
  %3020 = vmatpush1.msra.mxu0 0.0
  %3021 = vmatprep.subr.mxu0 0.0
  %3022 = vmatpush1.msra.mxu0 0.0
  %3023 = vmatprep.subr.mxu0 0.0
  %3024 = vmatpush1.msra.mxu0 0.0
  %3025 = vmatprep.subr.mxu0 0.0
  %3026 = vmatpush1.msra.mxu0 0.0
  %3027 = vmatprep.mubr.f32.mxu0 0.0
  %3028 = vmatmul.mubr.f32.gmra.mrb[0].mxu0 %v2958
  %v3029 = vpop.f32.mrb[0].mxu0
  %v3030 = vadd.f32 %v2955, %v3029
  %v3031 = vpop.f32.mrb[0].mxu0
  %3032 = vmatprep.mubr.f32.mxu0 0.0
  %3033 = vmatmul.mubr.f32.gmra.mrb[0].mxu0 %v2961
  %v3034 = vpop.f32.mrb[0].mxu0
  %v3035 = vadd.f32 %v2955, %v3034
  %v3036 = vpop.f32.mrb[0].mxu0
  %3037 = vdwg.mxu0
  %3038 = vmatprep.subr.mxu0 0.0
  %3039 = vmatpush1.msra.mxu0 %v2943
  %3040 = vmatprep.subr.mxu0 0.0
  %3041 = vmatpush1.msra.mxu0 %v2944
  %3042 = vmatprep.subr.mxu0 0.0
  %3043 = vmatpush1.msra.mxu0 %v2945
  %3044 = vmatprep.subr.mxu0 0.0
  %3045 = vmatpush1.msra.mxu0 %v2946
  %3046 = vmatprep.subr.mxu0 0.0
  %3047 = vmatpush1.msra.mxu0 0.0
  %3048 = vmatprep.subr.mxu0 0.0
  %3049 = vmatpush1.msra.mxu0 0.0
  %3050 = vmatprep.subr.mxu0 0.0
  %3051 = vmatpush1.msra.mxu0 0.0
  %3052 = vmatprep.subr.mxu0 0.0
  %3053 = vmatpush1.msra.mxu0 0.0
  %3054 = vmatprep.subr.mxu0 0.0
  %3055 = vmatpush1.msra.mxu0 0.0
  %3056 = vmatprep.subr.mxu0 0.0
  %3057 = vmatpush1.msra.mxu0 0.0
  %3058 = vmatprep.subr.mxu0 0.0
  %3059 = vmatpush1.msra.mxu0 0.0
  %3060 = vmatprep.subr.mxu0 0.0
  %3061 = vmatpush1.msra.mxu0 0.0
  %3062 = vmatprep.subr.mxu0 0.0
  %3063 = vmatpush1.msra.mxu0 0.0
  %3064 = vmatprep.subr.mxu0 0.0
  %3065 = vmatpush1.msra.mxu0 0.0
  %3066 = vmatprep.subr.mxu0 0.0
  %3067 = vmatpush1.msra.mxu0 0.0
  %3068 = vmatprep.subr.mxu0 0.0
  %3069 = vmatpush1.msra.mxu0 0.0
  %3070 = vmatprep.subr.mxu0 0.0
  %3071 = vmatpush1.msra.mxu0 0.0
  %3072 = vmatprep.subr.mxu0 0.0
  %3073 = vmatpush1.msra.mxu0 0.0
  %3074 = vmatprep.subr.mxu0 0.0
  %3075 = vmatpush1.msra.mxu0 0.0
  %3076 = vmatprep.subr.mxu0 0.0
  %3077 = vmatpush1.msra.mxu0 0.0
  %3078 = vmatprep.subr.mxu0 0.0
  %3079 = vmatpush1.msra.mxu0 0.0
  %3080 = vmatprep.subr.mxu0 0.0
  %3081 = vmatpush1.msra.mxu0 0.0
  %3082 = vmatprep.subr.mxu0 0.0
  %3083 = vmatpush1.msra.mxu0 0.0
  %3084 = vmatprep.subr.mxu0 0.0
  %3085 = vmatpush1.msra.mxu0 0.0
  %3086 = vmatprep.subr.mxu0 0.0
  %3087 = vmatpush1.msra.mxu0 0.0
  %3088 = vmatprep.subr.mxu0 0.0
  %3089 = vmatpush1.msra.mxu0 0.0
  %3090 = vmatprep.subr.mxu0 0.0
  %3091 = vmatpush1.msra.mxu0 0.0
  %3092 = vmatprep.subr.mxu0 0.0
  %3093 = vmatpush1.msra.mxu0 0.0
  %3094 = vmatprep.subr.mxu0 0.0
  %3095 = vmatpush1.msra.mxu0 0.0
  %3096 = vmatprep.subr.mxu0 0.0
  %3097 = vmatpush1.msra.mxu0 0.0
  %3098 = vmatprep.subr.mxu0 0.0
  %3099 = vmatpush1.msra.mxu0 0.0
  %3100 = vmatprep.subr.mxu0 0.0
  %3101 = vmatpush1.msra.mxu0 0.0
  %3102 = vmatprep.mubr.f32.mxu0 0.0
  %3103 = vmatmul.mubr.f32.gmra.mrb[0].mxu0 %v125
  %v3104 = vpop.f32.mrb[0].mxu0
  %v3105 = vadd.f32 0.0, %v3104
  %v3106 = vpop.f32.mrb[0].mxu0
  %3107 = vdwg.mxu0
  %v3108 = vadd.f32 %v3030, %v3105
  %v3109 = vxor.u32 %v3108, 2147483648
  %v3110 = vmul.f32 %v3109, 1.442695
  %v3111 = vpow.pop %v3110
  %v3112 = vadd.f32 %v3111, 1.0
  %v3113 = vrcp.pop %v3112
  %v3114 = vmul.f32 1.0, %v3113
  %v3115 = vtanh.pop %v3108
  %v3116 = vmul.f32 %v3114, 0.0
  %3118 = vrot.lane.b32.xlu0 %v3115, 64
  %v3119 = vpop.permute.xlu0 %3118
  %v3121 = vmul.f32 %v3114, %v3119
  %3123 = vrot.lane.b32.xlu0 %v3121, 32
  %v3124 = vpop.permute.xlu0 %3123
  %v3126 = vadd.f32 %v3116, %v3124
  %v3127 = vtanh.pop %v3126
  %3129 = vrot.lane.b32.xlu0 %v3127, 64
  %v3130 = vpop.permute.xlu0 %3129
  %v3132 = vmul.f32 %v3114, %v3130
  %3134 = vrot.lane.b32.xlu0 %v3132, 32
  %v3135 = vpop.permute.xlu0 %3134
  %vm3137 = vcmask 254977
  %3138 = vst.msk [vmem:[#allocation3 - $0x1] sm:$0x2] %vm3137, %v3135
  %v3139 = vsel %vm42, %v3135, 0
  %3141 = vmatprep.subr.mxu0 0.0
  %3142 = vmatpush1.msra.mxu0 %v2943
  %3143 = vmatprep.subr.mxu0 0.0
  %3144 = vmatpush1.msra.mxu0 %v2944
  %3145 = vmatprep.subr.mxu0 0.0
  %3146 = vmatpush1.msra.mxu0 %v2945
  %3147 = vmatprep.subr.mxu0 0.0
  %3148 = vmatpush1.msra.mxu0 %v2946
  %3149 = vmatprep.subr.mxu0 0.0
  %3150 = vmatpush1.msra.mxu0 0.0
  %3151 = vmatprep.subr.mxu0 0.0
  %3152 = vmatpush1.msra.mxu0 0.0
  %3153 = vmatprep.subr.mxu0 0.0
  %3154 = vmatpush1.msra.mxu0 0.0
  %3155 = vmatprep.subr.mxu0 0.0
  %3156 = vmatpush1.msra.mxu0 0.0
  %3157 = vmatprep.subr.mxu0 0.0
  %3158 = vmatpush1.msra.mxu0 0.0
  %3159 = vmatprep.subr.mxu0 0.0
  %3160 = vmatpush1.msra.mxu0 0.0
  %3161 = vmatprep.subr.mxu0 0.0
  %3162 = vmatpush1.msra.mxu0 0.0
  %3163 = vmatprep.subr.mxu0 0.0
  %3164 = vmatpush1.msra.mxu0 0.0
  %3165 = vmatprep.subr.mxu0 0.0
  %3166 = vmatpush1.msra.mxu0 0.0
  %3167 = vmatprep.subr.mxu0 0.0
  %3168 = vmatpush1.msra.mxu0 0.0
  %3169 = vmatprep.subr.mxu0 0.0
  %3170 = vmatpush1.msra.mxu0 0.0
  %3171 = vmatprep.subr.mxu0 0.0
  %3172 = vmatpush1.msra.mxu0 0.0
  %3173 = vmatprep.subr.mxu0 0.0
  %3174 = vmatpush1.msra.mxu0 0.0
  %3175 = vmatprep.subr.mxu0 0.0
  %3176 = vmatpush1.msra.mxu0 0.0
  %3177 = vmatprep.subr.mxu0 0.0
  %3178 = vmatpush1.msra.mxu0 0.0
  %3179 = vmatprep.subr.mxu0 0.0
  %3180 = vmatpush1.msra.mxu0 0.0
  %3181 = vmatprep.subr.mxu0 0.0
  %3182 = vmatpush1.msra.mxu0 0.0
  %3183 = vmatprep.subr.mxu0 0.0
  %3184 = vmatpush1.msra.mxu0 0.0
  %3185 = vmatprep.subr.mxu0 0.0
  %3186 = vmatpush1.msra.mxu0 0.0
  %3187 = vmatprep.subr.mxu0 0.0
  %3188 = vmatpush1.msra.mxu0 0.0
  %3189 = vmatprep.subr.mxu0 0.0
  %3190 = vmatpush1.msra.mxu0 0.0
  %3191 = vmatprep.subr.mxu0 0.0
  %3192 = vmatpush1.msra.mxu0 0.0
  %3193 = vmatprep.subr.mxu0 0.0
  %3194 = vmatpush1.msra.mxu0 0.0
  %3195 = vmatprep.subr.mxu0 0.0
  %3196 = vmatpush1.msra.mxu0 0.0
  %3197 = vmatprep.subr.mxu0 0.0
  %3198 = vmatpush1.msra.mxu0 0.0
  %3199 = vmatprep.subr.mxu0 0.0
  %3200 = vmatpush1.msra.mxu0 0.0
  %3201 = vmatprep.subr.mxu0 0.0
  %3202 = vmatpush1.msra.mxu0 0.0
  %3203 = vmatprep.subr.mxu0 0.0
  %3204 = vmatpush1.msra.mxu0 0.0
  %3205 = vmatprep.mubr.f32.mxu0 0.0
  %3206 = vmatmul.mubr.f32.gmra.mrb[0].mxu0 %v3139
  %v3207 = vpop.f32.mrb[0].mxu0
  %v3208 = vadd.f32 0.0, %v3207
  %v3209 = vpop.f32.mrb[0].mxu0
  %3210 = vdwg.mxu0
  %v3212 = vrot.slane %v3208, 6
  %v3214 = vadd.f32 %v3030, %v3212
  %v3215 = vxor.u32 %v3214, 2147483648
  %v3216 = vmul.f32 %v3215, 1.442695
  %v3217 = vpow.pop %v3216
  %v3218 = vadd.f32 %v3217, 1.0
  %v3219 = vrcp.pop %v3218
  %v3220 = vmul.f32 1.0, %v3219
  %v3221 = vtanh.pop %v3214
  %v3223 = vrot.slane %v3126, 6
  %v3225 = vmul.f32 %v3220, %v3223
  %3227 = vrot.lane.b32.xlu0 %v3221, 64
  %v3228 = vpop.permute.xlu0 %3227
  %v3230 = vmul.f32 %v3220, %v3228
  %3232 = vrot.lane.b32.xlu0 %v3230, 32
  %v3233 = vpop.permute.xlu0 %3232
  %v3235 = vadd.f32 %v3225, %v3233
  %v3236 = vtanh.pop %v3235
  %3238 = vrot.lane.b32.xlu0 %v3236, 64
  %v3239 = vpop.permute.xlu0 %3238
  %v3241 = vmul.f32 %v3220, %v3239
  %3243 = vrot.lane.b32.xlu0 %v3241, 32
  %v3244 = vpop.permute.xlu0 %3243
  %vm3246 = vcmask 257027
  %3247 = vst.msk [vmem:[#allocation3 - $0x2] sm:$0x8] %vm3246, %v3244
  %v3248 = vrot.slane %v3241, 2
  %3249 = vrot.lane.b32.xlu0 %v3248, 32
  %v3250 = vpop.permute.xlu0 %3249
  %v3251 = vsel %vm42, %v3250, 0
  %3253 = vmatprep.subr.mxu0 0.0
  %3254 = vmatpush1.msra.mxu0 %v2943
  %3255 = vmatprep.subr.mxu0 0.0
  %3256 = vmatpush1.msra.mxu0 %v2944
  %3257 = vmatprep.subr.mxu0 0.0
  %3258 = vmatpush1.msra.mxu0 %v2945
  %3259 = vmatprep.subr.mxu0 0.0
  %3260 = vmatpush1.msra.mxu0 %v2946
  %3261 = vmatprep.subr.mxu0 0.0
  %3262 = vmatpush1.msra.mxu0 0.0
  %3263 = vmatprep.subr.mxu0 0.0
  %3264 = vmatpush1.msra.mxu0 0.0
  %3265 = vmatprep.subr.mxu0 0.0
  %3266 = vmatpush1.msra.mxu0 0.0
  %3267 = vmatprep.subr.mxu0 0.0
  %3268 = vmatpush1.msra.mxu0 0.0
  %3269 = vmatprep.subr.mxu0 0.0
  %3270 = vmatpush1.msra.mxu0 0.0
  %3271 = vmatprep.subr.mxu0 0.0
  %3272 = vmatpush1.msra.mxu0 0.0
  %3273 = vmatprep.subr.mxu0 0.0
  %3274 = vmatpush1.msra.mxu0 0.0
  %3275 = vmatprep.subr.mxu0 0.0
  %3276 = vmatpush1.msra.mxu0 0.0
  %3277 = vmatprep.subr.mxu0 0.0
  %3278 = vmatpush1.msra.mxu0 0.0
  %3279 = vmatprep.subr.mxu0 0.0
  %3280 = vmatpush1.msra.mxu0 0.0
  %3281 = vmatprep.subr.mxu0 0.0
  %3282 = vmatpush1.msra.mxu0 0.0
  %3283 = vmatprep.subr.mxu0 0.0
  %3284 = vmatpush1.msra.mxu0 0.0
  %3285 = vmatprep.subr.mxu0 0.0
  %3286 = vmatpush1.msra.mxu0 0.0
  %3287 = vmatprep.subr.mxu0 0.0
  %3288 = vmatpush1.msra.mxu0 0.0
  %3289 = vmatprep.subr.mxu0 0.0
  %3290 = vmatpush1.msra.mxu0 0.0
  %3291 = vmatprep.subr.mxu0 0.0
  %3292 = vmatpush1.msra.mxu0 0.0
  %3293 = vmatprep.subr.mxu0 0.0
  %3294 = vmatpush1.msra.mxu0 0.0
  %3295 = vmatprep.subr.mxu0 0.0
  %3296 = vmatpush1.msra.mxu0 0.0
  %3297 = vmatprep.subr.mxu0 0.0
  %3298 = vmatpush1.msra.mxu0 0.0
  %3299 = vmatprep.subr.mxu0 0.0
  %3300 = vmatpush1.msra.mxu0 0.0
  %3301 = vmatprep.subr.mxu0 0.0
  %3302 = vmatpush1.msra.mxu0 0.0
  %3303 = vmatprep.subr.mxu0 0.0
  %3304 = vmatpush1.msra.mxu0 0.0
  %3305 = vmatprep.subr.mxu0 0.0
  %3306 = vmatpush1.msra.mxu0 0.0
  %3307 = vmatprep.subr.mxu0 0.0
  %3308 = vmatpush1.msra.mxu0 0.0
  %3309 = vmatprep.subr.mxu0 0.0
  %3310 = vmatpush1.msra.mxu0 0.0
  %3311 = vmatprep.subr.mxu0 0.0
  %3312 = vmatpush1.msra.mxu0 0.0
  %3313 = vmatprep.subr.mxu0 0.0
  %3314 = vmatpush1.msra.mxu0 0.0
  %3315 = vmatprep.subr.mxu0 0.0
  %3316 = vmatpush1.msra.mxu0 0.0
  %3317 = vmatprep.mubr.f32.mxu0 0.0
  %3318 = vmatmul.mubr.f32.gmra.mrb[0].mxu0 %v3251
  %v3319 = vpop.f32.mrb[0].mxu0
  %v3320 = vadd.f32 0.0, %v3319
  %v3321 = vpop.f32.mrb[0].mxu0
  %3322 = vdwg.mxu0
  %v3324 = vrot.slane %v3320, 4
  %v3326 = vadd.f32 %v3030, %v3324
  %v3327 = vxor.u32 %v3326, 2147483648
  %v3328 = vmul.f32 %v3327, 1.442695
  %v3329 = vpow.pop %v3328
  %v3330 = vadd.f32 %v3329, 1.0
  %v3331 = vrcp.pop %v3330
  %v3332 = vmul.f32 1.0, %v3331
  %v3333 = vtanh.pop %v3326
  %v3335 = vrot.slane %v3235, 6
  %v3337 = vmul.f32 %v3332, %v3335
  %3339 = vrot.lane.b32.xlu0 %v3333, 64
  %v3340 = vpop.permute.xlu0 %3339
  %v3342 = vmul.f32 %v3332, %v3340
  %3344 = vrot.lane.b32.xlu0 %v3342, 32
  %v3345 = vpop.permute.xlu0 %3344
  %v3347 = vadd.f32 %v3337, %v3345
  %v3348 = vtanh.pop %v3347
  %3350 = vrot.lane.b32.xlu0 %v3348, 64
  %v3351 = vpop.permute.xlu0 %3350
  %v3353 = vmul.f32 %v3332, %v3351
  %3355 = vrot.lane.b32.xlu0 %v3353, 32
  %v3356 = vpop.permute.xlu0 %3355
  %vm3358 = vcmask 259077
  %3359 = vst.msk [vmem:[#allocation3 - $0x3] sm:$0x20] %vm3358, %v3356
  %v3360 = vrot.slane %v3353, 4
  %3361 = vrot.lane.b32.xlu0 %v3360, 32
  %v3362 = vpop.permute.xlu0 %3361
  %v3363 = vsel %vm42, %v3362, 0
  %3365 = vmatprep.subr.mxu0 0.0
  %3366 = vmatpush1.msra.mxu0 %v2943
  %3367 = vmatprep.subr.mxu0 0.0
  %3368 = vmatpush1.msra.mxu0 %v2944
  %3369 = vmatprep.subr.mxu0 0.0
  %3370 = vmatpush1.msra.mxu0 %v2945
  %3371 = vmatprep.subr.mxu0 0.0
  %3372 = vmatpush1.msra.mxu0 %v2946
  %3373 = vmatprep.subr.mxu0 0.0
  %3374 = vmatpush1.msra.mxu0 0.0
  %3375 = vmatprep.subr.mxu0 0.0
  %3376 = vmatpush1.msra.mxu0 0.0
  %3377 = vmatprep.subr.mxu0 0.0
  %3378 = vmatpush1.msra.mxu0 0.0
  %3379 = vmatprep.subr.mxu0 0.0
  %3380 = vmatpush1.msra.mxu0 0.0
  %3381 = vmatprep.subr.mxu0 0.0
  %3382 = vmatpush1.msra.mxu0 0.0
  %3383 = vmatprep.subr.mxu0 0.0
  %3384 = vmatpush1.msra.mxu0 0.0
  %3385 = vmatprep.subr.mxu0 0.0
  %3386 = vmatpush1.msra.mxu0 0.0
  %3387 = vmatprep.subr.mxu0 0.0
  %3388 = vmatpush1.msra.mxu0 0.0
  %3389 = vmatprep.subr.mxu0 0.0
  %3390 = vmatpush1.msra.mxu0 0.0
  %3391 = vmatprep.subr.mxu0 0.0
  %3392 = vmatpush1.msra.mxu0 0.0
  %3393 = vmatprep.subr.mxu0 0.0
  %3394 = vmatpush1.msra.mxu0 0.0
  %3395 = vmatprep.subr.mxu0 0.0
  %3396 = vmatpush1.msra.mxu0 0.0
  %3397 = vmatprep.subr.mxu0 0.0
  %3398 = vmatpush1.msra.mxu0 0.0
  %3399 = vmatprep.subr.mxu0 0.0
  %3400 = vmatpush1.msra.mxu0 0.0
  %3401 = vmatprep.subr.mxu0 0.0
  %3402 = vmatpush1.msra.mxu0 0.0
  %3403 = vmatprep.subr.mxu0 0.0
  %3404 = vmatpush1.msra.mxu0 0.0
  %3405 = vmatprep.subr.mxu0 0.0
  %3406 = vmatpush1.msra.mxu0 0.0
  %3407 = vmatprep.subr.mxu0 0.0
  %3408 = vmatpush1.msra.mxu0 0.0
  %3409 = vmatprep.subr.mxu0 0.0
  %3410 = vmatpush1.msra.mxu0 0.0
  %3411 = vmatprep.subr.mxu0 0.0
  %3412 = vmatpush1.msra.mxu0 0.0
  %3413 = vmatprep.subr.mxu0 0.0
  %3414 = vmatpush1.msra.mxu0 0.0
  %3415 = vmatprep.subr.mxu0 0.0
  %3416 = vmatpush1.msra.mxu0 0.0
  %3417 = vmatprep.subr.mxu0 0.0
  %3418 = vmatpush1.msra.mxu0 0.0
  %3419 = vmatprep.subr.mxu0 0.0
  %3420 = vmatpush1.msra.mxu0 0.0
  %3421 = vmatprep.subr.mxu0 0.0
  %3422 = vmatpush1.msra.mxu0 0.0
  %3423 = vmatprep.subr.mxu0 0.0
  %3424 = vmatpush1.msra.mxu0 0.0
  %3425 = vmatprep.subr.mxu0 0.0
  %3426 = vmatpush1.msra.mxu0 0.0
  %3427 = vmatprep.subr.mxu0 0.0
  %3428 = vmatpush1.msra.mxu0 0.0
  %3429 = vmatprep.mubr.f32.mxu0 0.0
  %3430 = vmatmul.mubr.f32.gmra.mrb[0].mxu0 %v3363
  %v3431 = vpop.f32.mrb[0].mxu0
  %v3432 = vadd.f32 0.0, %v3431
  %v3433 = vpop.f32.mrb[0].mxu0
  %3434 = vdwg.mxu0
  %v3436 = vrot.slane %v3432, 2
  %v3438 = vadd.f32 %v3030, %v3436
  %v3439 = vxor.u32 %v3438, 2147483648
  %v3440 = vmul.f32 %v3439, 1.442695
  %v3441 = vpow.pop %v3440
  %v3442 = vadd.f32 %v3441, 1.0
  %v3443 = vrcp.pop %v3442
  %v3444 = vmul.f32 1.0, %v3443
  %v3445 = vtanh.pop %v3438
  %v3447 = vrot.slane %v3347, 6
  %v3449 = vmul.f32 %v3444, %v3447
  %3451 = vrot.lane.b32.xlu0 %v3445, 64
  %v3452 = vpop.permute.xlu0 %3451
  %v3454 = vmul.f32 %v3444, %v3452
  %3456 = vrot.lane.b32.xlu0 %v3454, 32
  %v3457 = vpop.permute.xlu0 %3456
  %v3459 = vadd.f32 %v3449, %v3457
  %v3460 = vtanh.pop %v3459
  %3462 = vrot.lane.b32.xlu0 %v3460, 64
  %v3463 = vpop.permute.xlu0 %3462
  %v3465 = vmul.f32 %v3444, %v3463
  %3467 = vrot.lane.b32.xlu0 %v3465, 32
  %v3468 = vpop.permute.xlu0 %3467
  %vm3470 = vcmask 261127
  %3471 = vst.msk [vmem:[#allocation3 - $0x4] sm:$0x80] %vm3470, %v3468
  %v3472 = vrot.slane %v3465, 6
  %3473 = vrot.lane.b32.xlu0 %v3472, 32
  %v3474 = vpop.permute.xlu0 %3473
  %v3475 = vsel %vm42, %v3474, 0
  %3477 = vmatprep.subr.mxu0 0.0
  %3478 = vmatpush1.msra.mxu0 %v2943
  %3479 = vmatprep.subr.mxu0 0.0
  %3480 = vmatpush1.msra.mxu0 %v2944
  %3481 = vmatprep.subr.mxu0 0.0
  %3482 = vmatpush1.msra.mxu0 %v2945
  %3483 = vmatprep.subr.mxu0 0.0
  %3484 = vmatpush1.msra.mxu0 %v2946
  %3485 = vmatprep.subr.mxu0 0.0
  %3486 = vmatpush1.msra.mxu0 0.0
  %3487 = vmatprep.subr.mxu0 0.0
  %3488 = vmatpush1.msra.mxu0 0.0
  %3489 = vmatprep.subr.mxu0 0.0
  %3490 = vmatpush1.msra.mxu0 0.0
  %3491 = vmatprep.subr.mxu0 0.0
  %3492 = vmatpush1.msra.mxu0 0.0
  %3493 = vmatprep.subr.mxu0 0.0
  %3494 = vmatpush1.msra.mxu0 0.0
  %3495 = vmatprep.subr.mxu0 0.0
  %3496 = vmatpush1.msra.mxu0 0.0
  %3497 = vmatprep.subr.mxu0 0.0
  %3498 = vmatpush1.msra.mxu0 0.0
  %3499 = vmatprep.subr.mxu0 0.0
  %3500 = vmatpush1.msra.mxu0 0.0
  %3501 = vmatprep.subr.mxu0 0.0
  %3502 = vmatpush1.msra.mxu0 0.0
  %3503 = vmatprep.subr.mxu0 0.0
  %3504 = vmatpush1.msra.mxu0 0.0
  %3505 = vmatprep.subr.mxu0 0.0
  %3506 = vmatpush1.msra.mxu0 0.0
  %3507 = vmatprep.subr.mxu0 0.0
  %3508 = vmatpush1.msra.mxu0 0.0
  %3509 = vmatprep.subr.mxu0 0.0
  %3510 = vmatpush1.msra.mxu0 0.0
  %3511 = vmatprep.subr.mxu0 0.0
  %3512 = vmatpush1.msra.mxu0 0.0
  %3513 = vmatprep.subr.mxu0 0.0
  %3514 = vmatpush1.msra.mxu0 0.0
  %3515 = vmatprep.subr.mxu0 0.0
  %3516 = vmatpush1.msra.mxu0 0.0
  %3517 = vmatprep.subr.mxu0 0.0
  %3518 = vmatpush1.msra.mxu0 0.0
  %3519 = vmatprep.subr.mxu0 0.0
  %3520 = vmatpush1.msra.mxu0 0.0
  %3521 = vmatprep.subr.mxu0 0.0
  %3522 = vmatpush1.msra.mxu0 0.0
  %3523 = vmatprep.subr.mxu0 0.0
  %3524 = vmatpush1.msra.mxu0 0.0
  %3525 = vmatprep.subr.mxu0 0.0
  %3526 = vmatpush1.msra.mxu0 0.0
  %3527 = vmatprep.subr.mxu0 0.0
  %3528 = vmatpush1.msra.mxu0 0.0
  %3529 = vmatprep.subr.mxu0 0.0
  %3530 = vmatpush1.msra.mxu0 0.0
  %3531 = vmatprep.subr.mxu0 0.0
  %3532 = vmatpush1.msra.mxu0 0.0
  %3533 = vmatprep.subr.mxu0 0.0
  %3534 = vmatpush1.msra.mxu0 0.0
  %3535 = vmatprep.subr.mxu0 0.0
  %3536 = vmatpush1.msra.mxu0 0.0
  %3537 = vmatprep.subr.mxu0 0.0
  %3538 = vmatpush1.msra.mxu0 0.0
  %3539 = vmatprep.subr.mxu0 0.0
  %3540 = vmatpush1.msra.mxu0 0.0
  %3541 = vmatprep.mubr.f32.mxu0 0.0
  %3542 = vmatmul.mubr.f32.gmra.mrb[0].mxu0 %v3475
  %v3543 = vpop.f32.mrb[0].mxu0
  %v3544 = vadd.f32 0.0, %v3543
  %v3545 = vpop.f32.mrb[0].mxu0
  %3546 = vdwg.mxu0
  %v3547 = vadd.f32 %v3035, %v3544
  %v3548 = vxor.u32 %v3547, 2147483648
  %v3549 = vmul.f32 %v3548, 1.442695
  %v3550 = vpow.pop %v3549
  %v3551 = vadd.f32 %v3550, 1.0
  %v3552 = vrcp.pop %v3551
  %v3553 = vmul.f32 1.0, %v3552
  %v3554 = vtanh.pop %v3547
  %v3556 = vrot.slane %v3459, 6
  %v3558 = vmul.f32 %v3553, %v3556
  %3560 = vrot.lane.b32.xlu0 %v3554, 64
  %v3561 = vpop.permute.xlu0 %3560
  %v3563 = vmul.f32 %v3553, %v3561
  %3565 = vrot.lane.b32.xlu0 %v3563, 32
  %v3566 = vpop.permute.xlu0 %3565
  %v3568 = vadd.f32 %v3558, %v3566
  %v3569 = vtanh.pop %v3568
  %3571 = vrot.lane.b32.xlu0 %v3569, 64
  %v3572 = vpop.permute.xlu0 %3571
  %v3574 = vmul.f32 %v3553, %v3572
  %3576 = vrot.lane.b32.xlu0 %v3574, 32
  %v3577 = vpop.permute.xlu0 %3576
  %3579 = vst.msk [vmem:[#allocation3 + $0x3] sm:$0x2] %vm3137, %v3577
  %v3580 = vsel %vm42, %v3577, 0
  %3582 = vmatprep.subr.mxu0 0.0
  %3583 = vmatpush1.msra.mxu0 %v2943
  %3584 = vmatprep.subr.mxu0 0.0
  %3585 = vmatpush1.msra.mxu0 %v2944
  %3586 = vmatprep.subr.mxu0 0.0
  %3587 = vmatpush1.msra.mxu0 %v2945
  %3588 = vmatprep.subr.mxu0 0.0
  %3589 = vmatpush1.msra.mxu0 %v2946
  %3590 = vmatprep.subr.mxu0 0.0
  %3591 = vmatpush1.msra.mxu0 0.0
  %3592 = vmatprep.subr.mxu0 0.0
  %3593 = vmatpush1.msra.mxu0 0.0
  %3594 = vmatprep.subr.mxu0 0.0
  %3595 = vmatpush1.msra.mxu0 0.0
  %3596 = vmatprep.subr.mxu0 0.0
  %3597 = vmatpush1.msra.mxu0 0.0
  %3598 = vmatprep.subr.mxu0 0.0
  %3599 = vmatpush1.msra.mxu0 0.0
  %3600 = vmatprep.subr.mxu0 0.0
  %3601 = vmatpush1.msra.mxu0 0.0
  %3602 = vmatprep.subr.mxu0 0.0
  %3603 = vmatpush1.msra.mxu0 0.0
  %3604 = vmatprep.subr.mxu0 0.0
  %3605 = vmatpush1.msra.mxu0 0.0
  %3606 = vmatprep.subr.mxu0 0.0
  %3607 = vmatpush1.msra.mxu0 0.0
  %3608 = vmatprep.subr.mxu0 0.0
  %3609 = vmatpush1.msra.mxu0 0.0
  %3610 = vmatprep.subr.mxu0 0.0
  %3611 = vmatpush1.msra.mxu0 0.0
  %3612 = vmatprep.subr.mxu0 0.0
  %3613 = vmatpush1.msra.mxu0 0.0
  %3614 = vmatprep.subr.mxu0 0.0
  %3615 = vmatpush1.msra.mxu0 0.0
  %3616 = vmatprep.subr.mxu0 0.0
  %3617 = vmatpush1.msra.mxu0 0.0
  %3618 = vmatprep.subr.mxu0 0.0
  %3619 = vmatpush1.msra.mxu0 0.0
  %3620 = vmatprep.subr.mxu0 0.0
  %3621 = vmatpush1.msra.mxu0 0.0
  %3622 = vmatprep.subr.mxu0 0.0
  %3623 = vmatpush1.msra.mxu0 0.0
  %3624 = vmatprep.subr.mxu0 0.0
  %3625 = vmatpush1.msra.mxu0 0.0
  %3626 = vmatprep.subr.mxu0 0.0
  %3627 = vmatpush1.msra.mxu0 0.0
  %3628 = vmatprep.subr.mxu0 0.0
  %3629 = vmatpush1.msra.mxu0 0.0
  %3630 = vmatprep.subr.mxu0 0.0
  %3631 = vmatpush1.msra.mxu0 0.0
  %3632 = vmatprep.subr.mxu0 0.0
  %3633 = vmatpush1.msra.mxu0 0.0
  %3634 = vmatprep.subr.mxu0 0.0
  %3635 = vmatpush1.msra.mxu0 0.0
  %3636 = vmatprep.subr.mxu0 0.0
  %3637 = vmatpush1.msra.mxu0 0.0
  %3638 = vmatprep.subr.mxu0 0.0
  %3639 = vmatpush1.msra.mxu0 0.0
  %3640 = vmatprep.subr.mxu0 0.0
  %3641 = vmatpush1.msra.mxu0 0.0
  %3642 = vmatprep.subr.mxu0 0.0
  %3643 = vmatpush1.msra.mxu0 0.0
  %3644 = vmatprep.subr.mxu0 0.0
  %3645 = vmatpush1.msra.mxu0 0.0
  %3646 = vmatprep.mubr.f32.mxu0 0.0
  %3647 = vmatmul.mubr.f32.gmra.mrb[0].mxu0 %v3580
  %v3648 = vpop.f32.mrb[0].mxu0
  %v3649 = vadd.f32 0.0, %v3648
  %v3650 = vpop.f32.mrb[0].mxu0
  %3651 = vdwg.mxu0
  %v3653 = vrot.slane %v3649, 6
  %v3655 = vadd.f32 %v3035, %v3653
  %v3656 = vxor.u32 %v3655, 2147483648
  %v3657 = vmul.f32 %v3656, 1.442695
  %v3658 = vpow.pop %v3657
  %v3659 = vadd.f32 %v3658, 1.0
  %v3660 = vrcp.pop %v3659
  %v3661 = vmul.f32 1.0, %v3660
  %v3662 = vtanh.pop %v3655
  %v3664 = vrot.slane %v3568, 6
  %v3666 = vmul.f32 %v3661, %v3664
  %3668 = vrot.lane.b32.xlu0 %v3662, 64
  %v3669 = vpop.permute.xlu0 %3668
  %v3671 = vmul.f32 %v3661, %v3669
  %3673 = vrot.lane.b32.xlu0 %v3671, 32
  %v3674 = vpop.permute.xlu0 %3673
  %v3676 = vadd.f32 %v3666, %v3674
  %v3677 = vtanh.pop %v3676
  %3679 = vrot.lane.b32.xlu0 %v3677, 64
  %v3680 = vpop.permute.xlu0 %3679
  %v3682 = vmul.f32 %v3661, %v3680
  %3684 = vrot.lane.b32.xlu0 %v3682, 32
  %v3685 = vpop.permute.xlu0 %3684
  %3687 = vst.msk [vmem:[#allocation3 + $0x2] sm:$0x8] %vm3246, %v3685
  %v3688 = vrot.slane %v3682, 2
  %3689 = vrot.lane.b32.xlu0 %v3688, 32
  %v3690 = vpop.permute.xlu0 %3689
  %v3691 = vsel %vm42, %v3690, 0
  %3693 = vmatprep.subr.mxu0 0.0
  %3694 = vmatpush1.msra.mxu0 %v2943
  %3695 = vmatprep.subr.mxu0 0.0
  %3696 = vmatpush1.msra.mxu0 %v2944
  %3697 = vmatprep.subr.mxu0 0.0
  %3698 = vmatpush1.msra.mxu0 %v2945
  %3699 = vmatprep.subr.mxu0 0.0
  %3700 = vmatpush1.msra.mxu0 %v2946
  %3701 = vmatprep.subr.mxu0 0.0
  %3702 = vmatpush1.msra.mxu0 0.0
  %3703 = vmatprep.subr.mxu0 0.0
  %3704 = vmatpush1.msra.mxu0 0.0
  %3705 = vmatprep.subr.mxu0 0.0
  %3706 = vmatpush1.msra.mxu0 0.0
  %3707 = vmatprep.subr.mxu0 0.0
  %3708 = vmatpush1.msra.mxu0 0.0
  %3709 = vmatprep.subr.mxu0 0.0
  %3710 = vmatpush1.msra.mxu0 0.0
  %3711 = vmatprep.subr.mxu0 0.0
  %3712 = vmatpush1.msra.mxu0 0.0
  %3713 = vmatprep.subr.mxu0 0.0
  %3714 = vmatpush1.msra.mxu0 0.0
  %3715 = vmatprep.subr.mxu0 0.0
  %3716 = vmatpush1.msra.mxu0 0.0
  %3717 = vmatprep.subr.mxu0 0.0
  %3718 = vmatpush1.msra.mxu0 0.0
  %3719 = vmatprep.subr.mxu0 0.0
  %3720 = vmatpush1.msra.mxu0 0.0
  %3721 = vmatprep.subr.mxu0 0.0
  %3722 = vmatpush1.msra.mxu0 0.0
  %3723 = vmatprep.subr.mxu0 0.0
  %3724 = vmatpush1.msra.mxu0 0.0
  %3725 = vmatprep.subr.mxu0 0.0
  %3726 = vmatpush1.msra.mxu0 0.0
  %3727 = vmatprep.subr.mxu0 0.0
  %3728 = vmatpush1.msra.mxu0 0.0
  %3729 = vmatprep.subr.mxu0 0.0
  %3730 = vmatpush1.msra.mxu0 0.0
  %3731 = vmatprep.subr.mxu0 0.0
  %3732 = vmatpush1.msra.mxu0 0.0
  %3733 = vmatprep.subr.mxu0 0.0
  %3734 = vmatpush1.msra.mxu0 0.0
  %3735 = vmatprep.subr.mxu0 0.0
  %3736 = vmatpush1.msra.mxu0 0.0
  %3737 = vmatprep.subr.mxu0 0.0
  %3738 = vmatpush1.msra.mxu0 0.0
  %3739 = vmatprep.subr.mxu0 0.0
  %3740 = vmatpush1.msra.mxu0 0.0
  %3741 = vmatprep.subr.mxu0 0.0
  %3742 = vmatpush1.msra.mxu0 0.0
  %3743 = vmatprep.subr.mxu0 0.0
  %3744 = vmatpush1.msra.mxu0 0.0
  %3745 = vmatprep.subr.mxu0 0.0
  %3746 = vmatpush1.msra.mxu0 0.0
  %3747 = vmatprep.subr.mxu0 0.0
  %3748 = vmatpush1.msra.mxu0 0.0
  %3749 = vmatprep.subr.mxu0 0.0
  %3750 = vmatpush1.msra.mxu0 0.0
  %3751 = vmatprep.subr.mxu0 0.0
  %3752 = vmatpush1.msra.mxu0 0.0
  %3753 = vmatprep.subr.mxu0 0.0
  %3754 = vmatpush1.msra.mxu0 0.0
  %3755 = vmatprep.subr.mxu0 0.0
  %3756 = vmatpush1.msra.mxu0 0.0
  %3757 = vmatprep.mubr.f32.mxu0 0.0
  %3758 = vmatmul.mubr.f32.gmra.mrb[0].mxu0 %v3691
  %v3759 = vpop.f32.mrb[0].mxu0
  %v3760 = vadd.f32 0.0, %v3759
  %v3761 = vpop.f32.mrb[0].mxu0
  %3762 = vdwg.mxu0
  %v3764 = vrot.slane %v3760, 4
  %v3766 = vadd.f32 %v3035, %v3764
  %v3767 = vxor.u32 %v3766, 2147483648
  %v3768 = vmul.f32 %v3767, 1.442695
  %v3769 = vpow.pop %v3768
  %v3770 = vadd.f32 %v3769, 1.0
  %v3771 = vrcp.pop %v3770
  %v3772 = vmul.f32 1.0, %v3771
  %v3773 = vtanh.pop %v3766
  %v3775 = vrot.slane %v3676, 6
  %v3777 = vmul.f32 %v3772, %v3775
  %3779 = vrot.lane.b32.xlu0 %v3773, 64
  %v3780 = vpop.permute.xlu0 %3779
  %v3782 = vmul.f32 %v3772, %v3780
  %3784 = vrot.lane.b32.xlu0 %v3782, 32
  %v3785 = vpop.permute.xlu0 %3784
  %v3787 = vadd.f32 %v3777, %v3785
  %v3788 = vtanh.pop %v3787
  %3790 = vrot.lane.b32.xlu0 %v3788, 64
  %v3791 = vpop.permute.xlu0 %3790
  %v3793 = vmul.f32 %v3772, %v3791
  %3795 = vrot.lane.b32.xlu0 %v3793, 32
  %v3796 = vpop.permute.xlu0 %3795
  %3798 = vst.msk [vmem:[#allocation3 + $0x1] sm:$0x20] %vm3358, %v3796
  %v3799 = vrot.slane %v3793, 4
  %3800 = vrot.lane.b32.xlu0 %v3799, 32
  %v3801 = vpop.permute.xlu0 %3800
  %v3802 = vsel %vm42, %v3801, 0
  %3804 = vmatprep.subr.mxu0 0.0
  %3805 = vmatpush1.msra.mxu0 %v2943
  %3806 = vmatprep.subr.mxu0 0.0
  %3807 = vmatpush1.msra.mxu0 %v2944
  %3808 = vmatprep.subr.mxu0 0.0
  %3809 = vmatpush1.msra.mxu0 %v2945
  %3810 = vmatprep.subr.mxu0 0.0
  %3811 = vmatpush1.msra.mxu0 %v2946
  %3812 = vmatprep.subr.mxu0 0.0
  %3813 = vmatpush1.msra.mxu0 0.0
  %3814 = vmatprep.subr.mxu0 0.0
  %3815 = vmatpush1.msra.mxu0 0.0
  %3816 = vmatprep.subr.mxu0 0.0
  %3817 = vmatpush1.msra.mxu0 0.0
  %3818 = vmatprep.subr.mxu0 0.0
  %3819 = vmatpush1.msra.mxu0 0.0
  %3820 = vmatprep.subr.mxu0 0.0
  %3821 = vmatpush1.msra.mxu0 0.0
  %3822 = vmatprep.subr.mxu0 0.0
  %3823 = vmatpush1.msra.mxu0 0.0
  %3824 = vmatprep.subr.mxu0 0.0
  %3825 = vmatpush1.msra.mxu0 0.0
  %3826 = vmatprep.subr.mxu0 0.0
  %3827 = vmatpush1.msra.mxu0 0.0
  %3828 = vmatprep.subr.mxu0 0.0
  %3829 = vmatpush1.msra.mxu0 0.0
  %3830 = vmatprep.subr.mxu0 0.0
  %3831 = vmatpush1.msra.mxu0 0.0
  %3832 = vmatprep.subr.mxu0 0.0
  %3833 = vmatpush1.msra.mxu0 0.0
  %3834 = vmatprep.subr.mxu0 0.0
  %3835 = vmatpush1.msra.mxu0 0.0
  %3836 = vmatprep.subr.mxu0 0.0
  %3837 = vmatpush1.msra.mxu0 0.0
  %3838 = vmatprep.subr.mxu0 0.0
  %3839 = vmatpush1.msra.mxu0 0.0
  %3840 = vmatprep.subr.mxu0 0.0
  %3841 = vmatpush1.msra.mxu0 0.0
  %3842 = vmatprep.subr.mxu0 0.0
  %3843 = vmatpush1.msra.mxu0 0.0
  %3844 = vmatprep.subr.mxu0 0.0
  %3845 = vmatpush1.msra.mxu0 0.0
  %3846 = vmatprep.subr.mxu0 0.0
  %3847 = vmatpush1.msra.mxu0 0.0
  %3848 = vmatprep.subr.mxu0 0.0
  %3849 = vmatpush1.msra.mxu0 0.0
  %3850 = vmatprep.subr.mxu0 0.0
  %3851 = vmatpush1.msra.mxu0 0.0
  %3852 = vmatprep.subr.mxu0 0.0
  %3853 = vmatpush1.msra.mxu0 0.0
  %3854 = vmatprep.subr.mxu0 0.0
  %3855 = vmatpush1.msra.mxu0 0.0
  %3856 = vmatprep.subr.mxu0 0.0
  %3857 = vmatpush1.msra.mxu0 0.0
  %3858 = vmatprep.subr.mxu0 0.0
  %3859 = vmatpush1.msra.mxu0 0.0
  %3860 = vmatprep.subr.mxu0 0.0
  %3861 = vmatpush1.msra.mxu0 0.0
  %3862 = vmatprep.subr.mxu0 0.0
  %3863 = vmatpush1.msra.mxu0 0.0
  %3864 = vmatprep.subr.mxu0 0.0
  %3865 = vmatpush1.msra.mxu0 0.0
  %3866 = vmatprep.subr.mxu0 0.0
  %3867 = vmatpush1.msra.mxu0 0.0
  %3868 = vmatprep.mubr.f32.mxu0 0.0
  %3869 = vmatmul.mubr.f32.gmra.mrb[0].mxu0 %v3802
  %v3870 = vpop.f32.mrb[0].mxu0
  %v3871 = vadd.f32 0.0, %v3870
  %v3872 = vpop.f32.mrb[0].mxu0
  %3873 = vdwg.mxu0
  %v3875 = vrot.slane %v3871, 2
  %v3877 = vadd.f32 %v3035, %v3875
  %v3878 = vxor.u32 %v3877, 2147483648
  %v3879 = vmul.f32 %v3878, 1.442695
  %v3880 = vpow.pop %v3879
  %v3881 = vadd.f32 %v3880, 1.0
  %v3882 = vrcp.pop %v3881
  %v3883 = vmul.f32 1.0, %v3882
  %v3884 = vtanh.pop %v3877
  %v3886 = vrot.slane %v3787, 6
  %v3888 = vmul.f32 %v3883, %v3886
  %3890 = vrot.lane.b32.xlu0 %v3884, 64
  %v3891 = vpop.permute.xlu0 %3890
  %v3893 = vmul.f32 %v3883, %v3891
  %3895 = vrot.lane.b32.xlu0 %v3893, 32
  %v3896 = vpop.permute.xlu0 %3895
  %v3898 = vadd.f32 %v3888, %v3896
  %v3899 = vtanh.pop %v3898
  %3901 = vrot.lane.b32.xlu0 %v3899, 64
  %v3902 = vpop.permute.xlu0 %3901
  %v3904 = vmul.f32 %v3883, %v3902
  %3906 = vrot.lane.b32.xlu0 %v3904, 32
  %v3907 = vpop.permute.xlu0 %3906
  %3909 = vst.msk [vmem:[#allocation3] sm:$0x80] %vm3470, %v3907
  %v3910 = vld [vmem:[#allocation3] sm:$0xff]
  %v3911 = vld [vmem:[%s4] sm:$0x1]
  %v3913 = vlaneseq
  %v3914 = vshrl.u32 %v3913, 7
  %v3915 = vsub.s32 0, %v3914
  %v3916 = vrot.slane %v3911, %v3915
  %v3918 = vmul.f32 %v3910, %v3916
  %v3919 = vsel %vm42, %v3918, 0.0
  %3920 = vadd.xlane.f32.xlu0 %v3919
  %v3921 = vpop.xlane.xlu0 %3920
  %v3922 = vld [vmem:[#allocation4] sm:$0x1]
  %v3924 = vlaneseq
  %v3925 = vshrl.u32 %v3924, 7
  %v3926 = vsub.s32 0, %v3925
  %v3927 = vrot.slane %v3922, %v3926
  %v3929 = vadd.f32 %v3921, %v3927
  %vm3930 = vcmask 7168
  %3931 = vst.msk [vmem:[%s6] sm:$0xff] %vm3930, %v3929
  // Predicated region
  $region26: #{cpg_predictor_forward.1} parent=0 // pred_check
    _
  $region27: #{cpg_predictor_forward.1} parent=0 // pred_check_branch
    %3933 = sbr.rel (0) target = $region29
  $region28: #{cpg_predictor_forward.1} parent=0 // pred_region
    _
  $region29: #{cpg_predictor_forward.1} parent=0 // pred_fallthru
    _
  // Predicated region
  $region30: #{cpg_predictor_forward.1} parent=0 // pred_check
    _
  $region31: #{cpg_predictor_forward.1} parent=0 // pred_check_branch
    %3935 = sbr.rel (0) target = $region33
  $region32: #{cpg_predictor_forward.1} parent=0 // pred_region
    _
  $region33: #{cpg_predictor_forward.1} parent=0 // pred_fallthru
    _

</llo_original>
